<compile_context>
chip_gen: v6e
topology: v6e:2x2x1
jax: 0.10.0
libtpu: 0.0.40
codegen_flags: <defaults>
</compile_context>

<pallas_src>
import jax
import jax.numpy as jnp
from jax.experimental import pallas as pl
from jax.experimental.pallas import tpu as pltpu


def encoder_kernel(x_ref, w_ref, b_ref,
                   w_out_ref, b_out_ref, w_hid_ref, b_hid_ref,
                   w_cell_ref, b_cell_ref,
                   out_ref, hid_ref, cell_ref,
                   seq_scr):
    """Bidirectional stacked residual LSTM + output/hidden/cell linear transforms.

    x_ref:     [T, B, D]        embedded tokens (ReLU fused in-kernel)
    w_ref:     [L, D+H, 4H]     fused ih|hh gate weights (gate order i,f,g,o)
    b_ref:     [L, 1, 4H]       bias_ih + bias_hh
    w_*_ref:   [2H, out|hid]    BiRecurrent linear transforms, b_* are [1, out|hid]
    out_ref:   [T*Bp, out]      projected top-layer outputs (time-major, batch-padded)
    hid_ref:   [L*B, hid]       projected final hidden states
    cell_ref:  [L*B, hid]       projected final cell states
    seq_scr:   [T, Bp, 2H]      lane-dense fwd|rev residual outputs (pre-projection)
    """
    T, B, D = x_ref.shape
    L, DH, H4 = w_ref.shape
    H = H4 // 4
    B2 = 2 * B
    Bp = seq_scr.shape[1]

    # Hoist per-layer fused weights/bias out of the time loop (loaded once).
    w = [w_ref[l] for l in range(L)]          # [D+H, 4H]
    bias = [b_ref[l] for l in range(L)]       # [1, 4H]

    # Gate lane masks for the single full-width tanh activation:
    #   sigmoid(x) = 0.5 * tanh(0.5 * x) + 0.5   (exact; no approx reciprocal)
    # lanes [2H,3H) hold the g gate (pure tanh); i/f/o lanes get the affine map.
    lane = jax.lax.broadcasted_iota(jnp.int32, (B2, H4), 1)
    is_g = jnp.logical_and(lane >= 2 * H, lane < 3 * H)
    g_scale = jnp.where(is_g, 1.0, 0.5).astype(jnp.float32)
    g_off = jnp.where(is_g, 0.0, 0.5).astype(jnp.float32)

    # ReLU hoisted: each timestep is loaded and activated once, not twice per step.
    x_all = jnp.maximum(x_ref[...], 0.0)      # [T, B, D]

    # Deterministic padding rows for the batch-padded scratch.
    seq_scr[...] = jnp.zeros_like(seq_scr)

    # TODO(synk): zeros instead of torch's xavier_normal_ initial hidden state.
    h = [jnp.zeros((B2, H), jnp.float32) for _ in range(L)]
    c = [jnp.zeros((B2, H), jnp.float32) for _ in range(L)]

    # Fully unrolled time loop (T is a small trace-time constant here).
    # TODO(synk): for large T, cap unrolling with lax.fori_loop (unroll=4..8) and a
    # time-chunked grid over T ("arbitrary" axis, h/c in VMEM scratch) so the
    # resident footprint stays under v7x's 64 MiB VMEM; on v7x the two directions
    # could also be split across the 2 TensorCores via grid=(2,) "parallel".
    for t in range(T):
        # Rows [:B] = forward direction on x[t], rows [B:] = reverse on x[T-1-t].
        inp = jnp.concatenate([x_all[t], x_all[T - 1 - t]], axis=0)   # [2B, D]

        for l in range(L):
            # One fused-gate matmul per layer-step: [2B, D+H] @ [D+H, 4H].
            zin = jnp.concatenate([inp, h[l]], axis=1)                # [2B, D+H]
            z = jnp.dot(zin, w[l], preferred_element_type=jnp.float32) + bias[l]

            # Single full-128-lane tanh for all four gates (one EUP push), then a
            # half-width roll on the idle XLU slot to align g with i and o with f.
            act = jnp.tanh(z * g_scale) * g_scale + g_off             # [i, f, g, o]
            rolled = pltpu.roll(act, shift=2 * H, axis=1)             # [g, o, i, f]

            c_new = act[:, H:2 * H] * c[l] + act[:, 0:H] * rolled[:, 0:H]   # f*c + i*g
            h_new = rolled[:, H:2 * H] * jnp.tanh(c_new)                    # o*tanh(c)
            h[l] = h_new
            c[l] = c_new

            # StackLSTMCell residual (applies when input/output dims match).
            inp = h_new + inp if (l > 0 or D == H) else h_new

        # Lane-dense, per-time-tile stores: forward half -> lanes [:H] at time t,
        # reverse half -> lanes [H:2H] at time T-1-t.
        seq_scr[t, 0:B, 0:H] = inp[:B]
        seq_scr[T - 1 - t, 0:B, H:2 * H] = inp[B:]

    # ---- fused epilogue: the three BiRecurrent linear transforms ----------
    seq = seq_scr[...].reshape(T * Bp, 2 * H)          # already [fwd | rev] per row
    out_ref[...] = (jnp.dot(seq, w_out_ref[...],
                            preferred_element_type=jnp.float32) + b_out_ref[...])

    # hid/cell: split-weight form (fwd @ W[:H] + rev @ W[H:]) avoids lane concats.
    h_fwd = jnp.concatenate([h[l][:B] for l in range(L)], axis=0)     # [L*B, H]
    h_rev = jnp.concatenate([h[l][B:] for l in range(L)], axis=0)
    c_fwd = jnp.concatenate([c[l][:B] for l in range(L)], axis=0)
    c_rev = jnp.concatenate([c[l][B:] for l in range(L)], axis=0)

    hid_ref[...] = (jnp.dot(h_fwd, w_hid_ref[0:H, :], preferred_element_type=jnp.float32)
                    + jnp.dot(h_rev, w_hid_ref[H:2 * H, :], preferred_element_type=jnp.float32)
                    + b_hid_ref[...])
    cell_ref[...] = (jnp.dot(c_fwd, w_cell_ref[0:H, :], preferred_element_type=jnp.float32)
                     + jnp.dot(c_rev, w_cell_ref[H:2 * H, :], preferred_element_type=jnp.float32)
                     + b_cell_ref[...])


_VMEM = pl.BlockSpec(memory_space=pltpu.MemorySpace.VMEM)


def run_encoder(x_tbd, params):
    T, B, D = x_tbd.shape
    L, DH, H4 = params["w"].shape
    H = H4 // 4
    out_dim = params["w_out"].shape[1]
    hid_dim = params["w_hid"].shape[1]
    Bp = ((B + 7) // 8) * 8          # sublane-padded batch for per-time scratch tiles

    args = (x_tbd, params["w"], params["b"],
            params["w_out"], params["b_out"],
            params["w_hid"], params["b_hid"],
            params["w_cell"], params["b_cell"])

    out_shapes = (jax.ShapeDtypeStruct((T * Bp, out_dim), jnp.float32),
                  jax.ShapeDtypeStruct((L * B, hid_dim), jnp.float32),
                  jax.ShapeDtypeStruct((L * B, hid_dim), jnp.float32))

    # Size the scoped VMEM limit to the actual footprint (defaults are 16/32 MiB).
    in_bytes = sum(int(a.size) * int(a.dtype.itemsize) for a in args)
    out_bytes = (T * Bp * out_dim + 2 * L * B * hid_dim) * 4
    scratch_bytes = T * Bp * 2 * H * 4
    vmem_limit = int(min(64 << 20,                       # v7x per-TC budget headroom
                         2 * (in_bytes + out_bytes) + scratch_bytes + (4 << 20)))

    gate_flops = 2 * T * L * (2 * B) * DH * H4
    proj_flops = 2 * (T * Bp) * (2 * H) * out_dim + 2 * 4 * (L * B) * H * hid_dim
    transcendentals = T * L * (2 * B) * (H4 + H)         # fused-gate tanh + c tanh
    cost = pl.CostEstimate(flops=int(gate_flops + proj_flops),
                           transcendentals=int(transcendentals),
                           bytes_accessed=int(in_bytes + out_bytes))

    return pl.pallas_call(
        encoder_kernel,
        out_shape=out_shapes,
        in_specs=[_VMEM] * 9,
        out_specs=(_VMEM, _VMEM, _VMEM),
        scratch_shapes=[pltpu.VMEM((T, Bp, 2 * H), jnp.float32)],
        compiler_params=pltpu.CompilerParams(vmem_limit_bytes=vmem_limit),
        cost_estimate=cost,
    )(*args)


@jax.jit
def encoder_forward(params, enc_input):
    """enc_input: [B, T] int32 ids -> (output [B,T,out], (hidden, cell) [L,B,hid])."""
    emb = params["embedding"][enc_input]           # [B, T, E]  (gather is glue)
    x_tbd = jnp.transpose(emb, (1, 0, 2))          # time-major [T, B, E]
    B, T = enc_input.shape
    L = params["w"].shape[0]
    out_dim = params["w_out"].shape[1]
    hid_dim = params["w_hid"].shape[1]
    Bp = ((B + 7) // 8) * 8

    out_flat, hid_flat, cell_flat = run_encoder(x_tbd, params)

    output = out_flat.reshape(T, Bp, out_dim)[:, :B, :]   # drop batch-padding rows
    output = jnp.transpose(output, (1, 0, 2))             # [B, T, out]
    hidden = hid_flat.reshape(L, B, hid_dim)
    cell = cell_flat.reshape(L, B, hid_dim)
    return output, (hidden, cell)


def make_params(key, vocab, emb_dim, rnn_dim, n_layers, out_dim, hid_dim, pad_id):
    assert emb_dim == rnn_dim, \
        "fused-weight stacking (and the layer-0 residual) assume emb_dim == rnn_dim"
    H = rnn_dim
    k_emb, k_lin, *k_layers = jax.random.split(key, 2 + n_layers)

    emb_table = 0.1 * jax.random.normal(k_emb, (vocab, emb_dim), jnp.float32)
    emb_table = emb_table.at[pad_id].set(0.0)      # padding_idx row is zero

    def lstm_layer(k, in_dim):
        k1, k2, k3, k4 = jax.random.split(k, 4)
        # torch.nn.LSTMCell layout: [4H, in] with gate blocks i,f,g,o.
        w_ih = 0.1 * jax.random.normal(k1, (4 * H, in_dim), jnp.float32)
        w_hh = 0.1 * jax.random.normal(k2, (4 * H, H), jnp.float32)
        b_ih = 0.1 * jax.random.normal(k3, (4 * H,), jnp.float32)
        b_hh = 0.1 * jax.random.normal(k4, (4 * H,), jnp.float32)
        # Fused packing: one [in+H, 4H] weight so ih and hh collapse into one dot.
        w = jnp.concatenate([jnp.transpose(w_ih), jnp.transpose(w_hh)], axis=0)
        return w, (b_ih + b_hh).reshape(1, 4 * H)

    layers = [lstm_layer(k_layers[i], emb_dim if i == 0 else H)
              for i in range(n_layers)]
    w = jnp.stack([p[0] for p in layers])      # [L, D+H, 4H]
    b = jnp.stack([p[1] for p in layers])      # [L, 1, 4H]

    def linear(k, in_dim, o_dim):
        k1, k2 = jax.random.split(k)
        wl = 0.1 * jax.random.normal(k1, (o_dim, in_dim), jnp.float32)
        bb = 0.1 * jax.random.normal(k2, (o_dim,), jnp.float32)
        return jnp.transpose(wl), bb.reshape(1, o_dim)   # [in, out], [1, out]

    ko, kh, kc = jax.random.split(k_lin, 3)
    w_out, b_out = linear(ko, 2 * H, out_dim)
    w_hid, b_hid = linear(kh, 2 * H, hid_dim)
    w_cell, b_cell = linear(kc, 2 * H, hid_dim)

    return dict(embedding=emb_table, w=w, b=b,
                w_out=w_out, b_out=b_out,
                w_hid=w_hid, b_hid=b_hid,
                w_cell=w_cell, b_cell=b_cell)


if __name__ == "__main__":
    # Module-consistent small config:
    #   embedding_size=20, embedding_dim=32, rnn_dim=32 (so residual applies),
    #   n_layers=2, bidirectional=True,
    #   encoder_output_transformer=32, encoder_hidden_transformer=32, pad_id=0.
    vocab, emb_dim, rnn_dim, n_layers = 20, 32, 32, 2
    out_dim, hid_dim, pad_id = 32, 32, 0
    B, T = 2, 8

    key = jax.random.PRNGKey(0)
    pkey, dkey = jax.random.split(key)
    params = make_params(pkey, vocab, emb_dim, rnn_dim, n_layers,
                         out_dim, hid_dim, pad_id)

    enc_input = jax.random.randint(dkey, (B, T), 0, vocab, dtype=jnp.int32)
    enc_input = enc_input.at[0, -1].set(pad_id)   # exercise the padding row

    output, (hidden, cell) = encoder_forward(params, enc_input)
    jax.block_until_ready((output, hidden, cell))

    assert output.shape == (B, T, out_dim)
    assert hidden.shape == (n_layers, B, hid_dim)
    assert cell.shape == (n_layers, B, hid_dim)
    assert bool(jnp.all(jnp.isfinite(output)))
    print("KERNEL_OK")
</pallas_src>

<mosaic_0001>
module attributes {stable_mosaic.version = 11 : i64} {
  func.func @encoder_kernel(%arg0: memref<8x2x32xf32, #tpu.memory_space<vmem>>, %arg1: memref<2x64x128xf32, #tpu.memory_space<vmem>>, %arg2: memref<2x1x128xf32, #tpu.memory_space<vmem>>, %arg3: memref<64x32xf32, #tpu.memory_space<vmem>>, %arg4: memref<1x32xf32, #tpu.memory_space<vmem>>, %arg5: memref<64x32xf32, #tpu.memory_space<vmem>>, %arg6: memref<1x32xf32, #tpu.memory_space<vmem>>, %arg7: memref<64x32xf32, #tpu.memory_space<vmem>>, %arg8: memref<1x32xf32, #tpu.memory_space<vmem>>, %arg9: memref<64x32xf32, #tpu.memory_space<vmem>>, %arg10: memref<4x32xf32, #tpu.memory_space<vmem>>, %arg11: memref<4x32xf32, #tpu.memory_space<vmem>>, %arg12: memref<8x8x64xf32, #tpu.memory_space<vmem>>) attributes {dimension_semantics = [], scalar_prefetch = 0 : i64, scratch_operands = 1 : i64, tpu.core_type = #tpu.core_type<tc>} {
    %c0 = arith.constant 0 : index
    %c0_0 = arith.constant 0 : index
    %c0_1 = arith.constant 0 : index
    %0 = vector.load %arg1[%c0, %c0_0, %c0_1] : memref<2x64x128xf32, #tpu.memory_space<vmem>>, vector<1x64x128xf32>
    %1 = vector.shape_cast %0 : vector<1x64x128xf32> to vector<64x128xf32>
    %c1 = arith.constant 1 : index
    %c0_2 = arith.constant 0 : index
    %c0_3 = arith.constant 0 : index
    %2 = vector.load %arg1[%c1, %c0_2, %c0_3] : memref<2x64x128xf32, #tpu.memory_space<vmem>>, vector<1x64x128xf32>
    %3 = vector.shape_cast %2 : vector<1x64x128xf32> to vector<64x128xf32>
    %c0_4 = arith.constant 0 : index
    %c0_5 = arith.constant 0 : index
    %c0_6 = arith.constant 0 : index
    %4 = vector.load %arg2[%c0_4, %c0_5, %c0_6] : memref<2x1x128xf32, #tpu.memory_space<vmem>>, vector<1x1x128xf32>
    %5 = vector.shape_cast %4 : vector<1x1x128xf32> to vector<1x128xf32>
    %c1_7 = arith.constant 1 : index
    %c0_8 = arith.constant 0 : index
    %c0_9 = arith.constant 0 : index
    %6 = vector.load %arg2[%c1_7, %c0_8, %c0_9] : memref<2x1x128xf32, #tpu.memory_space<vmem>>, vector<1x1x128xf32>
    %7 = vector.shape_cast %6 : vector<1x1x128xf32> to vector<1x128xf32>
    %8 = tpu.iota {dimensions = array<i32: 1>} : vector<4x128xi32>
    %c64_i32 = arith.constant 64 : i32
    %9 = vector.broadcast %c64_i32 : i32 to vector<4x128xi32>
    %10 = arith.cmpi sge, %8, %9 : vector<4x128xi32>
    %c96_i32 = arith.constant 96 : i32
    %11 = vector.broadcast %c96_i32 : i32 to vector<4x128xi32>
    %12 = arith.cmpi slt, %8, %11 : vector<4x128xi32>
    %13 = arith.andi %10, %12 : vector<4x128xi1>
    %cst = arith.constant 1.000000e+00 : f32
    %cst_10 = arith.constant 5.000000e-01 : f32
    %14 = vector.broadcast %cst : f32 to vector<4x128xf32>
    %15 = vector.broadcast %cst_10 : f32 to vector<4x128xf32>
    %16 = arith.select %13, %14, %15 : vector<4x128xi1>, vector<4x128xf32>
    %cst_11 = arith.constant 0.000000e+00 : f32
    %cst_12 = arith.constant 5.000000e-01 : f32
    %17 = vector.broadcast %cst_11 : f32 to vector<4x128xf32>
    %18 = vector.broadcast %cst_12 : f32 to vector<4x128xf32>
    %19 = arith.select %13, %17, %18 : vector<4x128xi1>, vector<4x128xf32>
    %c0_13 = arith.constant 0 : index
    %c0_14 = arith.constant 0 : index
    %c0_15 = arith.constant 0 : index
    %20 = vector.load %arg0[%c0_13, %c0_14, %c0_15] : memref<8x2x32xf32, #tpu.memory_space<vmem>>, vector<8x2x32xf32>
    %cst_16 = arith.constant 0.000000e+00 : f32
    %21 = vector.broadcast %cst_16 : f32 to vector<8x2x32xf32>
    %22 = arith.maximumf %20, %21 : vector<8x2x32xf32>
    %cst_17 = arith.constant 0.000000e+00 : f32
    %23 = vector.broadcast %cst_17 : f32 to vector<8x8x64xf32>
    %c0_18 = arith.constant 0 : index
    %c0_19 = arith.constant 0 : index
    %c0_20 = arith.constant 0 : index
    %24 = vector.load %arg12[%c0_18, %c0_19, %c0_20] : memref<8x8x64xf32, #tpu.memory_space<vmem>>, vector<8x8x64xf32>
    tpu.vector_store %arg12[%c0_18, %c0_19, %c0_20], %23 {strides = array<i32>} : memref<8x8x64xf32, #tpu.memory_space<vmem>>, vector<8x8x64xf32>,
    %cst_21 = arith.constant 0.000000e+00 : f32
    %25 = vector.broadcast %cst_21 : f32 to vector<4x32xf32>
    %cst_22 = arith.constant 0.000000e+00 : f32
    %26 = vector.broadcast %cst_22 : f32 to vector<4x32xf32>
    %cst_23 = arith.constant 0.000000e+00 : f32
    %27 = vector.broadcast %cst_23 : f32 to vector<4x32xf32>
    %cst_24 = arith.constant 0.000000e+00 : f32
    %28 = vector.broadcast %cst_24 : f32 to vector<4x32xf32>
    %29 = vector.extract_strided_slice %22 {offsets = [0, 0, 0], sizes = [1, 2, 32], strides = [1, 1, 1]} : vector<8x2x32xf32> to vector<1x2x32xf32>
    %30 = vector.shape_cast %29 : vector<1x2x32xf32> to vector<2x32xf32>
    %31 = vector.extract_strided_slice %22 {offsets = [7, 0, 0], sizes = [1, 2, 32], strides = [1, 1, 1]} : vector<8x2x32xf32> to vector<1x2x32xf32>
    %32 = vector.shape_cast %31 : vector<1x2x32xf32> to vector<2x32xf32>
    %33 = tpu.concatenate %30, %32 in 0 : vector<2x32xf32>, vector<2x32xf32> -> vector<4x32xf32>
    %34 = tpu.concatenate %33, %25 in 1 : vector<4x32xf32>, vector<4x32xf32> -> vector<4x64xf32>
    %cst_25 = arith.constant dense<0.000000e+00> : vector<4x128xf32>
    %35 = tpu.matmul %34, %1, %cst_25 {dimension_numbers = #tpu.dot_dimension_numbers<[1], [0], [0], [1], [0, 0, 1, 1], [], []>} : vector<4x64xf32>, vector<64x128xf32>, vector<4x128xf32> -> vector<4x128xf32>
    %36 = vector.broadcast %5 : vector<1x128xf32> to vector<4x128xf32>
    %37 = arith.addf %35, %36 : vector<4x128xf32>
    %38 = arith.mulf %37, %16 : vector<4x128xf32>
    %39 = math.tanh %38 : vector<4x128xf32>
    %40 = arith.mulf %39, %16 : vector<4x128xf32>
    %41 = arith.addf %40, %19 : vector<4x128xf32>
    %c64_i32_26 = arith.constant 64 : i32
    %42 = tpu.dynamic_rotate %41 by %c64_i32_26 dim 1 : vector<4x128xf32>, i32 -> vector<4x128xf32>
    %43 = vector.extract_strided_slice %41 {offsets = [0, 32], sizes = [4, 32], strides = [1, 1]} : vector<4x128xf32> to vector<4x32xf32>
    %44 = arith.mulf %43, %27 : vector<4x32xf32>
    %45 = vector.extract_strided_slice %41 {offsets = [0, 0], sizes = [4, 32], strides = [1, 1]} : vector<4x128xf32> to vector<4x32xf32>
    %46 = vector.extract_strided_slice %42 {offsets = [0, 0], sizes = [4, 32], strides = [1, 1]} : vector<4x128xf32> to vector<4x32xf32>
    %47 = arith.mulf %45, %46 : vector<4x32xf32>
    %48 = arith.addf %44, %47 : vector<4x32xf32>
    %49 = vector.extract_strided_slice %42 {offsets = [0, 32], sizes = [4, 32], strides = [1, 1]} : vector<4x128xf32> to vector<4x32xf32>
    %50 = math.tanh %48 : vector<4x32xf32>
    %51 = arith.mulf %49, %50 : vector<4x32xf32>
    %52 = arith.addf %51, %33 : vector<4x32xf32>
    %53 = tpu.concatenate %52, %26 in 1 : vector<4x32xf32>, vector<4x32xf32> -> vector<4x64xf32>
    %cst_27 = arith.constant dense<0.000000e+00> : vector<4x128xf32>
    %54 = tpu.matmul %53, %3, %cst_27 {dimension_numbers = #tpu.dot_dimension_numbers<[1], [0], [0], [1], [0, 0, 1, 1], [], []>} : vector<4x64xf32>, vector<64x128xf32>, vector<4x128xf32> -> vector<4x128xf32>
    %55 = vector.broadcast %7 : vector<1x128xf32> to vector<4x128xf32>
    %56 = arith.addf %54, %55 : vector<4x128xf32>
    %57 = arith.mulf %56, %16 : vector<4x128xf32>
    %58 = math.tanh %57 : vector<4x128xf32>
    %59 = arith.mulf %58, %16 : vector<4x128xf32>
    %60 = arith.addf %59, %19 : vector<4x128xf32>
    %c64_i32_28 = arith.constant 64 : i32
    %61 = tpu.dynamic_rotate %60 by %c64_i32_28 dim 1 : vector<4x128xf32>, i32 -> vector<4x128xf32>
    %62 = vector.extract_strided_slice %60 {offsets = [0, 32], sizes = [4, 32], strides = [1, 1]} : vector<4x128xf32> to vector<4x32xf32>
    %63 = arith.mulf %62, %28 : vector<4x32xf32>
    %64 = vector.extract_strided_slice %60 {offsets = [0, 0], sizes = [4, 32], strides = [1, 1]} : vector<4x128xf32> to vector<4x32xf32>
    %65 = vector.extract_strided_slice %61 {offsets = [0, 0], sizes = [4, 32], strides = [1, 1]} : vector<4x128xf32> to vector<4x32xf32>
    %66 = arith.mulf %64, %65 : vector<4x32xf32>
    %67 = arith.addf %63, %66 : vector<4x32xf32>
    %68 = vector.extract_strided_slice %61 {offsets = [0, 32], sizes = [4, 32], strides = [1, 1]} : vector<4x128xf32> to vector<4x32xf32>
    %69 = math.tanh %67 : vector<4x32xf32>
    %70 = arith.mulf %68, %69 : vector<4x32xf32>
    %71 = arith.addf %70, %52 : vector<4x32xf32>
    %72 = vector.extract_strided_slice %71 {offsets = [0, 0], sizes = [2, 32], strides = [1, 1]} : vector<4x32xf32> to vector<2x32xf32>
    %c0_29 = arith.constant 0 : index
    %c0_30 = arith.constant 0 : index
    %c0_31 = arith.constant 0 : index
    %73 = vector.load %arg12[%c0_29, %c0_30, %c0_31] : memref<8x8x64xf32, #tpu.memory_space<vmem>>, vector<1x2x32xf32>
    %74 = vector.shape_cast %73 : vector<1x2x32xf32> to vector<2x32xf32>
    %75 = vector.shape_cast %72 : vector<2x32xf32> to vector<1x2x32xf32>
    tpu.vector_store %arg12[%c0_29, %c0_30, %c0_31], %75 {strides = array<i32>} : memref<8x8x64xf32, #tpu.memory_space<vmem>>, vector<1x2x32xf32>,
    %76 = vector.extract_strided_slice %71 {offsets = [2, 0], sizes = [2, 32], strides = [1, 1]} : vector<4x32xf32> to vector<2x32xf32>
    %c7 = arith.constant 7 : index
    %c0_32 = arith.constant 0 : index
    %c32 = arith.constant 32 : index
    %77 = vector.load %arg12[%c7, %c0_32, %c32] : memref<8x8x64xf32, #tpu.memory_space<vmem>>, vector<1x2x32xf32>
    %78 = vector.shape_cast %77 : vector<1x2x32xf32> to vector<2x32xf32>
    %79 = vector.shape_cast %76 : vector<2x32xf32> to vector<1x2x32xf32>
    tpu.vector_store %arg12[%c7, %c0_32, %c32], %79 {strides = array<i32>} : memref<8x8x64xf32, #tpu.memory_space<vmem>>, vector<1x2x32xf32>,
    %80 = vector.extract_strided_slice %22 {offsets = [1, 0, 0], sizes = [1, 2, 32], strides = [1, 1, 1]} : vector<8x2x32xf32> to vector<1x2x32xf32>
    %81 = vector.shape_cast %80 : vector<1x2x32xf32> to vector<2x32xf32>
    %82 = vector.extract_strided_slice %22 {offsets = [6, 0, 0], sizes = [1, 2, 32], strides = [1, 1, 1]} : vector<8x2x32xf32> to vector<1x2x32xf32>
    %83 = vector.shape_cast %82 : vector<1x2x32xf32> to vector<2x32xf32>
    %84 = tpu.concatenate %81, %83 in 0 : vector<2x32xf32>, vector<2x32xf32> -> vector<4x32xf32>
    %85 = tpu.concatenate %84, %51 in 1 : vector<4x32xf32>, vector<4x32xf32> -> vector<4x64xf32>
    %cst_33 = arith.constant dense<0.000000e+00> : vector<4x128xf32>
    %86 = tpu.matmul %85, %1, %cst_33 {dimension_numbers = #tpu.dot_dimension_numbers<[1], [0], [0], [1], [0, 0, 1, 1], [], []>} : vector<4x64xf32>, vector<64x128xf32>, vector<4x128xf32> -> vector<4x128xf32>
    %87 = vector.broadcast %5 : vector<1x128xf32> to vector<4x128xf32>
    %88 = arith.addf %86, %87 : vector<4x128xf32>
    %89 = arith.mulf %88, %16 : vector<4x128xf32>
    %90 = math.tanh %89 : vector<4x128xf32>
    %91 = arith.mulf %90, %16 : vector<4x128xf32>
    %92 = arith.addf %91, %19 : vector<4x128xf32>
    %c64_i32_34 = arith.constant 64 : i32
    %93 = tpu.dynamic_rotate %92 by %c64_i32_34 dim 1 : vector<4x128xf32>, i32 -> vector<4x128xf32>
    %94 = vector.extract_strided_slice %92 {offsets = [0, 32], sizes = [4, 32], strides = [1, 1]} : vector<4x128xf32> to vector<4x32xf32>
    %95 = arith.mulf %94, %48 : vector<4x32xf32>
    %96 = vector.extract_strided_slice %92 {offsets = [0, 0], sizes = [4, 32], strides = [1, 1]} : vector<4x128xf32> to vector<4x32xf32>
    %97 = vector.extract_strided_slice %93 {offsets = [0, 0], sizes = [4, 32], strides = [1, 1]} : vector<4x128xf32> to vector<4x32xf32>
    %98 = arith.mulf %96, %97 : vector<4x32xf32>
    %99 = arith.addf %95, %98 : vector<4x32xf32>
    %100 = vector.extract_strided_slice %93 {offsets = [0, 32], sizes = [4, 32], strides = [1, 1]} : vector<4x128xf32> to vector<4x32xf32>
    %101 = math.tanh %99 : vector<4x32xf32>
    %102 = arith.mulf %100, %101 : vector<4x32xf32>
    %103 = arith.addf %102, %84 : vector<4x32xf32>
    %104 = tpu.concatenate %103, %70 in 1 : vector<4x32xf32>, vector<4x32xf32> -> vector<4x64xf32>
    %cst_35 = arith.constant dense<0.000000e+00> : vector<4x128xf32>
    %105 = tpu.matmul %104, %3, %cst_35 {dimension_numbers = #tpu.dot_dimension_numbers<[1], [0], [0], [1], [0, 0, 1, 1], [], []>} : vector<4x64xf32>, vector<64x128xf32>, vector<4x128xf32> -> vector<4x128xf32>
    %106 = vector.broadcast %7 : vector<1x128xf32> to vector<4x128xf32>
    %107 = arith.addf %105, %106 : vector<4x128xf32>
    %108 = arith.mulf %107, %16 : vector<4x128xf32>
    %109 = math.tanh %108 : vector<4x128xf32>
    %110 = arith.mulf %109, %16 : vector<4x128xf32>
    %111 = arith.addf %110, %19 : vector<4x128xf32>
    %c64_i32_36 = arith.constant 64 : i32
    %112 = tpu.dynamic_rotate %111 by %c64_i32_36 dim 1 : vector<4x128xf32>, i32 -> vector<4x128xf32>
    %113 = vector.extract_strided_slice %111 {offsets = [0, 32], sizes = [4, 32], strides = [1, 1]} : vector<4x128xf32> to vector<4x32xf32>
    %114 = arith.mulf %113, %67 : vector<4x32xf32>
    %115 = vector.extract_strided_slice %111 {offsets = [0, 0], sizes = [4, 32], strides = [1, 1]} : vector<4x128xf32> to vector<4x32xf32>
    %116 = vector.extract_strided_slice %112 {offsets = [0, 0], sizes = [4, 32], strides = [1, 1]} : vector<4x128xf32> to vector<4x32xf32>
    %117 = arith.mulf %115, %116 : vector<4x32xf32>
    %118 = arith.addf %114, %117 : vector<4x32xf32>
    %119 = vector.extract_strided_slice %112 {offsets = [0, 32], sizes = [4, 32], strides = [1, 1]} : vector<4x128xf32> to vector<4x32xf32>
    %120 = math.tanh %118 : vector<4x32xf32>
    %121 = arith.mulf %119, %120 : vector<4x32xf32>
    %122 = arith.addf %121, %103 : vector<4x32xf32>
    %123 = vector.extract_strided_slice %122 {offsets = [0, 0], sizes = [2, 32], strides = [1, 1]} : vector<4x32xf32> to vector<2x32xf32>
    %c1_37 = arith.constant 1 : index
    %c0_38 = arith.constant 0 : index
    %c0_39 = arith.constant 0 : index
    %124 = vector.load %arg12[%c1_37, %c0_38, %c0_39] : memref<8x8x64xf32, #tpu.memory_space<vmem>>, vector<1x2x32xf32>
    %125 = vector.shape_cast %124 : vector<1x2x32xf32> to vector<2x32xf32>
    %126 = vector.shape_cast %123 : vector<2x32xf32> to vector<1x2x32xf32>
    tpu.vector_store %arg12[%c1_37, %c0_38, %c0_39], %126 {strides = array<i32>} : memref<8x8x64xf32, #tpu.memory_space<vmem>>, vector<1x2x32xf32>,
    %127 = vector.extract_strided_slice %122 {offsets = [2, 0], sizes = [2, 32], strides = [1, 1]} : vector<4x32xf32> to vector<2x32xf32>
    %c6 = arith.constant 6 : index
    %c0_40 = arith.constant 0 : index
    %c32_41 = arith.constant 32 : index
    %128 = vector.load %arg12[%c6, %c0_40, %c32_41] : memref<8x8x64xf32, #tpu.memory_space<vmem>>, vector<1x2x32xf32>
    %129 = vector.shape_cast %128 : vector<1x2x32xf32> to vector<2x32xf32>
    %130 = vector.shape_cast %127 : vector<2x32xf32> to vector<1x2x32xf32>
    tpu.vector_store %arg12[%c6, %c0_40, %c32_41], %130 {strides = array<i32>} : memref<8x8x64xf32, #tpu.memory_space<vmem>>, vector<1x2x32xf32>,
    %131 = vector.extract_strided_slice %22 {offsets = [2, 0, 0], sizes = [1, 2, 32], strides = [1, 1, 1]} : vector<8x2x32xf32> to vector<1x2x32xf32>
    %132 = vector.shape_cast %131 : vector<1x2x32xf32> to vector<2x32xf32>
    %133 = vector.extract_strided_slice %22 {offsets = [5, 0, 0], sizes = [1, 2, 32], strides = [1, 1, 1]} : vector<8x2x32xf32> to vector<1x2x32xf32>
    %134 = vector.shape_cast %133 : vector<1x2x32xf32> to vector<2x32xf32>
    %135 = tpu.concatenate %132, %134 in 0 : vector<2x32xf32>, vector<2x32xf32> -> vector<4x32xf32>
    %136 = tpu.concatenate %135, %102 in 1 : vector<4x32xf32>, vector<4x32xf32> -> vector<4x64xf32>
    %cst_42 = arith.constant dense<0.000000e+00> : vector<4x128xf32>
    %137 = tpu.matmul %136, %1, %cst_42 {dimension_numbers = #tpu.dot_dimension_numbers<[1], [0], [0], [1], [0, 0, 1, 1], [], []>} : vector<4x64xf32>, vector<64x128xf32>, vector<4x128xf32> -> vector<4x128xf32>
    %138 = vector.broadcast %5 : vector<1x128xf32> to vector<4x128xf32>
    %139 = arith.addf %137, %138 : vector<4x128xf32>
    %140 = arith.mulf %139, %16 : vector<4x128xf32>
    %141 = math.tanh %140 : vector<4x128xf32>
    %142 = arith.mulf %141, %16 : vector<4x128xf32>
    %143 = arith.addf %142, %19 : vector<4x128xf32>
    %c64_i32_43 = arith.constant 64 : i32
    %144 = tpu.dynamic_rotate %143 by %c64_i32_43 dim 1 : vector<4x128xf32>, i32 -> vector<4x128xf32>
    %145 = vector.extract_strided_slice %143 {offsets = [0, 32], sizes = [4, 32], strides = [1, 1]} : vector<4x128xf32> to vector<4x32xf32>
    %146 = arith.mulf %145, %99 : vector<4x32xf32>
    %147 = vector.extract_strided_slice %143 {offsets = [0, 0], sizes = [4, 32], strides = [1, 1]} : vector<4x128xf32> to vector<4x32xf32>
    %148 = vector.extract_strided_slice %144 {offsets = [0, 0], sizes = [4, 32], strides = [1, 1]} : vector<4x128xf32> to vector<4x32xf32>
    %149 = arith.mulf %147, %148 : vector<4x32xf32>
    %150 = arith.addf %146, %149 : vector<4x32xf32>
    %151 = vector.extract_strided_slice %144 {offsets = [0, 32], sizes = [4, 32], strides = [1, 1]} : vector<4x128xf32> to vector<4x32xf32>
    %152 = math.tanh %150 : vector<4x32xf32>
    %153 = arith.mulf %151, %152 : vector<4x32xf32>
    %154 = arith.addf %153, %135 : vector<4x32xf32>
    %155 = tpu.concatenate %154, %121 in 1 : vector<4x32xf32>, vector<4x32xf32> -> vector<4x64xf32>
    %cst_44 = arith.constant dense<0.000000e+00> : vector<4x128xf32>
    %156 = tpu.matmul %155, %3, %cst_44 {dimension_numbers = #tpu.dot_dimension_numbers<[1], [0], [0], [1], [0, 0, 1, 1], [], []>} : vector<4x64xf32>, vector<64x128xf32>, vector<4x128xf32> -> vector<4x128xf32>
    %157 = vector.broadcast %7 : vector<1x128xf32> to vector<4x128xf32>
    %158 = arith.addf %156, %157 : vector<4x128xf32>
    %159 = arith.mulf %158, %16 : vector<4x128xf32>
    %160 = math.tanh %159 : vector<4x128xf32>
    %161 = arith.mulf %160, %16 : vector<4x128xf32>
    %162 = arith.addf %161, %19 : vector<4x128xf32>
    %c64_i32_45 = arith.constant 64 : i32
    %163 = tpu.dynamic_rotate %162 by %c64_i32_45 dim 1 : vector<4x128xf32>, i32 -> vector<4x128xf32>
    %164 = vector.extract_strided_slice %162 {offsets = [0, 32], sizes = [4, 32], strides = [1, 1]} : vector<4x128xf32> to vector<4x32xf32>
    %165 = arith.mulf %164, %118 : vector<4x32xf32>
    %166 = vector.extract_strided_slice %162 {offsets = [0, 0], sizes = [4, 32], strides = [1, 1]} : vector<4x128xf32> to vector<4x32xf32>
    %167 = vector.extract_strided_slice %163 {offsets = [0, 0], sizes = [4, 32], strides = [1, 1]} : vector<4x128xf32> to vector<4x32xf32>
    %168 = arith.mulf %166, %167 : vector<4x32xf32>
    %169 = arith.addf %165, %168 : vector<4x32xf32>
    %170 = vector.extract_strided_slice %163 {offsets = [0, 32], sizes = [4, 32], strides = [1, 1]} : vector<4x128xf32> to vector<4x32xf32>
    %171 = math.tanh %169 : vector<4x32xf32>
    %172 = arith.mulf %170, %171 : vector<4x32xf32>
    %173 = arith.addf %172, %154 : vector<4x32xf32>
    %174 = vector.extract_strided_slice %173 {offsets = [0, 0], sizes = [2, 32], strides = [1, 1]} : vector<4x32xf32> to vector<2x32xf32>
    %c2 = arith.constant 2 : index
    %c0_46 = arith.constant 0 : index
    %c0_47 = arith.constant 0 : index
    %175 = vector.load %arg12[%c2, %c0_46, %c0_47] : memref<8x8x64xf32, #tpu.memory_space<vmem>>, vector<1x2x32xf32>
    %176 = vector.shape_cast %175 : vector<1x2x32xf32> to vector<2x32xf32>
    %177 = vector.shape_cast %174 : vector<2x32xf32> to vector<1x2x32xf32>
    tpu.vector_store %arg12[%c2, %c0_46, %c0_47], %177 {strides = array<i32>} : memref<8x8x64xf32, #tpu.memory_space<vmem>>, vector<1x2x32xf32>,
    %178 = vector.extract_strided_slice %173 {offsets = [2, 0], sizes = [2, 32], strides = [1, 1]} : vector<4x32xf32> to vector<2x32xf32>
    %c5 = arith.constant 5 : index
    %c0_48 = arith.constant 0 : index
    %c32_49 = arith.constant 32 : index
    %179 = vector.load %arg12[%c5, %c0_48, %c32_49] : memref<8x8x64xf32, #tpu.memory_space<vmem>>, vector<1x2x32xf32>
    %180 = vector.shape_cast %179 : vector<1x2x32xf32> to vector<2x32xf32>
    %181 = vector.shape_cast %178 : vector<2x32xf32> to vector<1x2x32xf32>
    tpu.vector_store %arg12[%c5, %c0_48, %c32_49], %181 {strides = array<i32>} : memref<8x8x64xf32, #tpu.memory_space<vmem>>, vector<1x2x32xf32>,
    %182 = vector.extract_strided_slice %22 {offsets = [3, 0, 0], sizes = [1, 2, 32], strides = [1, 1, 1]} : vector<8x2x32xf32> to vector<1x2x32xf32>
    %183 = vector.shape_cast %182 : vector<1x2x32xf32> to vector<2x32xf32>
    %184 = vector.extract_strided_slice %22 {offsets = [4, 0, 0], sizes = [1, 2, 32], strides = [1, 1, 1]} : vector<8x2x32xf32> to vector<1x2x32xf32>
    %185 = vector.shape_cast %184 : vector<1x2x32xf32> to vector<2x32xf32>
    %186 = tpu.concatenate %183, %185 in 0 : vector<2x32xf32>, vector<2x32xf32> -> vector<4x32xf32>
    %187 = tpu.concatenate %186, %153 in 1 : vector<4x32xf32>, vector<4x32xf32> -> vector<4x64xf32>
    %cst_50 = arith.constant dense<0.000000e+00> : vector<4x128xf32>
    %188 = tpu.matmul %187, %1, %cst_50 {dimension_numbers = #tpu.dot_dimension_numbers<[1], [0], [0], [1], [0, 0, 1, 1], [], []>} : vector<4x64xf32>, vector<64x128xf32>, vector<4x128xf32> -> vector<4x128xf32>
    %189 = vector.broadcast %5 : vector<1x128xf32> to vector<4x128xf32>
    %190 = arith.addf %188, %189 : vector<4x128xf32>
    %191 = arith.mulf %190, %16 : vector<4x128xf32>
    %192 = math.tanh %191 : vector<4x128xf32>
    %193 = arith.mulf %192, %16 : vector<4x128xf32>
    %194 = arith.addf %193, %19 : vector<4x128xf32>
    %c64_i32_51 = arith.constant 64 : i32
    %195 = tpu.dynamic_rotate %194 by %c64_i32_51 dim 1 : vector<4x128xf32>, i32 -> vector<4x128xf32>
    %196 = vector.extract_strided_slice %194 {offsets = [0, 32], sizes = [4, 32], strides = [1, 1]} : vector<4x128xf32> to vector<4x32xf32>
    %197 = arith.mulf %196, %150 : vector<4x32xf32>
    %198 = vector.extract_strided_slice %194 {offsets = [0, 0], sizes = [4, 32], strides = [1, 1]} : vector<4x128xf32> to vector<4x32xf32>
    %199 = vector.extract_strided_slice %195 {offsets = [0, 0], sizes = [4, 32], strides = [1, 1]} : vector<4x128xf32> to vector<4x32xf32>
    %200 = arith.mulf %198, %199 : vector<4x32xf32>
    %201 = arith.addf %197, %200 : vector<4x32xf32>
    %202 = vector.extract_strided_slice %195 {offsets = [0, 32], sizes = [4, 32], strides = [1, 1]} : vector<4x128xf32> to vector<4x32xf32>
    %203 = math.tanh %201 : vector<4x32xf32>
    %204 = arith.mulf %202, %203 : vector<4x32xf32>
    %205 = arith.addf %204, %186 : vector<4x32xf32>
    %206 = tpu.concatenate %205, %172 in 1 : vector<4x32xf32>, vector<4x32xf32> -> vector<4x64xf32>
    %cst_52 = arith.constant dense<0.000000e+00> : vector<4x128xf32>
    %207 = tpu.matmul %206, %3, %cst_52 {dimension_numbers = #tpu.dot_dimension_numbers<[1], [0], [0], [1], [0, 0, 1, 1], [], []>} : vector<4x64xf32>, vector<64x128xf32>, vector<4x128xf32> -> vector<4x128xf32>
    %208 = vector.broadcast %7 : vector<1x128xf32> to vector<4x128xf32>
    %209 = arith.addf %207, %208 : vector<4x128xf32>
    %210 = arith.mulf %209, %16 : vector<4x128xf32>
    %211 = math.tanh %210 : vector<4x128xf32>
    %212 = arith.mulf %211, %16 : vector<4x128xf32>
    %213 = arith.addf %212, %19 : vector<4x128xf32>
    %c64_i32_53 = arith.constant 64 : i32
    %214 = tpu.dynamic_rotate %213 by %c64_i32_53 dim 1 : vector<4x128xf32>, i32 -> vector<4x128xf32>
    %215 = vector.extract_strided_slice %213 {offsets = [0, 32], sizes = [4, 32], strides = [1, 1]} : vector<4x128xf32> to vector<4x32xf32>
    %216 = arith.mulf %215, %169 : vector<4x32xf32>
    %217 = vector.extract_strided_slice %213 {offsets = [0, 0], sizes = [4, 32], strides = [1, 1]} : vector<4x128xf32> to vector<4x32xf32>
    %218 = vector.extract_strided_slice %214 {offsets = [0, 0], sizes = [4, 32], strides = [1, 1]} : vector<4x128xf32> to vector<4x32xf32>
    %219 = arith.mulf %217, %218 : vector<4x32xf32>
    %220 = arith.addf %216, %219 : vector<4x32xf32>
    %221 = vector.extract_strided_slice %214 {offsets = [0, 32], sizes = [4, 32], strides = [1, 1]} : vector<4x128xf32> to vector<4x32xf32>
    %222 = math.tanh %220 : vector<4x32xf32>
    %223 = arith.mulf %221, %222 : vector<4x32xf32>
    %224 = arith.addf %223, %205 : vector<4x32xf32>
    %225 = vector.extract_strided_slice %224 {offsets = [0, 0], sizes = [2, 32], strides = [1, 1]} : vector<4x32xf32> to vector<2x32xf32>
    %c3 = arith.constant 3 : index
    %c0_54 = arith.constant 0 : index
    %c0_55 = arith.constant 0 : index
    %226 = vector.load %arg12[%c3, %c0_54, %c0_55] : memref<8x8x64xf32, #tpu.memory_space<vmem>>, vector<1x2x32xf32>
    %227 = vector.shape_cast %226 : vector<1x2x32xf32> to vector<2x32xf32>
    %228 = vector.shape_cast %225 : vector<2x32xf32> to vector<1x2x32xf32>
    tpu.vector_store %arg12[%c3, %c0_54, %c0_55], %228 {strides = array<i32>} : memref<8x8x64xf32, #tpu.memory_space<vmem>>, vector<1x2x32xf32>,
    %229 = vector.extract_strided_slice %224 {offsets = [2, 0], sizes = [2, 32], strides = [1, 1]} : vector<4x32xf32> to vector<2x32xf32>
    %c4 = arith.constant 4 : index
    %c0_56 = arith.constant 0 : index
    %c32_57 = arith.constant 32 : index
    %230 = vector.load %arg12[%c4, %c0_56, %c32_57] : memref<8x8x64xf32, #tpu.memory_space<vmem>>, vector<1x2x32xf32>
    %231 = vector.shape_cast %230 : vector<1x2x32xf32> to vector<2x32xf32>
    %232 = vector.shape_cast %229 : vector<2x32xf32> to vector<1x2x32xf32>
    tpu.vector_store %arg12[%c4, %c0_56, %c32_57], %232 {strides = array<i32>} : memref<8x8x64xf32, #tpu.memory_space<vmem>>, vector<1x2x32xf32>,
    %233 = vector.extract_strided_slice %22 {offsets = [4, 0, 0], sizes = [1, 2, 32], strides = [1, 1, 1]} : vector<8x2x32xf32> to vector<1x2x32xf32>
    %234 = vector.shape_cast %233 : vector<1x2x32xf32> to vector<2x32xf32>
    %235 = vector.extract_strided_slice %22 {offsets = [3, 0, 0], sizes = [1, 2, 32], strides = [1, 1, 1]} : vector<8x2x32xf32> to vector<1x2x32xf32>
    %236 = vector.shape_cast %235 : vector<1x2x32xf32> to vector<2x32xf32>
    %237 = tpu.concatenate %234, %236 in 0 : vector<2x32xf32>, vector<2x32xf32> -> vector<4x32xf32>
    %238 = tpu.concatenate %237, %204 in 1 : vector<4x32xf32>, vector<4x32xf32> -> vector<4x64xf32>
    %cst_58 = arith.constant dense<0.000000e+00> : vector<4x128xf32>
    %239 = tpu.matmul %238, %1, %cst_58 {dimension_numbers = #tpu.dot_dimension_numbers<[1], [0], [0], [1], [0, 0, 1, 1], [], []>} : vector<4x64xf32>, vector<64x128xf32>, vector<4x128xf32> -> vector<4x128xf32>
    %240 = vector.broadcast %5 : vector<1x128xf32> to vector<4x128xf32>
    %241 = arith.addf %239, %240 : vector<4x128xf32>
    %242 = arith.mulf %241, %16 : vector<4x128xf32>
    %243 = math.tanh %242 : vector<4x128xf32>
    %244 = arith.mulf %243, %16 : vector<4x128xf32>
    %245 = arith.addf %244, %19 : vector<4x128xf32>
    %c64_i32_59 = arith.constant 64 : i32
    %246 = tpu.dynamic_rotate %245 by %c64_i32_59 dim 1 : vector<4x128xf32>, i32 -> vector<4x128xf32>
    %247 = vector.extract_strided_slice %245 {offsets = [0, 32], sizes = [4, 32], strides = [1, 1]} : vector<4x128xf32> to vector<4x32xf32>
    %248 = arith.mulf %247, %201 : vector<4x32xf32>
    %249 = vector.extract_strided_slice %245 {offsets = [0, 0], sizes = [4, 32], strides = [1, 1]} : vector<4x128xf32> to vector<4x32xf32>
    %250 = vector.extract_strided_slice %246 {offsets = [0, 0], sizes = [4, 32], strides = [1, 1]} : vector<4x128xf32> to vector<4x32xf32>
    %251 = arith.mulf %249, %250 : vector<4x32xf32>
    %252 = arith.addf %248, %251 : vector<4x32xf32>
    %253 = vector.extract_strided_slice %246 {offsets = [0, 32], sizes = [4, 32], strides = [1, 1]} : vector<4x128xf32> to vector<4x32xf32>
    %254 = math.tanh %252 : vector<4x32xf32>
    %255 = arith.mulf %253, %254 : vector<4x32xf32>
    %256 = arith.addf %255, %237 : vector<4x32xf32>
    %257 = tpu.concatenate %256, %223 in 1 : vector<4x32xf32>, vector<4x32xf32> -> vector<4x64xf32>
    %cst_60 = arith.constant dense<0.000000e+00> : vector<4x128xf32>
    %258 = tpu.matmul %257, %3, %cst_60 {dimension_numbers = #tpu.dot_dimension_numbers<[1], [0], [0], [1], [0, 0, 1, 1], [], []>} : vector<4x64xf32>, vector<64x128xf32>, vector<4x128xf32> -> vector<4x128xf32>
    %259 = vector.broadcast %7 : vector<1x128xf32> to vector<4x128xf32>
    %260 = arith.addf %258, %259 : vector<4x128xf32>
    %261 = arith.mulf %260, %16 : vector<4x128xf32>
    %262 = math.tanh %261 : vector<4x128xf32>
    %263 = arith.mulf %262, %16 : vector<4x128xf32>
    %264 = arith.addf %263, %19 : vector<4x128xf32>
    %c64_i32_61 = arith.constant 64 : i32
    %265 = tpu.dynamic_rotate %264 by %c64_i32_61 dim 1 : vector<4x128xf32>, i32 -> vector<4x128xf32>
    %266 = vector.extract_strided_slice %264 {offsets = [0, 32], sizes = [4, 32], strides = [1, 1]} : vector<4x128xf32> to vector<4x32xf32>
    %267 = arith.mulf %266, %220 : vector<4x32xf32>
    %268 = vector.extract_strided_slice %264 {offsets = [0, 0], sizes = [4, 32], strides = [1, 1]} : vector<4x128xf32> to vector<4x32xf32>
    %269 = vector.extract_strided_slice %265 {offsets = [0, 0], sizes = [4, 32], strides = [1, 1]} : vector<4x128xf32> to vector<4x32xf32>
    %270 = arith.mulf %268, %269 : vector<4x32xf32>
    %271 = arith.addf %267, %270 : vector<4x32xf32>
    %272 = vector.extract_strided_slice %265 {offsets = [0, 32], sizes = [4, 32], strides = [1, 1]} : vector<4x128xf32> to vector<4x32xf32>
    %273 = math.tanh %271 : vector<4x32xf32>
    %274 = arith.mulf %272, %273 : vector<4x32xf32>
    %275 = arith.addf %274, %256 : vector<4x32xf32>
    %276 = vector.extract_strided_slice %275 {offsets = [0, 0], sizes = [2, 32], strides = [1, 1]} : vector<4x32xf32> to vector<2x32xf32>
    %c4_62 = arith.constant 4 : index
    %c0_63 = arith.constant 0 : index
    %c0_64 = arith.constant 0 : index
    %277 = vector.load %arg12[%c4_62, %c0_63, %c0_64] : memref<8x8x64xf32, #tpu.memory_space<vmem>>, vector<1x2x32xf32>
    %278 = vector.shape_cast %277 : vector<1x2x32xf32> to vector<2x32xf32>
    %279 = vector.shape_cast %276 : vector<2x32xf32> to vector<1x2x32xf32>
    tpu.vector_store %arg12[%c4_62, %c0_63, %c0_64], %279 {strides = array<i32>} : memref<8x8x64xf32, #tpu.memory_space<vmem>>, vector<1x2x32xf32>,
    %280 = vector.extract_strided_slice %275 {offsets = [2, 0], sizes = [2, 32], strides = [1, 1]} : vector<4x32xf32> to vector<2x32xf32>
    %c3_65 = arith.constant 3 : index
    %c0_66 = arith.constant 0 : index
    %c32_67 = arith.constant 32 : index
    %281 = vector.load %arg12[%c3_65, %c0_66, %c32_67] : memref<8x8x64xf32, #tpu.memory_space<vmem>>, vector<1x2x32xf32>
    %282 = vector.shape_cast %281 : vector<1x2x32xf32> to vector<2x32xf32>
    %283 = vector.shape_cast %280 : vector<2x32xf32> to vector<1x2x32xf32>
    tpu.vector_store %arg12[%c3_65, %c0_66, %c32_67], %283 {strides = array<i32>} : memref<8x8x64xf32, #tpu.memory_space<vmem>>, vector<1x2x32xf32>,
    %284 = vector.extract_strided_slice %22 {offsets = [5, 0, 0], sizes = [1, 2, 32], strides = [1, 1, 1]} : vector<8x2x32xf32> to vector<1x2x32xf32>
    %285 = vector.shape_cast %284 : vector<1x2x32xf32> to vector<2x32xf32>
    %286 = vector.extract_strided_slice %22 {offsets = [2, 0, 0], sizes = [1, 2, 32], strides = [1, 1, 1]} : vector<8x2x32xf32> to vector<1x2x32xf32>
    %287 = vector.shape_cast %286 : vector<1x2x32xf32> to vector<2x32xf32>
    %288 = tpu.concatenate %285, %287 in 0 : vector<2x32xf32>, vector<2x32xf32> -> vector<4x32xf32>
    %289 = tpu.concatenate %288, %255 in 1 : vector<4x32xf32>, vector<4x32xf32> -> vector<4x64xf32>
    %cst_68 = arith.constant dense<0.000000e+00> : vector<4x128xf32>
    %290 = tpu.matmul %289, %1, %cst_68 {dimension_numbers = #tpu.dot_dimension_numbers<[1], [0], [0], [1], [0, 0, 1, 1], [], []>} : vector<4x64xf32>, vector<64x128xf32>, vector<4x128xf32> -> vector<4x128xf32>
    %291 = vector.broadcast %5 : vector<1x128xf32> to vector<4x128xf32>
    %292 = arith.addf %290, %291 : vector<4x128xf32>
    %293 = arith.mulf %292, %16 : vector<4x128xf32>
    %294 = math.tanh %293 : vector<4x128xf32>
    %295 = arith.mulf %294, %16 : vector<4x128xf32>
    %296 = arith.addf %295, %19 : vector<4x128xf32>
    %c64_i32_69 = arith.constant 64 : i32
    %297 = tpu.dynamic_rotate %296 by %c64_i32_69 dim 1 : vector<4x128xf32>, i32 -> vector<4x128xf32>
    %298 = vector.extract_strided_slice %296 {offsets = [0, 32], sizes = [4, 32], strides = [1, 1]} : vector<4x128xf32> to vector<4x32xf32>
    %299 = arith.mulf %298, %252 : vector<4x32xf32>
    %300 = vector.extract_strided_slice %296 {offsets = [0, 0], sizes = [4, 32], strides = [1, 1]} : vector<4x128xf32> to vector<4x32xf32>
    %301 = vector.extract_strided_slice %297 {offsets = [0, 0], sizes = [4, 32], strides = [1, 1]} : vector<4x128xf32> to vector<4x32xf32>
    %302 = arith.mulf %300, %301 : vector<4x32xf32>
    %303 = arith.addf %299, %302 : vector<4x32xf32>
    %304 = vector.extract_strided_slice %297 {offsets = [0, 32], sizes = [4, 32], strides = [1, 1]} : vector<4x128xf32> to vector<4x32xf32>
    %305 = math.tanh %303 : vector<4x32xf32>
    %306 = arith.mulf %304, %305 : vector<4x32xf32>
    %307 = arith.addf %306, %288 : vector<4x32xf32>
    %308 = tpu.concatenate %307, %274 in 1 : vector<4x32xf32>, vector<4x32xf32> -> vector<4x64xf32>
    %cst_70 = arith.constant dense<0.000000e+00> : vector<4x128xf32>
    %309 = tpu.matmul %308, %3, %cst_70 {dimension_numbers = #tpu.dot_dimension_numbers<[1], [0], [0], [1], [0, 0, 1, 1], [], []>} : vector<4x64xf32>, vector<64x128xf32>, vector<4x128xf32> -> vector<4x128xf32>
    %310 = vector.broadcast %7 : vector<1x128xf32> to vector<4x128xf32>
    %311 = arith.addf %309, %310 : vector<4x128xf32>
    %312 = arith.mulf %311, %16 : vector<4x128xf32>
    %313 = math.tanh %312 : vector<4x128xf32>
    %314 = arith.mulf %313, %16 : vector<4x128xf32>
    %315 = arith.addf %314, %19 : vector<4x128xf32>
    %c64_i32_71 = arith.constant 64 : i32
    %316 = tpu.dynamic_rotate %315 by %c64_i32_71 dim 1 : vector<4x128xf32>, i32 -> vector<4x128xf32>
    %317 = vector.extract_strided_slice %315 {offsets = [0, 32], sizes = [4, 32], strides = [1, 1]} : vector<4x128xf32> to vector<4x32xf32>
    %318 = arith.mulf %317, %271 : vector<4x32xf32>
    %319 = vector.extract_strided_slice %315 {offsets = [0, 0], sizes = [4, 32], strides = [1, 1]} : vector<4x128xf32> to vector<4x32xf32>
    %320 = vector.extract_strided_slice %316 {offsets = [0, 0], sizes = [4, 32], strides = [1, 1]} : vector<4x128xf32> to vector<4x32xf32>
    %321 = arith.mulf %319, %320 : vector<4x32xf32>
    %322 = arith.addf %318, %321 : vector<4x32xf32>
    %323 = vector.extract_strided_slice %316 {offsets = [0, 32], sizes = [4, 32], strides = [1, 1]} : vector<4x128xf32> to vector<4x32xf32>
    %324 = math.tanh %322 : vector<4x32xf32>
    %325 = arith.mulf %323, %324 : vector<4x32xf32>
    %326 = arith.addf %325, %307 : vector<4x32xf32>
    %327 = vector.extract_strided_slice %326 {offsets = [0, 0], sizes = [2, 32], strides = [1, 1]} : vector<4x32xf32> to vector<2x32xf32>
    %c5_72 = arith.constant 5 : index
    %c0_73 = arith.constant 0 : index
    %c0_74 = arith.constant 0 : index
    %328 = vector.load %arg12[%c5_72, %c0_73, %c0_74] : memref<8x8x64xf32, #tpu.memory_space<vmem>>, vector<1x2x32xf32>
    %329 = vector.shape_cast %328 : vector<1x2x32xf32> to vector<2x32xf32>
    %330 = vector.shape_cast %327 : vector<2x32xf32> to vector<1x2x32xf32>
    tpu.vector_store %arg12[%c5_72, %c0_73, %c0_74], %330 {strides = array<i32>} : memref<8x8x64xf32, #tpu.memory_space<vmem>>, vector<1x2x32xf32>,
    %331 = vector.extract_strided_slice %326 {offsets = [2, 0], sizes = [2, 32], strides = [1, 1]} : vector<4x32xf32> to vector<2x32xf32>
    %c2_75 = arith.constant 2 : index
    %c0_76 = arith.constant 0 : index
    %c32_77 = arith.constant 32 : index
    %332 = vector.load %arg12[%c2_75, %c0_76, %c32_77] : memref<8x8x64xf32, #tpu.memory_space<vmem>>, vector<1x2x32xf32>
    %333 = vector.shape_cast %332 : vector<1x2x32xf32> to vector<2x32xf32>
    %334 = vector.shape_cast %331 : vector<2x32xf32> to vector<1x2x32xf32>
    tpu.vector_store %arg12[%c2_75, %c0_76, %c32_77], %334 {strides = array<i32>} : memref<8x8x64xf32, #tpu.memory_space<vmem>>, vector<1x2x32xf32>,
    %335 = vector.extract_strided_slice %22 {offsets = [6, 0, 0], sizes = [1, 2, 32], strides = [1, 1, 1]} : vector<8x2x32xf32> to vector<1x2x32xf32>
    %336 = vector.shape_cast %335 : vector<1x2x32xf32> to vector<2x32xf32>
    %337 = vector.extract_strided_slice %22 {offsets = [1, 0, 0], sizes = [1, 2, 32], strides = [1, 1, 1]} : vector<8x2x32xf32> to vector<1x2x32xf32>
    %338 = vector.shape_cast %337 : vector<1x2x32xf32> to vector<2x32xf32>
    %339 = tpu.concatenate %336, %338 in 0 : vector<2x32xf32>, vector<2x32xf32> -> vector<4x32xf32>
    %340 = tpu.concatenate %339, %306 in 1 : vector<4x32xf32>, vector<4x32xf32> -> vector<4x64xf32>
    %cst_78 = arith.constant dense<0.000000e+00> : vector<4x128xf32>
    %341 = tpu.matmul %340, %1, %cst_78 {dimension_numbers = #tpu.dot_dimension_numbers<[1], [0], [0], [1], [0, 0, 1, 1], [], []>} : vector<4x64xf32>, vector<64x128xf32>, vector<4x128xf32> -> vector<4x128xf32>
    %342 = vector.broadcast %5 : vector<1x128xf32> to vector<4x128xf32>
    %343 = arith.addf %341, %342 : vector<4x128xf32>
    %344 = arith.mulf %343, %16 : vector<4x128xf32>
    %345 = math.tanh %344 : vector<4x128xf32>
    %346 = arith.mulf %345, %16 : vector<4x128xf32>
    %347 = arith.addf %346, %19 : vector<4x128xf32>
    %c64_i32_79 = arith.constant 64 : i32
    %348 = tpu.dynamic_rotate %347 by %c64_i32_79 dim 1 : vector<4x128xf32>, i32 -> vector<4x128xf32>
    %349 = vector.extract_strided_slice %347 {offsets = [0, 32], sizes = [4, 32], strides = [1, 1]} : vector<4x128xf32> to vector<4x32xf32>
    %350 = arith.mulf %349, %303 : vector<4x32xf32>
    %351 = vector.extract_strided_slice %347 {offsets = [0, 0], sizes = [4, 32], strides = [1, 1]} : vector<4x128xf32> to vector<4x32xf32>
    %352 = vector.extract_strided_slice %348 {offsets = [0, 0], sizes = [4, 32], strides = [1, 1]} : vector<4x128xf32> to vector<4x32xf32>
    %353 = arith.mulf %351, %352 : vector<4x32xf32>
    %354 = arith.addf %350, %353 : vector<4x32xf32>
    %355 = vector.extract_strided_slice %348 {offsets = [0, 32], sizes = [4, 32], strides = [1, 1]} : vector<4x128xf32> to vector<4x32xf32>
    %356 = math.tanh %354 : vector<4x32xf32>
    %357 = arith.mulf %355, %356 : vector<4x32xf32>
    %358 = arith.addf %357, %339 : vector<4x32xf32>
    %359 = tpu.concatenate %358, %325 in 1 : vector<4x32xf32>, vector<4x32xf32> -> vector<4x64xf32>
    %cst_80 = arith.constant dense<0.000000e+00> : vector<4x128xf32>
    %360 = tpu.matmul %359, %3, %cst_80 {dimension_numbers = #tpu.dot_dimension_numbers<[1], [0], [0], [1], [0, 0, 1, 1], [], []>} : vector<4x64xf32>, vector<64x128xf32>, vector<4x128xf32> -> vector<4x128xf32>
    %361 = vector.broadcast %7 : vector<1x128xf32> to vector<4x128xf32>
    %362 = arith.addf %360, %361 : vector<4x128xf32>
    %363 = arith.mulf %362, %16 : vector<4x128xf32>
    %364 = math.tanh %363 : vector<4x128xf32>
    %365 = arith.mulf %364, %16 : vector<4x128xf32>
    %366 = arith.addf %365, %19 : vector<4x128xf32>
    %c64_i32_81 = arith.constant 64 : i32
    %367 = tpu.dynamic_rotate %366 by %c64_i32_81 dim 1 : vector<4x128xf32>, i32 -> vector<4x128xf32>
    %368 = vector.extract_strided_slice %366 {offsets = [0, 32], sizes = [4, 32], strides = [1, 1]} : vector<4x128xf32> to vector<4x32xf32>
    %369 = arith.mulf %368, %322 : vector<4x32xf32>
    %370 = vector.extract_strided_slice %366 {offsets = [0, 0], sizes = [4, 32], strides = [1, 1]} : vector<4x128xf32> to vector<4x32xf32>
    %371 = vector.extract_strided_slice %367 {offsets = [0, 0], sizes = [4, 32], strides = [1, 1]} : vector<4x128xf32> to vector<4x32xf32>
    %372 = arith.mulf %370, %371 : vector<4x32xf32>
    %373 = arith.addf %369, %372 : vector<4x32xf32>
    %374 = vector.extract_strided_slice %367 {offsets = [0, 32], sizes = [4, 32], strides = [1, 1]} : vector<4x128xf32> to vector<4x32xf32>
    %375 = math.tanh %373 : vector<4x32xf32>
    %376 = arith.mulf %374, %375 : vector<4x32xf32>
    %377 = arith.addf %376, %358 : vector<4x32xf32>
    %378 = vector.extract_strided_slice %377 {offsets = [0, 0], sizes = [2, 32], strides = [1, 1]} : vector<4x32xf32> to vector<2x32xf32>
    %c6_82 = arith.constant 6 : index
    %c0_83 = arith.constant 0 : index
    %c0_84 = arith.constant 0 : index
    %379 = vector.load %arg12[%c6_82, %c0_83, %c0_84] : memref<8x8x64xf32, #tpu.memory_space<vmem>>, vector<1x2x32xf32>
    %380 = vector.shape_cast %379 : vector<1x2x32xf32> to vector<2x32xf32>
    %381 = vector.shape_cast %378 : vector<2x32xf32> to vector<1x2x32xf32>
    tpu.vector_store %arg12[%c6_82, %c0_83, %c0_84], %381 {strides = array<i32>} : memref<8x8x64xf32, #tpu.memory_space<vmem>>, vector<1x2x32xf32>,
    %382 = vector.extract_strided_slice %377 {offsets = [2, 0], sizes = [2, 32], strides = [1, 1]} : vector<4x32xf32> to vector<2x32xf32>
    %c1_85 = arith.constant 1 : index
    %c0_86 = arith.constant 0 : index
    %c32_87 = arith.constant 32 : index
    %383 = vector.load %arg12[%c1_85, %c0_86, %c32_87] : memref<8x8x64xf32, #tpu.memory_space<vmem>>, vector<1x2x32xf32>
    %384 = vector.shape_cast %383 : vector<1x2x32xf32> to vector<2x32xf32>
    %385 = vector.shape_cast %382 : vector<2x32xf32> to vector<1x2x32xf32>
    tpu.vector_store %arg12[%c1_85, %c0_86, %c32_87], %385 {strides = array<i32>} : memref<8x8x64xf32, #tpu.memory_space<vmem>>, vector<1x2x32xf32>,
    %386 = vector.extract_strided_slice %22 {offsets = [7, 0, 0], sizes = [1, 2, 32], strides = [1, 1, 1]} : vector<8x2x32xf32> to vector<1x2x32xf32>
    %387 = vector.shape_cast %386 : vector<1x2x32xf32> to vector<2x32xf32>
    %388 = vector.extract_strided_slice %22 {offsets = [0, 0, 0], sizes = [1, 2, 32], strides = [1, 1, 1]} : vector<8x2x32xf32> to vector<1x2x32xf32>
    %389 = vector.shape_cast %388 : vector<1x2x32xf32> to vector<2x32xf32>
    %390 = tpu.concatenate %387, %389 in 0 : vector<2x32xf32>, vector<2x32xf32> -> vector<4x32xf32>
    %391 = tpu.concatenate %390, %357 in 1 : vector<4x32xf32>, vector<4x32xf32> -> vector<4x64xf32>
    %cst_88 = arith.constant dense<0.000000e+00> : vector<4x128xf32>
    %392 = tpu.matmul %391, %1, %cst_88 {dimension_numbers = #tpu.dot_dimension_numbers<[1], [0], [0], [1], [0, 0, 1, 1], [], []>} : vector<4x64xf32>, vector<64x128xf32>, vector<4x128xf32> -> vector<4x128xf32>
    %393 = vector.broadcast %5 : vector<1x128xf32> to vector<4x128xf32>
    %394 = arith.addf %392, %393 : vector<4x128xf32>
    %395 = arith.mulf %394, %16 : vector<4x128xf32>
    %396 = math.tanh %395 : vector<4x128xf32>
    %397 = arith.mulf %396, %16 : vector<4x128xf32>
    %398 = arith.addf %397, %19 : vector<4x128xf32>
    %c64_i32_89 = arith.constant 64 : i32
    %399 = tpu.dynamic_rotate %398 by %c64_i32_89 dim 1 : vector<4x128xf32>, i32 -> vector<4x128xf32>
    %400 = vector.extract_strided_slice %398 {offsets = [0, 32], sizes = [4, 32], strides = [1, 1]} : vector<4x128xf32> to vector<4x32xf32>
    %401 = arith.mulf %400, %354 : vector<4x32xf32>
    %402 = vector.extract_strided_slice %398 {offsets = [0, 0], sizes = [4, 32], strides = [1, 1]} : vector<4x128xf32> to vector<4x32xf32>
    %403 = vector.extract_strided_slice %399 {offsets = [0, 0], sizes = [4, 32], strides = [1, 1]} : vector<4x128xf32> to vector<4x32xf32>
    %404 = arith.mulf %402, %403 : vector<4x32xf32>
    %405 = arith.addf %401, %404 : vector<4x32xf32>
    %406 = vector.extract_strided_slice %399 {offsets = [0, 32], sizes = [4, 32], strides = [1, 1]} : vector<4x128xf32> to vector<4x32xf32>
    %407 = math.tanh %405 : vector<4x32xf32>
    %408 = arith.mulf %406, %407 : vector<4x32xf32>
    %409 = arith.addf %408, %390 : vector<4x32xf32>
    %410 = tpu.concatenate %409, %376 in 1 : vector<4x32xf32>, vector<4x32xf32> -> vector<4x64xf32>
    %cst_90 = arith.constant dense<0.000000e+00> : vector<4x128xf32>
    %411 = tpu.matmul %410, %3, %cst_90 {dimension_numbers = #tpu.dot_dimension_numbers<[1], [0], [0], [1], [0, 0, 1, 1], [], []>} : vector<4x64xf32>, vector<64x128xf32>, vector<4x128xf32> -> vector<4x128xf32>
    %412 = vector.broadcast %7 : vector<1x128xf32> to vector<4x128xf32>
    %413 = arith.addf %411, %412 : vector<4x128xf32>
    %414 = arith.mulf %413, %16 : vector<4x128xf32>
    %415 = math.tanh %414 : vector<4x128xf32>
    %416 = arith.mulf %415, %16 : vector<4x128xf32>
    %417 = arith.addf %416, %19 : vector<4x128xf32>
    %c64_i32_91 = arith.constant 64 : i32
    %418 = tpu.dynamic_rotate %417 by %c64_i32_91 dim 1 : vector<4x128xf32>, i32 -> vector<4x128xf32>
    %419 = vector.extract_strided_slice %417 {offsets = [0, 32], sizes = [4, 32], strides = [1, 1]} : vector<4x128xf32> to vector<4x32xf32>
    %420 = arith.mulf %419, %373 : vector<4x32xf32>
    %421 = vector.extract_strided_slice %417 {offsets = [0, 0], sizes = [4, 32], strides = [1, 1]} : vector<4x128xf32> to vector<4x32xf32>
    %422 = vector.extract_strided_slice %418 {offsets = [0, 0], sizes = [4, 32], strides = [1, 1]} : vector<4x128xf32> to vector<4x32xf32>
    %423 = arith.mulf %421, %422 : vector<4x32xf32>
    %424 = arith.addf %420, %423 : vector<4x32xf32>
    %425 = vector.extract_strided_slice %418 {offsets = [0, 32], sizes = [4, 32], strides = [1, 1]} : vector<4x128xf32> to vector<4x32xf32>
    %426 = math.tanh %424 : vector<4x32xf32>
    %427 = arith.mulf %425, %426 : vector<4x32xf32>
    %428 = arith.addf %427, %409 : vector<4x32xf32>
    %429 = vector.extract_strided_slice %428 {offsets = [0, 0], sizes = [2, 32], strides = [1, 1]} : vector<4x32xf32> to vector<2x32xf32>
    %c7_92 = arith.constant 7 : index
    %c0_93 = arith.constant 0 : index
    %c0_94 = arith.constant 0 : index
    %430 = vector.load %arg12[%c7_92, %c0_93, %c0_94] : memref<8x8x64xf32, #tpu.memory_space<vmem>>, vector<1x2x32xf32>
    %431 = vector.shape_cast %430 : vector<1x2x32xf32> to vector<2x32xf32>
    %432 = vector.shape_cast %429 : vector<2x32xf32> to vector<1x2x32xf32>
    tpu.vector_store %arg12[%c7_92, %c0_93, %c0_94], %432 {strides = array<i32>} : memref<8x8x64xf32, #tpu.memory_space<vmem>>, vector<1x2x32xf32>,
    %433 = vector.extract_strided_slice %428 {offsets = [2, 0], sizes = [2, 32], strides = [1, 1]} : vector<4x32xf32> to vector<2x32xf32>
    %c0_95 = arith.constant 0 : index
    %c0_96 = arith.constant 0 : index
    %c32_97 = arith.constant 32 : index
    %434 = vector.load %arg12[%c0_95, %c0_96, %c32_97] : memref<8x8x64xf32, #tpu.memory_space<vmem>>, vector<1x2x32xf32>
    %435 = vector.shape_cast %434 : vector<1x2x32xf32> to vector<2x32xf32>
    %436 = vector.shape_cast %433 : vector<2x32xf32> to vector<1x2x32xf32>
    tpu.vector_store %arg12[%c0_95, %c0_96, %c32_97], %436 {strides = array<i32>} : memref<8x8x64xf32, #tpu.memory_space<vmem>>, vector<1x2x32xf32>,
    %c0_98 = arith.constant 0 : index
    %c0_99 = arith.constant 0 : index
    %c0_100 = arith.constant 0 : index
    %437 = vector.load %arg12[%c0_98, %c0_99, %c0_100] : memref<8x8x64xf32, #tpu.memory_space<vmem>>, vector<8x8x64xf32>
    %438 = vector.shape_cast %437 : vector<8x8x64xf32> to vector<64x64xf32>
    %c0_101 = arith.constant 0 : index
    %c0_102 = arith.constant 0 : index
    %439 = vector.load %arg3[%c0_101, %c0_102] : memref<64x32xf32, #tpu.memory_space<vmem>>, vector<64x32xf32>
    %cst_103 = arith.constant dense<0.000000e+00> : vector<64x32xf32>
    %440 = tpu.matmul %438, %439, %cst_103 {dimension_numbers = #tpu.dot_dimension_numbers<[1], [0], [0], [1], [0, 0, 1, 1], [], []>} : vector<64x64xf32>, vector<64x32xf32>, vector<64x32xf32> -> vector<64x32xf32>
    %c0_104 = arith.constant 0 : index
    %c0_105 = arith.constant 0 : index
    %441 = vector.load %arg4[%c0_104, %c0_105] : memref<1x32xf32, #tpu.memory_space<vmem>>, vector<1x32xf32>
    %442 = vector.broadcast %441 : vector<1x32xf32> to vector<64x32xf32>
    %443 = arith.addf %440, %442 : vector<64x32xf32>
    %c0_106 = arith.constant 0 : index
    %c0_107 = arith.constant 0 : index
    %444 = vector.load %arg9[%c0_106, %c0_107] : memref<64x32xf32, #tpu.memory_space<vmem>>, vector<64x32xf32>
    tpu.vector_store %arg9[%c0_106, %c0_107], %443 {strides = array<i32>} : memref<64x32xf32, #tpu.memory_space<vmem>>, vector<64x32xf32>,
    %445 = vector.extract_strided_slice %408 {offsets = [0, 0], sizes = [2, 32], strides = [1, 1]} : vector<4x32xf32> to vector<2x32xf32>
    %446 = vector.extract_strided_slice %427 {offsets = [0, 0], sizes = [2, 32], strides = [1, 1]} : vector<4x32xf32> to vector<2x32xf32>
    %447 = tpu.concatenate %445, %446 in 0 : vector<2x32xf32>, vector<2x32xf32> -> vector<4x32xf32>
    %448 = vector.extract_strided_slice %408 {offsets = [2, 0], sizes = [2, 32], strides = [1, 1]} : vector<4x32xf32> to vector<2x32xf32>
    %449 = vector.extract_strided_slice %427 {offsets = [2, 0], sizes = [2, 32], strides = [1, 1]} : vector<4x32xf32> to vector<2x32xf32>
    %450 = tpu.concatenate %448, %449 in 0 : vector<2x32xf32>, vector<2x32xf32> -> vector<4x32xf32>
    %451 = vector.extract_strided_slice %405 {offsets = [0, 0], sizes = [2, 32], strides = [1, 1]} : vector<4x32xf32> to vector<2x32xf32>
    %452 = vector.extract_strided_slice %424 {offsets = [0, 0], sizes = [2, 32], strides = [1, 1]} : vector<4x32xf32> to vector<2x32xf32>
    %453 = tpu.concatenate %451, %452 in 0 : vector<2x32xf32>, vector<2x32xf32> -> vector<4x32xf32>
    %454 = vector.extract_strided_slice %405 {offsets = [2, 0], sizes = [2, 32], strides = [1, 1]} : vector<4x32xf32> to vector<2x32xf32>
    %455 = vector.extract_strided_slice %424 {offsets = [2, 0], sizes = [2, 32], strides = [1, 1]} : vector<4x32xf32> to vector<2x32xf32>
    %456 = tpu.concatenate %454, %455 in 0 : vector<2x32xf32>, vector<2x32xf32> -> vector<4x32xf32>
    %c0_108 = arith.constant 0 : index
    %c0_109 = arith.constant 0 : index
    %457 = vector.load %arg5[%c0_108, %c0_109] : memref<64x32xf32, #tpu.memory_space<vmem>>, vector<32x32xf32>
    %cst_110 = arith.constant dense<0.000000e+00> : vector<4x32xf32>
    %458 = tpu.matmul %447, %457, %cst_110 {dimension_numbers = #tpu.dot_dimension_numbers<[1], [0], [0], [1], [0, 0, 1, 1], [], []>} : vector<4x32xf32>, vector<32x32xf32>, vector<4x32xf32> -> vector<4x32xf32>
    %c32_111 = arith.constant 32 : index
    %c0_112 = arith.constant 0 : index
    %459 = vector.load %arg5[%c32_111, %c0_112] : memref<64x32xf32, #tpu.memory_space<vmem>>, vector<32x32xf32>
    %cst_113 = arith.constant dense<0.000000e+00> : vector<4x32xf32>
    %460 = tpu.matmul %450, %459, %cst_113 {dimension_numbers = #tpu.dot_dimension_numbers<[1], [0], [0], [1], [0, 0, 1, 1], [], []>} : vector<4x32xf32>, vector<32x32xf32>, vector<4x32xf32> -> vector<4x32xf32>
    %461 = arith.addf %458, %460 : vector<4x32xf32>
    %c0_114 = arith.constant 0 : index
    %c0_115 = arith.constant 0 : index
    %462 = vector.load %arg6[%c0_114, %c0_115] : memref<1x32xf32, #tpu.memory_space<vmem>>, vector<1x32xf32>
    %463 = vector.broadcast %462 : vector<1x32xf32> to vector<4x32xf32>
    %464 = arith.addf %461, %463 : vector<4x32xf32>
    %c0_116 = arith.constant 0 : index
    %c0_117 = arith.constant 0 : index
    %465 = vector.load %arg10[%c0_116, %c0_117] : memref<4x32xf32, #tpu.memory_space<vmem>>, vector<4x32xf32>
    tpu.vector_store %arg10[%c0_116, %c0_117], %464 {strides = array<i32>} : memref<4x32xf32, #tpu.memory_space<vmem>>, vector<4x32xf32>,
    %c0_118 = arith.constant 0 : index
    %c0_119 = arith.constant 0 : index
    %466 = vector.load %arg7[%c0_118, %c0_119] : memref<64x32xf32, #tpu.memory_space<vmem>>, vector<32x32xf32>
    %cst_120 = arith.constant dense<0.000000e+00> : vector<4x32xf32>
    %467 = tpu.matmul %453, %466, %cst_120 {dimension_numbers = #tpu.dot_dimension_numbers<[1], [0], [0], [1], [0, 0, 1, 1], [], []>} : vector<4x32xf32>, vector<32x32xf32>, vector<4x32xf32> -> vector<4x32xf32>
    %c32_121 = arith.constant 32 : index
    %c0_122 = arith.constant 0 : index
    %468 = vector.load %arg7[%c32_121, %c0_122] : memref<64x32xf32, #tpu.memory_space<vmem>>, vector<32x32xf32>
    %cst_123 = arith.constant dense<0.000000e+00> : vector<4x32xf32>
    %469 = tpu.matmul %456, %468, %cst_123 {dimension_numbers = #tpu.dot_dimension_numbers<[1], [0], [0], [1], [0, 0, 1, 1], [], []>} : vector<4x32xf32>, vector<32x32xf32>, vector<4x32xf32> -> vector<4x32xf32>
    %470 = arith.addf %467, %469 : vector<4x32xf32>
    %c0_124 = arith.constant 0 : index
    %c0_125 = arith.constant 0 : index
    %471 = vector.load %arg8[%c0_124, %c0_125] : memref<1x32xf32, #tpu.memory_space<vmem>>, vector<1x32xf32>
    %472 = vector.broadcast %471 : vector<1x32xf32> to vector<4x32xf32>
    %473 = arith.addf %470, %472 : vector<4x32xf32>
    %c0_126 = arith.constant 0 : index
    %c0_127 = arith.constant 0 : index
    %474 = vector.load %arg11[%c0_126, %c0_127] : memref<4x32xf32, #tpu.memory_space<vmem>>, vector<4x32xf32>
    tpu.vector_store %arg11[%c0_126, %c0_127], %473 {strides = array<i32>} : memref<4x32xf32, #tpu.memory_space<vmem>>, vector<4x32xf32>,
    return
  }
}

</mosaic_0001>

<llo_original>
// kernel: encoder_forward.1
$region0: #{encoder_forward.1}
  #allocation0 [shape = 'u32[]', space=smem, size = 0x4, offset = 0x4, fixed_abs, tag = 'smem constant byte address 0x4 - core index']
  #allocation1 [shape = 'u32[144,128]{1,0:T(1,128)}', space=vmem, size = 0x12000, scoped, tag = 'internal scratch']
  #allocation2 [shape = 'f32[8,8,64]{2,1,0:T(8,128)}', space=vmem, size = 0x8000, scoped, tag = 'scratch operand']
  %s0 = inlined_call_operand.vmem [shape: f32[8,2,32], index: 0, kind: input, shape index: {}]
  %s1 = inlined_call_operand.vmem [shape: f32[2,64,128], index: 1, kind: input, shape index: {}]
  %s2 = inlined_call_operand.vmem [shape: f32[2,1,128], index: 2, kind: input, shape index: {}]
  %s3 = inlined_call_operand.vmem [shape: f32[64,32], index: 3, kind: input, shape index: {}]
  %s4 = inlined_call_operand.vmem [shape: f32[1,32], index: 4, kind: input, shape index: {}]
  %s5 = inlined_call_operand.vmem [shape: f32[64,32], index: 5, kind: input, shape index: {}]
  %s6 = inlined_call_operand.vmem [shape: f32[1,32], index: 6, kind: input, shape index: {}]
  %s7 = inlined_call_operand.vmem [shape: f32[64,32], index: 7, kind: input, shape index: {}]
  %s8 = inlined_call_operand.vmem [shape: f32[1,32], index: 8, kind: input, shape index: {}]
  %s9 = inlined_call_operand.vmem [shape: f32[64,32], index: 9, kind: output, shape index: {0}]
  %s10 = inlined_call_operand.hbm [shape: f32[4,32], index: 10, kind: output, shape index: {1}]
  %s11 = inlined_call_operand.hbm [shape: f32[4,32], index: 11, kind: output, shape index: {2}]
  %12 = xla_tuple %s9, %s10, %s11
  %s13 = sld [smem:[#allocation0]]
  $region62: #{encoder_forward.1} parent=0
    _
  %s15 = ssub.s32 1, %s13
  %s16 = scalar_select 0, %s15, %s13
  $region1: #{encoder_forward.1} parent=0
    #allocation3 [shape = 'u8[2048]{0}', space=vmem, size = 0x800, scoped, tag = 'output window, operand 1, single buffered']
    #allocation4 [shape = 's32[1]{0}', space=sflag, size = 0x4, scoped, tag = 'scoped memory for encoder_forward.1']
    #allocation5 [shape = 'u8[2048]{0}', space=vmem, size = 0x800, scoped, tag = 'output window, operand 2, single buffered']
    #allocation6 [shape = 's32[1]{0}', space=sflag, size = 0x4, scoped, tag = 'scoped memory for encoder_forward.1']
    %17 = vsyncpa [#allocation4], 0
    %18 = vsyncpa [#allocation6], 0
    // Predicated region
    $region2: #{encoder_forward.1} parent=1 // pred_check
      _
    $region3: #{encoder_forward.1} parent=1 // pred_check_branch
      %20 = sbr.rel (0) target = $region5
    $region4: #{encoder_forward.1} parent=1 // pred_region
      _
    $region5: #{encoder_forward.1} parent=1 // pred_fallthru
      _
    // Predicated region
    $region6: #{encoder_forward.1} parent=1 // pred_check
      _
    $region7: #{encoder_forward.1} parent=1 // pred_check_branch
      %22 = sbr.rel (0) target = $region9
    $region8: #{encoder_forward.1} parent=1 // pred_region
      _
    $region9: #{encoder_forward.1} parent=1 // pred_fallthru
      _
    // Predicated region
    $region10: #{encoder_forward.1} parent=1 // pred_check
      _
    $region11: #{encoder_forward.1} parent=1 // pred_check_branch
      %24 = sbr.rel (0) target = $region13
    $region12: #{encoder_forward.1} parent=1 // pred_region
      _
    $region13: #{encoder_forward.1} parent=1 // pred_fallthru
      _
    // Predicated region
    $region14: #{encoder_forward.1} parent=1 // pred_check
      _
    $region15: #{encoder_forward.1} parent=1 // pred_check_branch
      %26 = sbr.rel (0) target = $region17
    $region16: #{encoder_forward.1} parent=1 // pred_region
      _
    $region17: #{encoder_forward.1} parent=1 // pred_fallthru
      _
    // Predicated region
    $region18: #{encoder_forward.1} parent=1 // pred_check
      _
    $region19: #{encoder_forward.1} parent=1 // pred_check_branch
      %28 = sbr.rel (0) target = $region21
    $region20: #{encoder_forward.1} parent=1 // pred_region
      _
    $region21: #{encoder_forward.1} parent=1 // pred_fallthru
      _
    // Predicated region
    $region22: #{encoder_forward.1} parent=1 // pred_check
      _
    $region23: #{encoder_forward.1} parent=1 // pred_check_branch
      %30 = sbr.rel (0) target = $region25
    $region24: #{encoder_forward.1} parent=1 // pred_region
      _
    $region25: #{encoder_forward.1} parent=1 // pred_fallthru
      _
    // Predicated region
    $region26: #{encoder_forward.1} parent=1 // pred_check
      _
    $region27: #{encoder_forward.1} parent=1 // pred_check_branch
      %32 = sbr.rel (0) target = $region29
    $region28: #{encoder_forward.1} parent=1 // pred_region
      _
    $region29: #{encoder_forward.1} parent=1 // pred_fallthru
      _
    // Predicated region
    $region30: #{encoder_forward.1} parent=1 // pred_check
      _
    $region31: #{encoder_forward.1} parent=1 // pred_check_branch
      %34 = sbr.rel (0) target = $region33
    $region32: #{encoder_forward.1} parent=1 // pred_region
      _
    $region33: #{encoder_forward.1} parent=1 // pred_fallthru
      _
    // Predicated region
    $region34: #{encoder_forward.1} parent=1 // pred_check
      _
    $region35: #{encoder_forward.1} parent=1 // pred_check_branch
      %36 = sbr.rel (0) target = $region37
    $region36: #{encoder_forward.1} parent=1 // pred_region
      _
    $region37: #{encoder_forward.1} parent=1 // pred_fallthru
      _
    %v37 = vld [vmem:[%s1] sm:$0xff]
    %v38 = vld [vmem:[%s1 + $0x8] sm:$0xff]
    %v39 = vld [vmem:[%s1 + $0x10] sm:$0xff]
    %v40 = vld [vmem:[%s1 + $0x18] sm:$0xff]
    %v41 = vld [vmem:[%s1 + $0x20] sm:$0xff]
    %v42 = vld [vmem:[%s1 + $0x28] sm:$0xff]
    %v43 = vld [vmem:[%s1 + $0x30] sm:$0xff]
    %v44 = vld [vmem:[%s1 + $0x38] sm:$0xff]
    %s45 = scalar_lea.vmem %s1, 64
    %v46 = vld [vmem:[%s45] sm:$0xff]
    %v47 = vld [vmem:[%s45 + $0x8] sm:$0xff]
    %v48 = vld [vmem:[%s45 + $0x10] sm:$0xff]
    %v49 = vld [vmem:[%s45 + $0x18] sm:$0xff]
    %v50 = vld [vmem:[%s45 + $0x20] sm:$0xff]
    %v51 = vld [vmem:[%s45 + $0x28] sm:$0xff]
    %v52 = vld [vmem:[%s45 + $0x30] sm:$0xff]
    %v53 = vld [vmem:[%s45 + $0x38] sm:$0xff]
    %v54 = vld [vmem:[%s2] sm:$0x1]
    %s55 = scalar_lea.vmem %s2, 1
    %v56 = vld [vmem:[%s55] sm:$0x1]
    %v57 = vlaneseq
    %v58 = vand.u32 %v57, 127
    %vm59 = vcmp.ge.s32.totalorder %v58, 64
    %vm60 = vcmp.lt.s32.totalorder %v58, 96
    %vm61 = vmand %vm59, %vm60
    %v62 = vsel %vm61, 1.0, 0.5
    %v63 = vsel %vm61, 0.0, 0.5
    %v64 = vld [vmem:[%s0] sm:$0x3]
    %v65 = vld [vmem:[%s0 + $0x2] sm:$0x3]
    %v66 = vld [vmem:[%s0 + $0x4] sm:$0x3]
    %v67 = vld [vmem:[%s0 + $0x6] sm:$0x3]
    %v68 = vld [vmem:[%s0 + $0x8] sm:$0x3]
    %v69 = vld [vmem:[%s0 + $0xa] sm:$0x3]
    %v70 = vld [vmem:[%s0 + $0xc] sm:$0x3]
    %v71 = vld [vmem:[%s0 + $0xe] sm:$0x3]
    %v72 = vmax.f32 %v64, 0.0
    %v73 = vmax.f32 %v65, 0.0
    %v74 = vmax.f32 %v66, 0.0
    %v75 = vmax.f32 %v67, 0.0
    %v76 = vmax.f32 %v68, 0.0
    %v77 = vmax.f32 %v69, 0.0
    %v78 = vmax.f32 %v70, 0.0
    %v79 = vmax.f32 %v71, 0.0
    %vm80 = vcmask 523264
    %81 = vst.msk [vmem:[#allocation2] sm:$0xff] %vm80, 0.0
    %82 = vst.msk [vmem:[#allocation2 + $0x8] sm:$0xff] %vm80, 0.0
    %83 = vst.msk [vmem:[#allocation2 + $0x10] sm:$0xff] %vm80, 0.0
    %84 = vst.msk [vmem:[#allocation2 + $0x18] sm:$0xff] %vm80, 0.0
    %85 = vst.msk [vmem:[#allocation2 + $0x20] sm:$0xff] %vm80, 0.0
    %86 = vst.msk [vmem:[#allocation2 + $0x28] sm:$0xff] %vm80, 0.0
    %87 = vst.msk [vmem:[#allocation2 + $0x30] sm:$0xff] %vm80, 0.0
    %88 = vst.msk [vmem:[#allocation2 + $0x38] sm:$0xff] %vm80, 0.0
    %v90 = vrot.slane %v79, 6
    %vm92 = vcmask 1041408
    %v93 = vsel %vm92, %v72, %v90
    %vm94 = vcmask 261120
    %v95 = vsel %vm94, %v93, 0.0
    %v97 = vlaneseq
    %v98 = vshrl.u32 %v97, 7
    %v99 = vsub.s32 0, %v98
    %v100 = vrot.slane %v54, %v99
    %v103 = vsel %vm80, %v95, 0
    %105 = vmatprep.subr.mxu0 0.0
    %106 = vmatpush1.msra.mxu0 0.0
    %107 = vmatprep.subr.mxu0 0.0
    %108 = vmatpush1.msra.mxu0 0.0
    %109 = vmatprep.subr.mxu0 0.0
    %110 = vmatpush1.msra.mxu0 0.0
    %111 = vmatprep.subr.mxu0 0.0
    %112 = vmatpush1.msra.mxu0 0.0
    %113 = vmatprep.subr.mxu0 0.0
    %114 = vmatpush1.msra.mxu0 0.0
    %115 = vmatprep.subr.mxu0 0.0
    %116 = vmatpush1.msra.mxu0 0.0
    %117 = vmatprep.subr.mxu0 0.0
    %118 = vmatpush1.msra.mxu0 0.0
    %119 = vmatprep.subr.mxu0 0.0
    %120 = vmatpush1.msra.mxu0 0.0
    %121 = vmatprep.subr.mxu0 0.0
    %122 = vmatpush1.msra.mxu0 %v44
    %123 = vmatprep.subr.mxu0 0.0
    %124 = vmatpush1.msra.mxu0 %v43
    %125 = vmatprep.subr.mxu0 0.0
    %126 = vmatpush1.msra.mxu0 %v42
    %127 = vmatprep.subr.mxu0 0.0
    %128 = vmatpush1.msra.mxu0 %v41
    %129 = vmatprep.subr.mxu0 0.0
    %130 = vmatpush1.msra.mxu0 %v40
    %131 = vmatprep.subr.mxu0 0.0
    %132 = vmatpush1.msra.mxu0 %v39
    %133 = vmatprep.subr.mxu0 0.0
    %134 = vmatpush1.msra.mxu0 %v38
    %135 = vmatprep.subr.mxu0 0.0
    %136 = vmatpush1.msra.mxu0 %v37
    %137 = vmatprep.subr.mxu0 0.0
    %138 = vmatpush2.msra.mxu0 0.0
    %139 = vmatprep.subr.mxu0 0.0
    %140 = vmatpush2.msra.mxu0 0.0
    %141 = vmatprep.subr.mxu0 0.0
    %142 = vmatpush2.msra.mxu0 0.0
    %143 = vmatprep.subr.mxu0 0.0
    %144 = vmatpush2.msra.mxu0 0.0
    %145 = vmatprep.subr.mxu0 0.0
    %146 = vmatpush2.msra.mxu0 0.0
    %147 = vmatprep.subr.mxu0 0.0
    %148 = vmatpush2.msra.mxu0 0.0
    %149 = vmatprep.subr.mxu0 0.0
    %150 = vmatpush2.msra.mxu0 0.0
    %151 = vmatprep.subr.mxu0 0.0
    %152 = vmatpush2.msra.mxu0 0.0
    %153 = vmatprep.subr.mxu0 0.0
    %154 = vmatpush2.msra.mxu0 0.0
    %155 = vmatprep.subr.mxu0 0.0
    %156 = vmatpush2.msra.mxu0 0.0
    %157 = vmatprep.subr.mxu0 0.0
    %158 = vmatpush2.msra.mxu0 0.0
    %159 = vmatprep.subr.mxu0 0.0
    %160 = vmatpush2.msra.mxu0 0.0
    %161 = vmatprep.subr.mxu0 0.0
    %162 = vmatpush2.msra.mxu0 0.0
    %163 = vmatprep.subr.mxu0 0.0
    %164 = vmatpush2.msra.mxu0 0.0
    %165 = vmatprep.subr.mxu0 0.0
    %166 = vmatpush2.msra.mxu0 0.0
    %167 = vmatprep.subr.mxu0 0.0
    %168 = vmatpush2.msra.mxu0 0.0
    %169 = vmatprep.mubr.f32.mxu0 0.0
    %170 = vmatmul.mubr.f32.gmra.mxu0 %v103
    %v171 = vpop.f32.mrf.mxu0
    %v172 = vadd.f32 %v100, %v171
    %v173 = vpop.f32.mrf.mxu0
    %174 = vdwg.mxu0
    %v175 = vmul.f32 %v172, %v62
    %v176 = vtanh.pop %v175
    %v177 = vmul.f32 %v176, %v62
    %v178 = vadd.f32 %v177, %v63
    %179 = vrot.lane.b32.xlu0 %v178, 64
    %v180 = vpop.permute.xlu0 %179
    %v181 = vmul.f32 %v178, 0.0
    %v182 = vmul.f32 %v178, %v180
    %184 = vrot.lane.b32.xlu0 %v182, 32
    %v185 = vpop.permute.xlu0 %184
    %v187 = vadd.f32 %v181, %v185
    %v188 = vtanh.pop %v187
    %v189 = vmul.f32 %v180, %v188
    %191 = vrot.lane.b32.xlu0 %v93, 32
    %v192 = vpop.permute.xlu0 %191
    %v194 = vadd.f32 %v189, %v192
    %196 = vrot.lane.b32.xlu0 %v194, 96
    %v197 = vpop.permute.xlu0 %196
    %v199 = vsel %vm94, %v197, 0.0
    %v201 = vlaneseq
    %v202 = vshrl.u32 %v201, 7
    %v203 = vsub.s32 0, %v202
    %v204 = vrot.slane %v56, %v203
    %v207 = vsel %vm80, %v199, 0
    %209 = vmatprep.subr.mxu0 0.0
    %210 = vmatpush1.msra.mxu0 0.0
    %211 = vmatprep.subr.mxu0 0.0
    %212 = vmatpush1.msra.mxu0 0.0
    %213 = vmatprep.subr.mxu0 0.0
    %214 = vmatpush1.msra.mxu0 0.0
    %215 = vmatprep.subr.mxu0 0.0
    %216 = vmatpush1.msra.mxu0 0.0
    %217 = vmatprep.subr.mxu0 0.0
    %218 = vmatpush1.msra.mxu0 0.0
    %219 = vmatprep.subr.mxu0 0.0
    %220 = vmatpush1.msra.mxu0 0.0
    %221 = vmatprep.subr.mxu0 0.0
    %222 = vmatpush1.msra.mxu0 0.0
    %223 = vmatprep.subr.mxu0 0.0
    %224 = vmatpush1.msra.mxu0 0.0
    %225 = vmatprep.subr.mxu0 0.0
    %226 = vmatpush1.msra.mxu0 %v53
    %227 = vmatprep.subr.mxu0 0.0
    %228 = vmatpush1.msra.mxu0 %v52
    %229 = vmatprep.subr.mxu0 0.0
    %230 = vmatpush1.msra.mxu0 %v51
    %231 = vmatprep.subr.mxu0 0.0
    %232 = vmatpush1.msra.mxu0 %v50
    %233 = vmatprep.subr.mxu0 0.0
    %234 = vmatpush1.msra.mxu0 %v49
    %235 = vmatprep.subr.mxu0 0.0
    %236 = vmatpush1.msra.mxu0 %v48
    %237 = vmatprep.subr.mxu0 0.0
    %238 = vmatpush1.msra.mxu0 %v47
    %239 = vmatprep.subr.mxu0 0.0
    %240 = vmatpush1.msra.mxu0 %v46
    %241 = vmatprep.subr.mxu0 0.0
    %242 = vmatpush2.msra.mxu0 0.0
    %243 = vmatprep.subr.mxu0 0.0
    %244 = vmatpush2.msra.mxu0 0.0
    %245 = vmatprep.subr.mxu0 0.0
    %246 = vmatpush2.msra.mxu0 0.0
    %247 = vmatprep.subr.mxu0 0.0
    %248 = vmatpush2.msra.mxu0 0.0
    %249 = vmatprep.subr.mxu0 0.0
    %250 = vmatpush2.msra.mxu0 0.0
    %251 = vmatprep.subr.mxu0 0.0
    %252 = vmatpush2.msra.mxu0 0.0
    %253 = vmatprep.subr.mxu0 0.0
    %254 = vmatpush2.msra.mxu0 0.0
    %255 = vmatprep.subr.mxu0 0.0
    %256 = vmatpush2.msra.mxu0 0.0
    %257 = vmatprep.subr.mxu0 0.0
    %258 = vmatpush2.msra.mxu0 0.0
    %259 = vmatprep.subr.mxu0 0.0
    %260 = vmatpush2.msra.mxu0 0.0
    %261 = vmatprep.subr.mxu0 0.0
    %262 = vmatpush2.msra.mxu0 0.0
    %263 = vmatprep.subr.mxu0 0.0
    %264 = vmatpush2.msra.mxu0 0.0
    %265 = vmatprep.subr.mxu0 0.0
    %266 = vmatpush2.msra.mxu0 0.0
    %267 = vmatprep.subr.mxu0 0.0
    %268 = vmatpush2.msra.mxu0 0.0
    %269 = vmatprep.subr.mxu0 0.0
    %270 = vmatpush2.msra.mxu0 0.0
    %271 = vmatprep.subr.mxu0 0.0
    %272 = vmatpush2.msra.mxu0 0.0
    %273 = vmatprep.mubr.f32.mxu0 0.0
    %274 = vmatmul.mubr.f32.gmra.mxu0 %v207
    %v275 = vpop.f32.mrf.mxu0
    %v276 = vadd.f32 %v204, %v275
    %v277 = vpop.f32.mrf.mxu0
    %278 = vdwg.mxu0
    %v279 = vmul.f32 %v276, %v62
    %v280 = vtanh.pop %v279
    %v281 = vmul.f32 %v280, %v62
    %v282 = vadd.f32 %v281, %v63
    %283 = vrot.lane.b32.xlu0 %v282, 64
    %v284 = vpop.permute.xlu0 %283
    %v285 = vmul.f32 %v282, 0.0
    %v286 = vmul.f32 %v282, %v284
    %288 = vrot.lane.b32.xlu0 %v286, 32
    %v289 = vpop.permute.xlu0 %288
    %v291 = vadd.f32 %v285, %v289
    %v292 = vtanh.pop %v291
    %v293 = vmul.f32 %v284, %v292
    %v294 = vadd.f32 %v293, %v194
    %296 = vrot.lane.b32.xlu0 %v294, 96
    %v297 = vpop.permute.xlu0 %296
    %vm299 = vcmask 254976
    %300 = vst.msk [vmem:[#allocation2] sm:$0x3] %vm299, %v297
    %s301 = scalar_lea.vmem [#allocation2], 56
    %vm302 = vcmask 519426
    %303 = vst.msk [vmem:[%s301 - $0x2] sm:$0xc] %vm302, %v294
    %v305 = vrot.slane %v78, 6
    %v307 = vsel %vm92, %v73, %v305
    %v308 = vsel %vm94, %v307, %v189
    %v310 = vsel %vm80, %v308, 0
    %312 = vmatprep.subr.mxu0 0.0
    %313 = vmatpush1.msra.mxu0 0.0
    %314 = vmatprep.subr.mxu0 0.0
    %315 = vmatpush1.msra.mxu0 0.0
    %316 = vmatprep.subr.mxu0 0.0
    %317 = vmatpush1.msra.mxu0 0.0
    %318 = vmatprep.subr.mxu0 0.0
    %319 = vmatpush1.msra.mxu0 0.0
    %320 = vmatprep.subr.mxu0 0.0
    %321 = vmatpush1.msra.mxu0 0.0
    %322 = vmatprep.subr.mxu0 0.0
    %323 = vmatpush1.msra.mxu0 0.0
    %324 = vmatprep.subr.mxu0 0.0
    %325 = vmatpush1.msra.mxu0 0.0
    %326 = vmatprep.subr.mxu0 0.0
    %327 = vmatpush1.msra.mxu0 0.0
    %328 = vmatprep.subr.mxu0 0.0
    %329 = vmatpush1.msra.mxu0 %v44
    %330 = vmatprep.subr.mxu0 0.0
    %331 = vmatpush1.msra.mxu0 %v43
    %332 = vmatprep.subr.mxu0 0.0
    %333 = vmatpush1.msra.mxu0 %v42
    %334 = vmatprep.subr.mxu0 0.0
    %335 = vmatpush1.msra.mxu0 %v41
    %336 = vmatprep.subr.mxu0 0.0
    %337 = vmatpush1.msra.mxu0 %v40
    %338 = vmatprep.subr.mxu0 0.0
    %339 = vmatpush1.msra.mxu0 %v39
    %340 = vmatprep.subr.mxu0 0.0
    %341 = vmatpush1.msra.mxu0 %v38
    %342 = vmatprep.subr.mxu0 0.0
    %343 = vmatpush1.msra.mxu0 %v37
    %344 = vmatprep.subr.mxu0 0.0
    %345 = vmatpush2.msra.mxu0 0.0
    %346 = vmatprep.subr.mxu0 0.0
    %347 = vmatpush2.msra.mxu0 0.0
    %348 = vmatprep.subr.mxu0 0.0
    %349 = vmatpush2.msra.mxu0 0.0
    %350 = vmatprep.subr.mxu0 0.0
    %351 = vmatpush2.msra.mxu0 0.0
    %352 = vmatprep.subr.mxu0 0.0
    %353 = vmatpush2.msra.mxu0 0.0
    %354 = vmatprep.subr.mxu0 0.0
    %355 = vmatpush2.msra.mxu0 0.0
    %356 = vmatprep.subr.mxu0 0.0
    %357 = vmatpush2.msra.mxu0 0.0
    %358 = vmatprep.subr.mxu0 0.0
    %359 = vmatpush2.msra.mxu0 0.0
    %360 = vmatprep.subr.mxu0 0.0
    %361 = vmatpush2.msra.mxu0 0.0
    %362 = vmatprep.subr.mxu0 0.0
    %363 = vmatpush2.msra.mxu0 0.0
    %364 = vmatprep.subr.mxu0 0.0
    %365 = vmatpush2.msra.mxu0 0.0
    %366 = vmatprep.subr.mxu0 0.0
    %367 = vmatpush2.msra.mxu0 0.0
    %368 = vmatprep.subr.mxu0 0.0
    %369 = vmatpush2.msra.mxu0 0.0
    %370 = vmatprep.subr.mxu0 0.0
    %371 = vmatpush2.msra.mxu0 0.0
    %372 = vmatprep.subr.mxu0 0.0
    %373 = vmatpush2.msra.mxu0 0.0
    %374 = vmatprep.subr.mxu0 0.0
    %375 = vmatpush2.msra.mxu0 0.0
    %376 = vmatprep.mubr.f32.mxu0 0.0
    %377 = vmatmul.mubr.f32.gmra.mxu0 %v310
    %v378 = vpop.f32.mrf.mxu0
    %v379 = vadd.f32 %v100, %v378
    %v380 = vpop.f32.mrf.mxu0
    %381 = vdwg.mxu0
    %v382 = vmul.f32 %v379, %v62
    %v383 = vtanh.pop %v382
    %v384 = vmul.f32 %v383, %v62
    %v385 = vadd.f32 %v384, %v63
    %386 = vrot.lane.b32.xlu0 %v385, 64
    %v387 = vpop.permute.xlu0 %386
    %v388 = vmul.f32 %v385, %v187
    %v389 = vmul.f32 %v385, %v387
    %391 = vrot.lane.b32.xlu0 %v389, 32
    %v392 = vpop.permute.xlu0 %391
    %v394 = vadd.f32 %v388, %v392
    %v395 = vtanh.pop %v394
    %v396 = vmul.f32 %v387, %v395
    %398 = vrot.lane.b32.xlu0 %v307, 32
    %v399 = vpop.permute.xlu0 %398
    %v401 = vadd.f32 %v396, %v399
    %403 = vrot.lane.b32.xlu0 %v401, 96
    %v404 = vpop.permute.xlu0 %403
    %v406 = vsel %vm94, %v404, %v293
    %v408 = vsel %vm80, %v406, 0
    %410 = vmatprep.subr.mxu0 0.0
    %411 = vmatpush1.msra.mxu0 0.0
    %412 = vmatprep.subr.mxu0 0.0
    %413 = vmatpush1.msra.mxu0 0.0
    %414 = vmatprep.subr.mxu0 0.0
    %415 = vmatpush1.msra.mxu0 0.0
    %416 = vmatprep.subr.mxu0 0.0
    %417 = vmatpush1.msra.mxu0 0.0
    %418 = vmatprep.subr.mxu0 0.0
    %419 = vmatpush1.msra.mxu0 0.0
    %420 = vmatprep.subr.mxu0 0.0
    %421 = vmatpush1.msra.mxu0 0.0
    %422 = vmatprep.subr.mxu0 0.0
    %423 = vmatpush1.msra.mxu0 0.0
    %424 = vmatprep.subr.mxu0 0.0
    %425 = vmatpush1.msra.mxu0 0.0
    %426 = vmatprep.subr.mxu0 0.0
    %427 = vmatpush1.msra.mxu0 %v53
    %428 = vmatprep.subr.mxu0 0.0
    %429 = vmatpush1.msra.mxu0 %v52
    %430 = vmatprep.subr.mxu0 0.0
    %431 = vmatpush1.msra.mxu0 %v51
    %432 = vmatprep.subr.mxu0 0.0
    %433 = vmatpush1.msra.mxu0 %v50
    %434 = vmatprep.subr.mxu0 0.0
    %435 = vmatpush1.msra.mxu0 %v49
    %436 = vmatprep.subr.mxu0 0.0
    %437 = vmatpush1.msra.mxu0 %v48
    %438 = vmatprep.subr.mxu0 0.0
    %439 = vmatpush1.msra.mxu0 %v47
    %440 = vmatprep.subr.mxu0 0.0
    %441 = vmatpush1.msra.mxu0 %v46
    %442 = vmatprep.subr.mxu0 0.0
    %443 = vmatpush2.msra.mxu0 0.0
    %444 = vmatprep.subr.mxu0 0.0
    %445 = vmatpush2.msra.mxu0 0.0
    %446 = vmatprep.subr.mxu0 0.0
    %447 = vmatpush2.msra.mxu0 0.0
    %448 = vmatprep.subr.mxu0 0.0
    %449 = vmatpush2.msra.mxu0 0.0
    %450 = vmatprep.subr.mxu0 0.0
    %451 = vmatpush2.msra.mxu0 0.0
    %452 = vmatprep.subr.mxu0 0.0
    %453 = vmatpush2.msra.mxu0 0.0
    %454 = vmatprep.subr.mxu0 0.0
    %455 = vmatpush2.msra.mxu0 0.0
    %456 = vmatprep.subr.mxu0 0.0
    %457 = vmatpush2.msra.mxu0 0.0
    %458 = vmatprep.subr.mxu0 0.0
    %459 = vmatpush2.msra.mxu0 0.0
    %460 = vmatprep.subr.mxu0 0.0
    %461 = vmatpush2.msra.mxu0 0.0
    %462 = vmatprep.subr.mxu0 0.0
    %463 = vmatpush2.msra.mxu0 0.0
    %464 = vmatprep.subr.mxu0 0.0
    %465 = vmatpush2.msra.mxu0 0.0
    %466 = vmatprep.subr.mxu0 0.0
    %467 = vmatpush2.msra.mxu0 0.0
    %468 = vmatprep.subr.mxu0 0.0
    %469 = vmatpush2.msra.mxu0 0.0
    %470 = vmatprep.subr.mxu0 0.0
    %471 = vmatpush2.msra.mxu0 0.0
    %472 = vmatprep.subr.mxu0 0.0
    %473 = vmatpush2.msra.mxu0 0.0
    %474 = vmatprep.mubr.f32.mxu0 0.0
    %475 = vmatmul.mubr.f32.gmra.mxu0 %v408
    %v476 = vpop.f32.mrf.mxu0
    %v477 = vadd.f32 %v204, %v476
    %v478 = vpop.f32.mrf.mxu0
    %479 = vdwg.mxu0
    %v480 = vmul.f32 %v477, %v62
    %v481 = vtanh.pop %v480
    %v482 = vmul.f32 %v481, %v62
    %v483 = vadd.f32 %v482, %v63
    %484 = vrot.lane.b32.xlu0 %v483, 64
    %v485 = vpop.permute.xlu0 %484
    %v486 = vmul.f32 %v483, %v291
    %v487 = vmul.f32 %v483, %v485
    %489 = vrot.lane.b32.xlu0 %v487, 32
    %v490 = vpop.permute.xlu0 %489
    %v492 = vadd.f32 %v486, %v490
    %v493 = vtanh.pop %v492
    %v494 = vmul.f32 %v485, %v493
    %v495 = vadd.f32 %v494, %v401
    %497 = vrot.lane.b32.xlu0 %v495, 96
    %v498 = vpop.permute.xlu0 %497
    %s500 = scalar_lea.vmem [#allocation2], 8
    %501 = vst.msk [vmem:[%s500] sm:$0x3] %vm299, %v498
    %s502 = scalar_lea.vmem [#allocation2], 48
    %503 = vst.msk [vmem:[%s502 - $0x2] sm:$0xc] %vm302, %v495
    %v505 = vrot.slane %v77, 6
    %v507 = vsel %vm92, %v74, %v505
    %v508 = vsel %vm94, %v507, %v396
    %v510 = vsel %vm80, %v508, 0
    %512 = vmatprep.subr.mxu0 0.0
    %513 = vmatpush1.msra.mxu0 0.0
    %514 = vmatprep.subr.mxu0 0.0
    %515 = vmatpush1.msra.mxu0 0.0
    %516 = vmatprep.subr.mxu0 0.0
    %517 = vmatpush1.msra.mxu0 0.0
    %518 = vmatprep.subr.mxu0 0.0
    %519 = vmatpush1.msra.mxu0 0.0
    %520 = vmatprep.subr.mxu0 0.0
    %521 = vmatpush1.msra.mxu0 0.0
    %522 = vmatprep.subr.mxu0 0.0
    %523 = vmatpush1.msra.mxu0 0.0
    %524 = vmatprep.subr.mxu0 0.0
    %525 = vmatpush1.msra.mxu0 0.0
    %526 = vmatprep.subr.mxu0 0.0
    %527 = vmatpush1.msra.mxu0 0.0
    %528 = vmatprep.subr.mxu0 0.0
    %529 = vmatpush1.msra.mxu0 %v44
    %530 = vmatprep.subr.mxu0 0.0
    %531 = vmatpush1.msra.mxu0 %v43
    %532 = vmatprep.subr.mxu0 0.0
    %533 = vmatpush1.msra.mxu0 %v42
    %534 = vmatprep.subr.mxu0 0.0
    %535 = vmatpush1.msra.mxu0 %v41
    %536 = vmatprep.subr.mxu0 0.0
    %537 = vmatpush1.msra.mxu0 %v40
    %538 = vmatprep.subr.mxu0 0.0
    %539 = vmatpush1.msra.mxu0 %v39
    %540 = vmatprep.subr.mxu0 0.0
    %541 = vmatpush1.msra.mxu0 %v38
    %542 = vmatprep.subr.mxu0 0.0
    %543 = vmatpush1.msra.mxu0 %v37
    %544 = vmatprep.subr.mxu0 0.0
    %545 = vmatpush2.msra.mxu0 0.0
    %546 = vmatprep.subr.mxu0 0.0
    %547 = vmatpush2.msra.mxu0 0.0
    %548 = vmatprep.subr.mxu0 0.0
    %549 = vmatpush2.msra.mxu0 0.0
    %550 = vmatprep.subr.mxu0 0.0
    %551 = vmatpush2.msra.mxu0 0.0
    %552 = vmatprep.subr.mxu0 0.0
    %553 = vmatpush2.msra.mxu0 0.0
    %554 = vmatprep.subr.mxu0 0.0
    %555 = vmatpush2.msra.mxu0 0.0
    %556 = vmatprep.subr.mxu0 0.0
    %557 = vmatpush2.msra.mxu0 0.0
    %558 = vmatprep.subr.mxu0 0.0
    %559 = vmatpush2.msra.mxu0 0.0
    %560 = vmatprep.subr.mxu0 0.0
    %561 = vmatpush2.msra.mxu0 0.0
    %562 = vmatprep.subr.mxu0 0.0
    %563 = vmatpush2.msra.mxu0 0.0
    %564 = vmatprep.subr.mxu0 0.0
    %565 = vmatpush2.msra.mxu0 0.0
    %566 = vmatprep.subr.mxu0 0.0
    %567 = vmatpush2.msra.mxu0 0.0
    %568 = vmatprep.subr.mxu0 0.0
    %569 = vmatpush2.msra.mxu0 0.0
    %570 = vmatprep.subr.mxu0 0.0
    %571 = vmatpush2.msra.mxu0 0.0
    %572 = vmatprep.subr.mxu0 0.0
    %573 = vmatpush2.msra.mxu0 0.0
    %574 = vmatprep.subr.mxu0 0.0
    %575 = vmatpush2.msra.mxu0 0.0
    %576 = vmatprep.mubr.f32.mxu0 0.0
    %577 = vmatmul.mubr.f32.gmra.mxu0 %v510
    %v578 = vpop.f32.mrf.mxu0
    %v579 = vadd.f32 %v100, %v578
    %v580 = vpop.f32.mrf.mxu0
    %581 = vdwg.mxu0
    %v582 = vmul.f32 %v579, %v62
    %v583 = vtanh.pop %v582
    %v584 = vmul.f32 %v583, %v62
    %v585 = vadd.f32 %v584, %v63
    %586 = vrot.lane.b32.xlu0 %v585, 64
    %v587 = vpop.permute.xlu0 %586
    %v588 = vmul.f32 %v585, %v394
    %v589 = vmul.f32 %v585, %v587
    %591 = vrot.lane.b32.xlu0 %v589, 32
    %v592 = vpop.permute.xlu0 %591
    %v594 = vadd.f32 %v588, %v592
    %v595 = vtanh.pop %v594
    %v596 = vmul.f32 %v587, %v595
    %598 = vrot.lane.b32.xlu0 %v507, 32
    %v599 = vpop.permute.xlu0 %598
    %v601 = vadd.f32 %v596, %v599
    %603 = vrot.lane.b32.xlu0 %v601, 96
    %v604 = vpop.permute.xlu0 %603
    %v606 = vsel %vm94, %v604, %v494
    %v608 = vsel %vm80, %v606, 0
    %610 = vmatprep.subr.mxu0 0.0
    %611 = vmatpush1.msra.mxu0 0.0
    %612 = vmatprep.subr.mxu0 0.0
    %613 = vmatpush1.msra.mxu0 0.0
    %614 = vmatprep.subr.mxu0 0.0
    %615 = vmatpush1.msra.mxu0 0.0
    %616 = vmatprep.subr.mxu0 0.0
    %617 = vmatpush1.msra.mxu0 0.0
    %618 = vmatprep.subr.mxu0 0.0
    %619 = vmatpush1.msra.mxu0 0.0
    %620 = vmatprep.subr.mxu0 0.0
    %621 = vmatpush1.msra.mxu0 0.0
    %622 = vmatprep.subr.mxu0 0.0
    %623 = vmatpush1.msra.mxu0 0.0
    %624 = vmatprep.subr.mxu0 0.0
    %625 = vmatpush1.msra.mxu0 0.0
    %626 = vmatprep.subr.mxu0 0.0
    %627 = vmatpush1.msra.mxu0 %v53
    %628 = vmatprep.subr.mxu0 0.0
    %629 = vmatpush1.msra.mxu0 %v52
    %630 = vmatprep.subr.mxu0 0.0
    %631 = vmatpush1.msra.mxu0 %v51
    %632 = vmatprep.subr.mxu0 0.0
    %633 = vmatpush1.msra.mxu0 %v50
    %634 = vmatprep.subr.mxu0 0.0
    %635 = vmatpush1.msra.mxu0 %v49
    %636 = vmatprep.subr.mxu0 0.0
    %637 = vmatpush1.msra.mxu0 %v48
    %638 = vmatprep.subr.mxu0 0.0
    %639 = vmatpush1.msra.mxu0 %v47
    %640 = vmatprep.subr.mxu0 0.0
    %641 = vmatpush1.msra.mxu0 %v46
    %642 = vmatprep.subr.mxu0 0.0
    %643 = vmatpush2.msra.mxu0 0.0
    %644 = vmatprep.subr.mxu0 0.0
    %645 = vmatpush2.msra.mxu0 0.0
    %646 = vmatprep.subr.mxu0 0.0
    %647 = vmatpush2.msra.mxu0 0.0
    %648 = vmatprep.subr.mxu0 0.0
    %649 = vmatpush2.msra.mxu0 0.0
    %650 = vmatprep.subr.mxu0 0.0
    %651 = vmatpush2.msra.mxu0 0.0
    %652 = vmatprep.subr.mxu0 0.0
    %653 = vmatpush2.msra.mxu0 0.0
    %654 = vmatprep.subr.mxu0 0.0
    %655 = vmatpush2.msra.mxu0 0.0
    %656 = vmatprep.subr.mxu0 0.0
    %657 = vmatpush2.msra.mxu0 0.0
    %658 = vmatprep.subr.mxu0 0.0
    %659 = vmatpush2.msra.mxu0 0.0
    %660 = vmatprep.subr.mxu0 0.0
    %661 = vmatpush2.msra.mxu0 0.0
    %662 = vmatprep.subr.mxu0 0.0
    %663 = vmatpush2.msra.mxu0 0.0
    %664 = vmatprep.subr.mxu0 0.0
    %665 = vmatpush2.msra.mxu0 0.0
    %666 = vmatprep.subr.mxu0 0.0
    %667 = vmatpush2.msra.mxu0 0.0
    %668 = vmatprep.subr.mxu0 0.0
    %669 = vmatpush2.msra.mxu0 0.0
    %670 = vmatprep.subr.mxu0 0.0
    %671 = vmatpush2.msra.mxu0 0.0
    %672 = vmatprep.subr.mxu0 0.0
    %673 = vmatpush2.msra.mxu0 0.0
    %674 = vmatprep.mubr.f32.mxu0 0.0
    %675 = vmatmul.mubr.f32.gmra.mxu0 %v608
    %v676 = vpop.f32.mrf.mxu0
    %v677 = vadd.f32 %v204, %v676
    %v678 = vpop.f32.mrf.mxu0
    %679 = vdwg.mxu0
    %v680 = vmul.f32 %v677, %v62
    %v681 = vtanh.pop %v680
    %v682 = vmul.f32 %v681, %v62
    %v683 = vadd.f32 %v682, %v63
    %684 = vrot.lane.b32.xlu0 %v683, 64
    %v685 = vpop.permute.xlu0 %684
    %v686 = vmul.f32 %v683, %v492
    %v687 = vmul.f32 %v683, %v685
    %689 = vrot.lane.b32.xlu0 %v687, 32
    %v690 = vpop.permute.xlu0 %689
    %v692 = vadd.f32 %v686, %v690
    %v693 = vtanh.pop %v692
    %v694 = vmul.f32 %v685, %v693
    %v695 = vadd.f32 %v694, %v601
    %697 = vrot.lane.b32.xlu0 %v695, 96
    %v698 = vpop.permute.xlu0 %697
    %s700 = scalar_lea.vmem [#allocation2], 16
    %701 = vst.msk [vmem:[%s700] sm:$0x3] %vm299, %v698
    %s702 = scalar_lea.vmem [#allocation2], 40
    %703 = vst.msk [vmem:[%s702 - $0x2] sm:$0xc] %vm302, %v695
    %v705 = vrot.slane %v76, 6
    %v707 = vsel %vm92, %v75, %v705
    %v708 = vsel %vm94, %v707, %v596
    %v710 = vsel %vm80, %v708, 0
    %712 = vmatprep.subr.mxu0 0.0
    %713 = vmatpush1.msra.mxu0 0.0
    %714 = vmatprep.subr.mxu0 0.0
    %715 = vmatpush1.msra.mxu0 0.0
    %716 = vmatprep.subr.mxu0 0.0
    %717 = vmatpush1.msra.mxu0 0.0
    %718 = vmatprep.subr.mxu0 0.0
    %719 = vmatpush1.msra.mxu0 0.0
    %720 = vmatprep.subr.mxu0 0.0
    %721 = vmatpush1.msra.mxu0 0.0
    %722 = vmatprep.subr.mxu0 0.0
    %723 = vmatpush1.msra.mxu0 0.0
    %724 = vmatprep.subr.mxu0 0.0
    %725 = vmatpush1.msra.mxu0 0.0
    %726 = vmatprep.subr.mxu0 0.0
    %727 = vmatpush1.msra.mxu0 0.0
    %728 = vmatprep.subr.mxu0 0.0
    %729 = vmatpush1.msra.mxu0 %v44
    %730 = vmatprep.subr.mxu0 0.0
    %731 = vmatpush1.msra.mxu0 %v43
    %732 = vmatprep.subr.mxu0 0.0
    %733 = vmatpush1.msra.mxu0 %v42
    %734 = vmatprep.subr.mxu0 0.0
    %735 = vmatpush1.msra.mxu0 %v41
    %736 = vmatprep.subr.mxu0 0.0
    %737 = vmatpush1.msra.mxu0 %v40
    %738 = vmatprep.subr.mxu0 0.0
    %739 = vmatpush1.msra.mxu0 %v39
    %740 = vmatprep.subr.mxu0 0.0
    %741 = vmatpush1.msra.mxu0 %v38
    %742 = vmatprep.subr.mxu0 0.0
    %743 = vmatpush1.msra.mxu0 %v37
    %744 = vmatprep.subr.mxu0 0.0
    %745 = vmatpush2.msra.mxu0 0.0
    %746 = vmatprep.subr.mxu0 0.0
    %747 = vmatpush2.msra.mxu0 0.0
    %748 = vmatprep.subr.mxu0 0.0
    %749 = vmatpush2.msra.mxu0 0.0
    %750 = vmatprep.subr.mxu0 0.0
    %751 = vmatpush2.msra.mxu0 0.0
    %752 = vmatprep.subr.mxu0 0.0
    %753 = vmatpush2.msra.mxu0 0.0
    %754 = vmatprep.subr.mxu0 0.0
    %755 = vmatpush2.msra.mxu0 0.0
    %756 = vmatprep.subr.mxu0 0.0
    %757 = vmatpush2.msra.mxu0 0.0
    %758 = vmatprep.subr.mxu0 0.0
    %759 = vmatpush2.msra.mxu0 0.0
    %760 = vmatprep.subr.mxu0 0.0
    %761 = vmatpush2.msra.mxu0 0.0
    %762 = vmatprep.subr.mxu0 0.0
    %763 = vmatpush2.msra.mxu0 0.0
    %764 = vmatprep.subr.mxu0 0.0
    %765 = vmatpush2.msra.mxu0 0.0
    %766 = vmatprep.subr.mxu0 0.0
    %767 = vmatpush2.msra.mxu0 0.0
    %768 = vmatprep.subr.mxu0 0.0
    %769 = vmatpush2.msra.mxu0 0.0
    %770 = vmatprep.subr.mxu0 0.0
    %771 = vmatpush2.msra.mxu0 0.0
    %772 = vmatprep.subr.mxu0 0.0
    %773 = vmatpush2.msra.mxu0 0.0
    %774 = vmatprep.subr.mxu0 0.0
    %775 = vmatpush2.msra.mxu0 0.0
    %776 = vmatprep.mubr.f32.mxu0 0.0
    %777 = vmatmul.mubr.f32.gmra.mxu0 %v710
    %v778 = vpop.f32.mrf.mxu0
    %v779 = vadd.f32 %v100, %v778
    %v780 = vpop.f32.mrf.mxu0
    %781 = vdwg.mxu0
    %v782 = vmul.f32 %v779, %v62
    %v783 = vtanh.pop %v782
    %v784 = vmul.f32 %v783, %v62
    %v785 = vadd.f32 %v784, %v63
    %786 = vrot.lane.b32.xlu0 %v785, 64
    %v787 = vpop.permute.xlu0 %786
    %v788 = vmul.f32 %v785, %v594
    %v789 = vmul.f32 %v785, %v787
    %791 = vrot.lane.b32.xlu0 %v789, 32
    %v792 = vpop.permute.xlu0 %791
    %v794 = vadd.f32 %v788, %v792
    %v795 = vtanh.pop %v794
    %v796 = vmul.f32 %v787, %v795
    %798 = vrot.lane.b32.xlu0 %v707, 32
    %v799 = vpop.permute.xlu0 %798
    %v801 = vadd.f32 %v796, %v799
    %803 = vrot.lane.b32.xlu0 %v801, 96
    %v804 = vpop.permute.xlu0 %803
    %v806 = vsel %vm94, %v804, %v694
    %v808 = vsel %vm80, %v806, 0
    %810 = vmatprep.subr.mxu0 0.0
    %811 = vmatpush1.msra.mxu0 0.0
    %812 = vmatprep.subr.mxu0 0.0
    %813 = vmatpush1.msra.mxu0 0.0
    %814 = vmatprep.subr.mxu0 0.0
    %815 = vmatpush1.msra.mxu0 0.0
    %816 = vmatprep.subr.mxu0 0.0
    %817 = vmatpush1.msra.mxu0 0.0
    %818 = vmatprep.subr.mxu0 0.0
    %819 = vmatpush1.msra.mxu0 0.0
    %820 = vmatprep.subr.mxu0 0.0
    %821 = vmatpush1.msra.mxu0 0.0
    %822 = vmatprep.subr.mxu0 0.0
    %823 = vmatpush1.msra.mxu0 0.0
    %824 = vmatprep.subr.mxu0 0.0
    %825 = vmatpush1.msra.mxu0 0.0
    %826 = vmatprep.subr.mxu0 0.0
    %827 = vmatpush1.msra.mxu0 %v53
    %828 = vmatprep.subr.mxu0 0.0
    %829 = vmatpush1.msra.mxu0 %v52
    %830 = vmatprep.subr.mxu0 0.0
    %831 = vmatpush1.msra.mxu0 %v51
    %832 = vmatprep.subr.mxu0 0.0
    %833 = vmatpush1.msra.mxu0 %v50
    %834 = vmatprep.subr.mxu0 0.0
    %835 = vmatpush1.msra.mxu0 %v49
    %836 = vmatprep.subr.mxu0 0.0
    %837 = vmatpush1.msra.mxu0 %v48
    %838 = vmatprep.subr.mxu0 0.0
    %839 = vmatpush1.msra.mxu0 %v47
    %840 = vmatprep.subr.mxu0 0.0
    %841 = vmatpush1.msra.mxu0 %v46
    %842 = vmatprep.subr.mxu0 0.0
    %843 = vmatpush2.msra.mxu0 0.0
    %844 = vmatprep.subr.mxu0 0.0
    %845 = vmatpush2.msra.mxu0 0.0
    %846 = vmatprep.subr.mxu0 0.0
    %847 = vmatpush2.msra.mxu0 0.0
    %848 = vmatprep.subr.mxu0 0.0
    %849 = vmatpush2.msra.mxu0 0.0
    %850 = vmatprep.subr.mxu0 0.0
    %851 = vmatpush2.msra.mxu0 0.0
    %852 = vmatprep.subr.mxu0 0.0
    %853 = vmatpush2.msra.mxu0 0.0
    %854 = vmatprep.subr.mxu0 0.0
    %855 = vmatpush2.msra.mxu0 0.0
    %856 = vmatprep.subr.mxu0 0.0
    %857 = vmatpush2.msra.mxu0 0.0
    %858 = vmatprep.subr.mxu0 0.0
    %859 = vmatpush2.msra.mxu0 0.0
    %860 = vmatprep.subr.mxu0 0.0
    %861 = vmatpush2.msra.mxu0 0.0
    %862 = vmatprep.subr.mxu0 0.0
    %863 = vmatpush2.msra.mxu0 0.0
    %864 = vmatprep.subr.mxu0 0.0
    %865 = vmatpush2.msra.mxu0 0.0
    %866 = vmatprep.subr.mxu0 0.0
    %867 = vmatpush2.msra.mxu0 0.0
    %868 = vmatprep.subr.mxu0 0.0
    %869 = vmatpush2.msra.mxu0 0.0
    %870 = vmatprep.subr.mxu0 0.0
    %871 = vmatpush2.msra.mxu0 0.0
    %872 = vmatprep.subr.mxu0 0.0
    %873 = vmatpush2.msra.mxu0 0.0
    %874 = vmatprep.mubr.f32.mxu0 0.0
    %875 = vmatmul.mubr.f32.gmra.mxu0 %v808
    %v876 = vpop.f32.mrf.mxu0
    %v877 = vadd.f32 %v204, %v876
    %v878 = vpop.f32.mrf.mxu0
    %879 = vdwg.mxu0
    %v880 = vmul.f32 %v877, %v62
    %v881 = vtanh.pop %v880
    %v882 = vmul.f32 %v881, %v62
    %v883 = vadd.f32 %v882, %v63
    %884 = vrot.lane.b32.xlu0 %v883, 64
    %v885 = vpop.permute.xlu0 %884
    %v886 = vmul.f32 %v883, %v692
    %v887 = vmul.f32 %v883, %v885
    %889 = vrot.lane.b32.xlu0 %v887, 32
    %v890 = vpop.permute.xlu0 %889
    %v892 = vadd.f32 %v886, %v890
    %v893 = vtanh.pop %v892
    %v894 = vmul.f32 %v885, %v893
    %v895 = vadd.f32 %v894, %v801
    %897 = vrot.lane.b32.xlu0 %v895, 96
    %v898 = vpop.permute.xlu0 %897
    %s900 = scalar_lea.vmem [#allocation2], 24
    %901 = vst.msk [vmem:[%s900] sm:$0x3] %vm299, %v898
    %s902 = scalar_lea.vmem [#allocation2], 32
    %903 = vst.msk [vmem:[%s902 - $0x2] sm:$0xc] %vm302, %v895
    %v905 = vrot.slane %v75, 6
    %v907 = vsel %vm92, %v76, %v905
    %v908 = vsel %vm94, %v907, %v796
    %v910 = vsel %vm80, %v908, 0
    %912 = vmatprep.subr.mxu0 0.0
    %913 = vmatpush1.msra.mxu0 0.0
    %914 = vmatprep.subr.mxu0 0.0
    %915 = vmatpush1.msra.mxu0 0.0
    %916 = vmatprep.subr.mxu0 0.0
    %917 = vmatpush1.msra.mxu0 0.0
    %918 = vmatprep.subr.mxu0 0.0
    %919 = vmatpush1.msra.mxu0 0.0
    %920 = vmatprep.subr.mxu0 0.0
    %921 = vmatpush1.msra.mxu0 0.0
    %922 = vmatprep.subr.mxu0 0.0
    %923 = vmatpush1.msra.mxu0 0.0
    %924 = vmatprep.subr.mxu0 0.0
    %925 = vmatpush1.msra.mxu0 0.0
    %926 = vmatprep.subr.mxu0 0.0
    %927 = vmatpush1.msra.mxu0 0.0
    %928 = vmatprep.subr.mxu0 0.0
    %929 = vmatpush1.msra.mxu0 %v44
    %930 = vmatprep.subr.mxu0 0.0
    %931 = vmatpush1.msra.mxu0 %v43
    %932 = vmatprep.subr.mxu0 0.0
    %933 = vmatpush1.msra.mxu0 %v42
    %934 = vmatprep.subr.mxu0 0.0
    %935 = vmatpush1.msra.mxu0 %v41
    %936 = vmatprep.subr.mxu0 0.0
    %937 = vmatpush1.msra.mxu0 %v40
    %938 = vmatprep.subr.mxu0 0.0
    %939 = vmatpush1.msra.mxu0 %v39
    %940 = vmatprep.subr.mxu0 0.0
    %941 = vmatpush1.msra.mxu0 %v38
    %942 = vmatprep.subr.mxu0 0.0
    %943 = vmatpush1.msra.mxu0 %v37
    %944 = vmatprep.subr.mxu0 0.0
    %945 = vmatpush2.msra.mxu0 0.0
    %946 = vmatprep.subr.mxu0 0.0
    %947 = vmatpush2.msra.mxu0 0.0
    %948 = vmatprep.subr.mxu0 0.0
    %949 = vmatpush2.msra.mxu0 0.0
    %950 = vmatprep.subr.mxu0 0.0
    %951 = vmatpush2.msra.mxu0 0.0
    %952 = vmatprep.subr.mxu0 0.0
    %953 = vmatpush2.msra.mxu0 0.0
    %954 = vmatprep.subr.mxu0 0.0
    %955 = vmatpush2.msra.mxu0 0.0
    %956 = vmatprep.subr.mxu0 0.0
    %957 = vmatpush2.msra.mxu0 0.0
    %958 = vmatprep.subr.mxu0 0.0
    %959 = vmatpush2.msra.mxu0 0.0
    %960 = vmatprep.subr.mxu0 0.0
    %961 = vmatpush2.msra.mxu0 0.0
    %962 = vmatprep.subr.mxu0 0.0
    %963 = vmatpush2.msra.mxu0 0.0
    %964 = vmatprep.subr.mxu0 0.0
    %965 = vmatpush2.msra.mxu0 0.0
    %966 = vmatprep.subr.mxu0 0.0
    %967 = vmatpush2.msra.mxu0 0.0
    %968 = vmatprep.subr.mxu0 0.0
    %969 = vmatpush2.msra.mxu0 0.0
    %970 = vmatprep.subr.mxu0 0.0
    %971 = vmatpush2.msra.mxu0 0.0
    %972 = vmatprep.subr.mxu0 0.0
    %973 = vmatpush2.msra.mxu0 0.0
    %974 = vmatprep.subr.mxu0 0.0
    %975 = vmatpush2.msra.mxu0 0.0
    %976 = vmatprep.mubr.f32.mxu0 0.0
    %977 = vmatmul.mubr.f32.gmra.mxu0 %v910
    %v978 = vpop.f32.mrf.mxu0
    %v979 = vadd.f32 %v100, %v978
    %v980 = vpop.f32.mrf.mxu0
    %981 = vdwg.mxu0
    %v982 = vmul.f32 %v979, %v62
    %v983 = vtanh.pop %v982
    %v984 = vmul.f32 %v983, %v62
    %v985 = vadd.f32 %v984, %v63
    %986 = vrot.lane.b32.xlu0 %v985, 64
    %v987 = vpop.permute.xlu0 %986
    %v988 = vmul.f32 %v985, %v794
    %v989 = vmul.f32 %v985, %v987
    %991 = vrot.lane.b32.xlu0 %v989, 32
    %v992 = vpop.permute.xlu0 %991
    %v994 = vadd.f32 %v988, %v992
    %v995 = vtanh.pop %v994
    %v996 = vmul.f32 %v987, %v995
    %998 = vrot.lane.b32.xlu0 %v907, 32
    %v999 = vpop.permute.xlu0 %998
    %v1001 = vadd.f32 %v996, %v999
    %1003 = vrot.lane.b32.xlu0 %v1001, 96
    %v1004 = vpop.permute.xlu0 %1003
    %v1006 = vsel %vm94, %v1004, %v894
    %v1008 = vsel %vm80, %v1006, 0
    %1010 = vmatprep.subr.mxu0 0.0
    %1011 = vmatpush1.msra.mxu0 0.0
    %1012 = vmatprep.subr.mxu0 0.0
    %1013 = vmatpush1.msra.mxu0 0.0
    %1014 = vmatprep.subr.mxu0 0.0
    %1015 = vmatpush1.msra.mxu0 0.0
    %1016 = vmatprep.subr.mxu0 0.0
    %1017 = vmatpush1.msra.mxu0 0.0
    %1018 = vmatprep.subr.mxu0 0.0
    %1019 = vmatpush1.msra.mxu0 0.0
    %1020 = vmatprep.subr.mxu0 0.0
    %1021 = vmatpush1.msra.mxu0 0.0
    %1022 = vmatprep.subr.mxu0 0.0
    %1023 = vmatpush1.msra.mxu0 0.0
    %1024 = vmatprep.subr.mxu0 0.0
    %1025 = vmatpush1.msra.mxu0 0.0
    %1026 = vmatprep.subr.mxu0 0.0
    %1027 = vmatpush1.msra.mxu0 %v53
    %1028 = vmatprep.subr.mxu0 0.0
    %1029 = vmatpush1.msra.mxu0 %v52
    %1030 = vmatprep.subr.mxu0 0.0
    %1031 = vmatpush1.msra.mxu0 %v51
    %1032 = vmatprep.subr.mxu0 0.0
    %1033 = vmatpush1.msra.mxu0 %v50
    %1034 = vmatprep.subr.mxu0 0.0
    %1035 = vmatpush1.msra.mxu0 %v49
    %1036 = vmatprep.subr.mxu0 0.0
    %1037 = vmatpush1.msra.mxu0 %v48
    %1038 = vmatprep.subr.mxu0 0.0
    %1039 = vmatpush1.msra.mxu0 %v47
    %1040 = vmatprep.subr.mxu0 0.0
    %1041 = vmatpush1.msra.mxu0 %v46
    %1042 = vmatprep.subr.mxu0 0.0
    %1043 = vmatpush2.msra.mxu0 0.0
    %1044 = vmatprep.subr.mxu0 0.0
    %1045 = vmatpush2.msra.mxu0 0.0
    %1046 = vmatprep.subr.mxu0 0.0
    %1047 = vmatpush2.msra.mxu0 0.0
    %1048 = vmatprep.subr.mxu0 0.0
    %1049 = vmatpush2.msra.mxu0 0.0
    %1050 = vmatprep.subr.mxu0 0.0
    %1051 = vmatpush2.msra.mxu0 0.0
    %1052 = vmatprep.subr.mxu0 0.0
    %1053 = vmatpush2.msra.mxu0 0.0
    %1054 = vmatprep.subr.mxu0 0.0
    %1055 = vmatpush2.msra.mxu0 0.0
    %1056 = vmatprep.subr.mxu0 0.0
    %1057 = vmatpush2.msra.mxu0 0.0
    %1058 = vmatprep.subr.mxu0 0.0
    %1059 = vmatpush2.msra.mxu0 0.0
    %1060 = vmatprep.subr.mxu0 0.0
    %1061 = vmatpush2.msra.mxu0 0.0
    %1062 = vmatprep.subr.mxu0 0.0
    %1063 = vmatpush2.msra.mxu0 0.0
    %1064 = vmatprep.subr.mxu0 0.0
    %1065 = vmatpush2.msra.mxu0 0.0
    %1066 = vmatprep.subr.mxu0 0.0
    %1067 = vmatpush2.msra.mxu0 0.0
    %1068 = vmatprep.subr.mxu0 0.0
    %1069 = vmatpush2.msra.mxu0 0.0
    %1070 = vmatprep.subr.mxu0 0.0
    %1071 = vmatpush2.msra.mxu0 0.0
    %1072 = vmatprep.subr.mxu0 0.0
    %1073 = vmatpush2.msra.mxu0 0.0
    %1074 = vmatprep.mubr.f32.mxu0 0.0
    %1075 = vmatmul.mubr.f32.gmra.mxu0 %v1008
    %v1076 = vpop.f32.mrf.mxu0
    %v1077 = vadd.f32 %v204, %v1076
    %v1078 = vpop.f32.mrf.mxu0
    %1079 = vdwg.mxu0
    %v1080 = vmul.f32 %v1077, %v62
    %v1081 = vtanh.pop %v1080
    %v1082 = vmul.f32 %v1081, %v62
    %v1083 = vadd.f32 %v1082, %v63
    %1084 = vrot.lane.b32.xlu0 %v1083, 64
    %v1085 = vpop.permute.xlu0 %1084
    %v1086 = vmul.f32 %v1083, %v892
    %v1087 = vmul.f32 %v1083, %v1085
    %1089 = vrot.lane.b32.xlu0 %v1087, 32
    %v1090 = vpop.permute.xlu0 %1089
    %v1092 = vadd.f32 %v1086, %v1090
    %v1093 = vtanh.pop %v1092
    %v1094 = vmul.f32 %v1085, %v1093
    %v1095 = vadd.f32 %v1094, %v1001
    %1097 = vrot.lane.b32.xlu0 %v1095, 96
    %v1098 = vpop.permute.xlu0 %1097
    %1100 = vst.msk [vmem:[%s902] sm:$0x3] %vm299, %v1098
    %1101 = vst.msk [vmem:[%s900 - $0x2] sm:$0xc] %vm302, %v1095
    %v1103 = vrot.slane %v74, 6
    %v1105 = vsel %vm92, %v77, %v1103
    %v1106 = vsel %vm94, %v1105, %v996
    %v1108 = vsel %vm80, %v1106, 0
    %1110 = vmatprep.subr.mxu0 0.0
    %1111 = vmatpush1.msra.mxu0 0.0
    %1112 = vmatprep.subr.mxu0 0.0
    %1113 = vmatpush1.msra.mxu0 0.0
    %1114 = vmatprep.subr.mxu0 0.0
    %1115 = vmatpush1.msra.mxu0 0.0
    %1116 = vmatprep.subr.mxu0 0.0
    %1117 = vmatpush1.msra.mxu0 0.0
    %1118 = vmatprep.subr.mxu0 0.0
    %1119 = vmatpush1.msra.mxu0 0.0
    %1120 = vmatprep.subr.mxu0 0.0
    %1121 = vmatpush1.msra.mxu0 0.0
    %1122 = vmatprep.subr.mxu0 0.0
    %1123 = vmatpush1.msra.mxu0 0.0
    %1124 = vmatprep.subr.mxu0 0.0
    %1125 = vmatpush1.msra.mxu0 0.0
    %1126 = vmatprep.subr.mxu0 0.0
    %1127 = vmatpush1.msra.mxu0 %v44
    %1128 = vmatprep.subr.mxu0 0.0
    %1129 = vmatpush1.msra.mxu0 %v43
    %1130 = vmatprep.subr.mxu0 0.0
    %1131 = vmatpush1.msra.mxu0 %v42
    %1132 = vmatprep.subr.mxu0 0.0
    %1133 = vmatpush1.msra.mxu0 %v41
    %1134 = vmatprep.subr.mxu0 0.0
    %1135 = vmatpush1.msra.mxu0 %v40
    %1136 = vmatprep.subr.mxu0 0.0
    %1137 = vmatpush1.msra.mxu0 %v39
    %1138 = vmatprep.subr.mxu0 0.0
    %1139 = vmatpush1.msra.mxu0 %v38
    %1140 = vmatprep.subr.mxu0 0.0
    %1141 = vmatpush1.msra.mxu0 %v37
    %1142 = vmatprep.subr.mxu0 0.0
    %1143 = vmatpush2.msra.mxu0 0.0
    %1144 = vmatprep.subr.mxu0 0.0
    %1145 = vmatpush2.msra.mxu0 0.0
    %1146 = vmatprep.subr.mxu0 0.0
    %1147 = vmatpush2.msra.mxu0 0.0
    %1148 = vmatprep.subr.mxu0 0.0
    %1149 = vmatpush2.msra.mxu0 0.0
    %1150 = vmatprep.subr.mxu0 0.0
    %1151 = vmatpush2.msra.mxu0 0.0
    %1152 = vmatprep.subr.mxu0 0.0
    %1153 = vmatpush2.msra.mxu0 0.0
    %1154 = vmatprep.subr.mxu0 0.0
    %1155 = vmatpush2.msra.mxu0 0.0
    %1156 = vmatprep.subr.mxu0 0.0
    %1157 = vmatpush2.msra.mxu0 0.0
    %1158 = vmatprep.subr.mxu0 0.0
    %1159 = vmatpush2.msra.mxu0 0.0
    %1160 = vmatprep.subr.mxu0 0.0
    %1161 = vmatpush2.msra.mxu0 0.0
    %1162 = vmatprep.subr.mxu0 0.0
    %1163 = vmatpush2.msra.mxu0 0.0
    %1164 = vmatprep.subr.mxu0 0.0
    %1165 = vmatpush2.msra.mxu0 0.0
    %1166 = vmatprep.subr.mxu0 0.0
    %1167 = vmatpush2.msra.mxu0 0.0
    %1168 = vmatprep.subr.mxu0 0.0
    %1169 = vmatpush2.msra.mxu0 0.0
    %1170 = vmatprep.subr.mxu0 0.0
    %1171 = vmatpush2.msra.mxu0 0.0
    %1172 = vmatprep.subr.mxu0 0.0
    %1173 = vmatpush2.msra.mxu0 0.0
    %1174 = vmatprep.mubr.f32.mxu0 0.0
    %1175 = vmatmul.mubr.f32.gmra.mxu0 %v1108
    %v1176 = vpop.f32.mrf.mxu0
    %v1177 = vadd.f32 %v100, %v1176
    %v1178 = vpop.f32.mrf.mxu0
    %1179 = vdwg.mxu0
    %v1180 = vmul.f32 %v1177, %v62
    %v1181 = vtanh.pop %v1180
    %v1182 = vmul.f32 %v1181, %v62
    %v1183 = vadd.f32 %v1182, %v63
    %1184 = vrot.lane.b32.xlu0 %v1183, 64
    %v1185 = vpop.permute.xlu0 %1184
    %v1186 = vmul.f32 %v1183, %v994
    %v1187 = vmul.f32 %v1183, %v1185
    %1189 = vrot.lane.b32.xlu0 %v1187, 32
    %v1190 = vpop.permute.xlu0 %1189
    %v1192 = vadd.f32 %v1186, %v1190
    %v1193 = vtanh.pop %v1192
    %v1194 = vmul.f32 %v1185, %v1193
    %1196 = vrot.lane.b32.xlu0 %v1105, 32
    %v1197 = vpop.permute.xlu0 %1196
    %v1199 = vadd.f32 %v1194, %v1197
    %1201 = vrot.lane.b32.xlu0 %v1199, 96
    %v1202 = vpop.permute.xlu0 %1201
    %v1204 = vsel %vm94, %v1202, %v1094
    %v1206 = vsel %vm80, %v1204, 0
    %1208 = vmatprep.subr.mxu0 0.0
    %1209 = vmatpush1.msra.mxu0 0.0
    %1210 = vmatprep.subr.mxu0 0.0
    %1211 = vmatpush1.msra.mxu0 0.0
    %1212 = vmatprep.subr.mxu0 0.0
    %1213 = vmatpush1.msra.mxu0 0.0
    %1214 = vmatprep.subr.mxu0 0.0
    %1215 = vmatpush1.msra.mxu0 0.0
    %1216 = vmatprep.subr.mxu0 0.0
    %1217 = vmatpush1.msra.mxu0 0.0
    %1218 = vmatprep.subr.mxu0 0.0
    %1219 = vmatpush1.msra.mxu0 0.0
    %1220 = vmatprep.subr.mxu0 0.0
    %1221 = vmatpush1.msra.mxu0 0.0
    %1222 = vmatprep.subr.mxu0 0.0
    %1223 = vmatpush1.msra.mxu0 0.0
    %1224 = vmatprep.subr.mxu0 0.0
    %1225 = vmatpush1.msra.mxu0 %v53
    %1226 = vmatprep.subr.mxu0 0.0
    %1227 = vmatpush1.msra.mxu0 %v52
    %1228 = vmatprep.subr.mxu0 0.0
    %1229 = vmatpush1.msra.mxu0 %v51
    %1230 = vmatprep.subr.mxu0 0.0
    %1231 = vmatpush1.msra.mxu0 %v50
    %1232 = vmatprep.subr.mxu0 0.0
    %1233 = vmatpush1.msra.mxu0 %v49
    %1234 = vmatprep.subr.mxu0 0.0
    %1235 = vmatpush1.msra.mxu0 %v48
    %1236 = vmatprep.subr.mxu0 0.0
    %1237 = vmatpush1.msra.mxu0 %v47
    %1238 = vmatprep.subr.mxu0 0.0
    %1239 = vmatpush1.msra.mxu0 %v46
    %1240 = vmatprep.subr.mxu0 0.0
    %1241 = vmatpush2.msra.mxu0 0.0
    %1242 = vmatprep.subr.mxu0 0.0
    %1243 = vmatpush2.msra.mxu0 0.0
    %1244 = vmatprep.subr.mxu0 0.0
    %1245 = vmatpush2.msra.mxu0 0.0
    %1246 = vmatprep.subr.mxu0 0.0
    %1247 = vmatpush2.msra.mxu0 0.0
    %1248 = vmatprep.subr.mxu0 0.0
    %1249 = vmatpush2.msra.mxu0 0.0
    %1250 = vmatprep.subr.mxu0 0.0
    %1251 = vmatpush2.msra.mxu0 0.0
    %1252 = vmatprep.subr.mxu0 0.0
    %1253 = vmatpush2.msra.mxu0 0.0
    %1254 = vmatprep.subr.mxu0 0.0
    %1255 = vmatpush2.msra.mxu0 0.0
    %1256 = vmatprep.subr.mxu0 0.0
    %1257 = vmatpush2.msra.mxu0 0.0
    %1258 = vmatprep.subr.mxu0 0.0
    %1259 = vmatpush2.msra.mxu0 0.0
    %1260 = vmatprep.subr.mxu0 0.0
    %1261 = vmatpush2.msra.mxu0 0.0
    %1262 = vmatprep.subr.mxu0 0.0
    %1263 = vmatpush2.msra.mxu0 0.0
    %1264 = vmatprep.subr.mxu0 0.0
    %1265 = vmatpush2.msra.mxu0 0.0
    %1266 = vmatprep.subr.mxu0 0.0
    %1267 = vmatpush2.msra.mxu0 0.0
    %1268 = vmatprep.subr.mxu0 0.0
    %1269 = vmatpush2.msra.mxu0 0.0
    %1270 = vmatprep.subr.mxu0 0.0
    %1271 = vmatpush2.msra.mxu0 0.0
    %1272 = vmatprep.mubr.f32.mxu0 0.0
    %1273 = vmatmul.mubr.f32.gmra.mxu0 %v1206
    %v1274 = vpop.f32.mrf.mxu0
    %v1275 = vadd.f32 %v204, %v1274
    %v1276 = vpop.f32.mrf.mxu0
    %1277 = vdwg.mxu0
    %v1278 = vmul.f32 %v1275, %v62
    %v1279 = vtanh.pop %v1278
    %v1280 = vmul.f32 %v1279, %v62
    %v1281 = vadd.f32 %v1280, %v63
    %1282 = vrot.lane.b32.xlu0 %v1281, 64
    %v1283 = vpop.permute.xlu0 %1282
    %v1284 = vmul.f32 %v1281, %v1092
    %v1285 = vmul.f32 %v1281, %v1283
    %1287 = vrot.lane.b32.xlu0 %v1285, 32
    %v1288 = vpop.permute.xlu0 %1287
    %v1290 = vadd.f32 %v1284, %v1288
    %v1291 = vtanh.pop %v1290
    %v1292 = vmul.f32 %v1283, %v1291
    %v1293 = vadd.f32 %v1292, %v1199
    %1295 = vrot.lane.b32.xlu0 %v1293, 96
    %v1296 = vpop.permute.xlu0 %1295
    %1298 = vst.msk [vmem:[%s702] sm:$0x3] %vm299, %v1296
    %1299 = vst.msk [vmem:[%s700 - $0x2] sm:$0xc] %vm302, %v1293
    %v1301 = vrot.slane %v73, 6
    %v1303 = vsel %vm92, %v78, %v1301
    %v1304 = vsel %vm94, %v1303, %v1194
    %v1306 = vsel %vm80, %v1304, 0
    %1308 = vmatprep.subr.mxu0 0.0
    %1309 = vmatpush1.msra.mxu0 0.0
    %1310 = vmatprep.subr.mxu0 0.0
    %1311 = vmatpush1.msra.mxu0 0.0
    %1312 = vmatprep.subr.mxu0 0.0
    %1313 = vmatpush1.msra.mxu0 0.0
    %1314 = vmatprep.subr.mxu0 0.0
    %1315 = vmatpush1.msra.mxu0 0.0
    %1316 = vmatprep.subr.mxu0 0.0
    %1317 = vmatpush1.msra.mxu0 0.0
    %1318 = vmatprep.subr.mxu0 0.0
    %1319 = vmatpush1.msra.mxu0 0.0
    %1320 = vmatprep.subr.mxu0 0.0
    %1321 = vmatpush1.msra.mxu0 0.0
    %1322 = vmatprep.subr.mxu0 0.0
    %1323 = vmatpush1.msra.mxu0 0.0
    %1324 = vmatprep.subr.mxu0 0.0
    %1325 = vmatpush1.msra.mxu0 %v44
    %1326 = vmatprep.subr.mxu0 0.0
    %1327 = vmatpush1.msra.mxu0 %v43
    %1328 = vmatprep.subr.mxu0 0.0
    %1329 = vmatpush1.msra.mxu0 %v42
    %1330 = vmatprep.subr.mxu0 0.0
    %1331 = vmatpush1.msra.mxu0 %v41
    %1332 = vmatprep.subr.mxu0 0.0
    %1333 = vmatpush1.msra.mxu0 %v40
    %1334 = vmatprep.subr.mxu0 0.0
    %1335 = vmatpush1.msra.mxu0 %v39
    %1336 = vmatprep.subr.mxu0 0.0
    %1337 = vmatpush1.msra.mxu0 %v38
    %1338 = vmatprep.subr.mxu0 0.0
    %1339 = vmatpush1.msra.mxu0 %v37
    %1340 = vmatprep.subr.mxu0 0.0
    %1341 = vmatpush2.msra.mxu0 0.0
    %1342 = vmatprep.subr.mxu0 0.0
    %1343 = vmatpush2.msra.mxu0 0.0
    %1344 = vmatprep.subr.mxu0 0.0
    %1345 = vmatpush2.msra.mxu0 0.0
    %1346 = vmatprep.subr.mxu0 0.0
    %1347 = vmatpush2.msra.mxu0 0.0
    %1348 = vmatprep.subr.mxu0 0.0
    %1349 = vmatpush2.msra.mxu0 0.0
    %1350 = vmatprep.subr.mxu0 0.0
    %1351 = vmatpush2.msra.mxu0 0.0
    %1352 = vmatprep.subr.mxu0 0.0
    %1353 = vmatpush2.msra.mxu0 0.0
    %1354 = vmatprep.subr.mxu0 0.0
    %1355 = vmatpush2.msra.mxu0 0.0
    %1356 = vmatprep.subr.mxu0 0.0
    %1357 = vmatpush2.msra.mxu0 0.0
    %1358 = vmatprep.subr.mxu0 0.0
    %1359 = vmatpush2.msra.mxu0 0.0
    %1360 = vmatprep.subr.mxu0 0.0
    %1361 = vmatpush2.msra.mxu0 0.0
    %1362 = vmatprep.subr.mxu0 0.0
    %1363 = vmatpush2.msra.mxu0 0.0
    %1364 = vmatprep.subr.mxu0 0.0
    %1365 = vmatpush2.msra.mxu0 0.0
    %1366 = vmatprep.subr.mxu0 0.0
    %1367 = vmatpush2.msra.mxu0 0.0
    %1368 = vmatprep.subr.mxu0 0.0
    %1369 = vmatpush2.msra.mxu0 0.0
    %1370 = vmatprep.subr.mxu0 0.0
    %1371 = vmatpush2.msra.mxu0 0.0
    %1372 = vmatprep.mubr.f32.mxu0 0.0
    %1373 = vmatmul.mubr.f32.gmra.mxu0 %v1306
    %v1374 = vpop.f32.mrf.mxu0
    %v1375 = vadd.f32 %v100, %v1374
    %v1376 = vpop.f32.mrf.mxu0
    %1377 = vdwg.mxu0
    %v1378 = vmul.f32 %v1375, %v62
    %v1379 = vtanh.pop %v1378
    %v1380 = vmul.f32 %v1379, %v62
    %v1381 = vadd.f32 %v1380, %v63
    %1382 = vrot.lane.b32.xlu0 %v1381, 64
    %v1383 = vpop.permute.xlu0 %1382
    %v1384 = vmul.f32 %v1381, %v1192
    %v1385 = vmul.f32 %v1381, %v1383
    %1387 = vrot.lane.b32.xlu0 %v1385, 32
    %v1388 = vpop.permute.xlu0 %1387
    %v1390 = vadd.f32 %v1384, %v1388
    %v1391 = vtanh.pop %v1390
    %v1392 = vmul.f32 %v1383, %v1391
    %1394 = vrot.lane.b32.xlu0 %v1303, 32
    %v1395 = vpop.permute.xlu0 %1394
    %v1397 = vadd.f32 %v1392, %v1395
    %1399 = vrot.lane.b32.xlu0 %v1397, 96
    %v1400 = vpop.permute.xlu0 %1399
    %v1402 = vsel %vm94, %v1400, %v1292
    %v1404 = vsel %vm80, %v1402, 0
    %1406 = vmatprep.subr.mxu0 0.0
    %1407 = vmatpush1.msra.mxu0 0.0
    %1408 = vmatprep.subr.mxu0 0.0
    %1409 = vmatpush1.msra.mxu0 0.0
    %1410 = vmatprep.subr.mxu0 0.0
    %1411 = vmatpush1.msra.mxu0 0.0
    %1412 = vmatprep.subr.mxu0 0.0
    %1413 = vmatpush1.msra.mxu0 0.0
    %1414 = vmatprep.subr.mxu0 0.0
    %1415 = vmatpush1.msra.mxu0 0.0
    %1416 = vmatprep.subr.mxu0 0.0
    %1417 = vmatpush1.msra.mxu0 0.0
    %1418 = vmatprep.subr.mxu0 0.0
    %1419 = vmatpush1.msra.mxu0 0.0
    %1420 = vmatprep.subr.mxu0 0.0
    %1421 = vmatpush1.msra.mxu0 0.0
    %1422 = vmatprep.subr.mxu0 0.0
    %1423 = vmatpush1.msra.mxu0 %v53
    %1424 = vmatprep.subr.mxu0 0.0
    %1425 = vmatpush1.msra.mxu0 %v52
    %1426 = vmatprep.subr.mxu0 0.0
    %1427 = vmatpush1.msra.mxu0 %v51
    %1428 = vmatprep.subr.mxu0 0.0
    %1429 = vmatpush1.msra.mxu0 %v50
    %1430 = vmatprep.subr.mxu0 0.0
    %1431 = vmatpush1.msra.mxu0 %v49
    %1432 = vmatprep.subr.mxu0 0.0
    %1433 = vmatpush1.msra.mxu0 %v48
    %1434 = vmatprep.subr.mxu0 0.0
    %1435 = vmatpush1.msra.mxu0 %v47
    %1436 = vmatprep.subr.mxu0 0.0
    %1437 = vmatpush1.msra.mxu0 %v46
    %1438 = vmatprep.subr.mxu0 0.0
    %1439 = vmatpush2.msra.mxu0 0.0
    %1440 = vmatprep.subr.mxu0 0.0
    %1441 = vmatpush2.msra.mxu0 0.0
    %1442 = vmatprep.subr.mxu0 0.0
    %1443 = vmatpush2.msra.mxu0 0.0
    %1444 = vmatprep.subr.mxu0 0.0
    %1445 = vmatpush2.msra.mxu0 0.0
    %1446 = vmatprep.subr.mxu0 0.0
    %1447 = vmatpush2.msra.mxu0 0.0
    %1448 = vmatprep.subr.mxu0 0.0
    %1449 = vmatpush2.msra.mxu0 0.0
    %1450 = vmatprep.subr.mxu0 0.0
    %1451 = vmatpush2.msra.mxu0 0.0
    %1452 = vmatprep.subr.mxu0 0.0
    %1453 = vmatpush2.msra.mxu0 0.0
    %1454 = vmatprep.subr.mxu0 0.0
    %1455 = vmatpush2.msra.mxu0 0.0
    %1456 = vmatprep.subr.mxu0 0.0
    %1457 = vmatpush2.msra.mxu0 0.0
    %1458 = vmatprep.subr.mxu0 0.0
    %1459 = vmatpush2.msra.mxu0 0.0
    %1460 = vmatprep.subr.mxu0 0.0
    %1461 = vmatpush2.msra.mxu0 0.0
    %1462 = vmatprep.subr.mxu0 0.0
    %1463 = vmatpush2.msra.mxu0 0.0
    %1464 = vmatprep.subr.mxu0 0.0
    %1465 = vmatpush2.msra.mxu0 0.0
    %1466 = vmatprep.subr.mxu0 0.0
    %1467 = vmatpush2.msra.mxu0 0.0
    %1468 = vmatprep.subr.mxu0 0.0
    %1469 = vmatpush2.msra.mxu0 0.0
    %1470 = vmatprep.mubr.f32.mxu0 0.0
    %1471 = vmatmul.mubr.f32.gmra.mxu0 %v1404
    %v1472 = vpop.f32.mrf.mxu0
    %v1473 = vadd.f32 %v204, %v1472
    %v1474 = vpop.f32.mrf.mxu0
    %1475 = vdwg.mxu0
    %v1476 = vmul.f32 %v1473, %v62
    %v1477 = vtanh.pop %v1476
    %v1478 = vmul.f32 %v1477, %v62
    %v1479 = vadd.f32 %v1478, %v63
    %1480 = vrot.lane.b32.xlu0 %v1479, 64
    %v1481 = vpop.permute.xlu0 %1480
    %v1482 = vmul.f32 %v1479, %v1290
    %v1483 = vmul.f32 %v1479, %v1481
    %1485 = vrot.lane.b32.xlu0 %v1483, 32
    %v1486 = vpop.permute.xlu0 %1485
    %v1488 = vadd.f32 %v1482, %v1486
    %v1489 = vtanh.pop %v1488
    %v1490 = vmul.f32 %v1481, %v1489
    %v1491 = vadd.f32 %v1490, %v1397
    %1493 = vrot.lane.b32.xlu0 %v1491, 96
    %v1494 = vpop.permute.xlu0 %1493
    %1496 = vst.msk [vmem:[%s502] sm:$0x3] %vm299, %v1494
    %1497 = vst.msk [vmem:[%s500 - $0x2] sm:$0xc] %vm302, %v1491
    %v1499 = vrot.slane %v72, 6
    %v1501 = vsel %vm92, %v79, %v1499
    %v1502 = vsel %vm94, %v1501, %v1392
    %v1504 = vsel %vm80, %v1502, 0
    %1506 = vmatprep.subr.mxu0 0.0
    %1507 = vmatpush1.msra.mxu0 0.0
    %1508 = vmatprep.subr.mxu0 0.0
    %1509 = vmatpush1.msra.mxu0 0.0
    %1510 = vmatprep.subr.mxu0 0.0
    %1511 = vmatpush1.msra.mxu0 0.0
    %1512 = vmatprep.subr.mxu0 0.0
    %1513 = vmatpush1.msra.mxu0 0.0
    %1514 = vmatprep.subr.mxu0 0.0
    %1515 = vmatpush1.msra.mxu0 0.0
    %1516 = vmatprep.subr.mxu0 0.0
    %1517 = vmatpush1.msra.mxu0 0.0
    %1518 = vmatprep.subr.mxu0 0.0
    %1519 = vmatpush1.msra.mxu0 0.0
    %1520 = vmatprep.subr.mxu0 0.0
    %1521 = vmatpush1.msra.mxu0 0.0
    %1522 = vmatprep.subr.mxu0 0.0
    %1523 = vmatpush1.msra.mxu0 %v44
    %1524 = vmatprep.subr.mxu0 0.0
    %1525 = vmatpush1.msra.mxu0 %v43
    %1526 = vmatprep.subr.mxu0 0.0
    %1527 = vmatpush1.msra.mxu0 %v42
    %1528 = vmatprep.subr.mxu0 0.0
    %1529 = vmatpush1.msra.mxu0 %v41
    %1530 = vmatprep.subr.mxu0 0.0
    %1531 = vmatpush1.msra.mxu0 %v40
    %1532 = vmatprep.subr.mxu0 0.0
    %1533 = vmatpush1.msra.mxu0 %v39
    %1534 = vmatprep.subr.mxu0 0.0
    %1535 = vmatpush1.msra.mxu0 %v38
    %1536 = vmatprep.subr.mxu0 0.0
    %1537 = vmatpush1.msra.mxu0 %v37
    %1538 = vmatprep.subr.mxu0 0.0
    %1539 = vmatpush2.msra.mxu0 0.0
    %1540 = vmatprep.subr.mxu0 0.0
    %1541 = vmatpush2.msra.mxu0 0.0
    %1542 = vmatprep.subr.mxu0 0.0
    %1543 = vmatpush2.msra.mxu0 0.0
    %1544 = vmatprep.subr.mxu0 0.0
    %1545 = vmatpush2.msra.mxu0 0.0
    %1546 = vmatprep.subr.mxu0 0.0
    %1547 = vmatpush2.msra.mxu0 0.0
    %1548 = vmatprep.subr.mxu0 0.0
    %1549 = vmatpush2.msra.mxu0 0.0
    %1550 = vmatprep.subr.mxu0 0.0
    %1551 = vmatpush2.msra.mxu0 0.0
    %1552 = vmatprep.subr.mxu0 0.0
    %1553 = vmatpush2.msra.mxu0 0.0
    %1554 = vmatprep.subr.mxu0 0.0
    %1555 = vmatpush2.msra.mxu0 0.0
    %1556 = vmatprep.subr.mxu0 0.0
    %1557 = vmatpush2.msra.mxu0 0.0
    %1558 = vmatprep.subr.mxu0 0.0
    %1559 = vmatpush2.msra.mxu0 0.0
    %1560 = vmatprep.subr.mxu0 0.0
    %1561 = vmatpush2.msra.mxu0 0.0
    %1562 = vmatprep.subr.mxu0 0.0
    %1563 = vmatpush2.msra.mxu0 0.0
    %1564 = vmatprep.subr.mxu0 0.0
    %1565 = vmatpush2.msra.mxu0 0.0
    %1566 = vmatprep.subr.mxu0 0.0
    %1567 = vmatpush2.msra.mxu0 0.0
    %1568 = vmatprep.subr.mxu0 0.0
    %1569 = vmatpush2.msra.mxu0 0.0
    %1570 = vmatprep.mubr.f32.mxu0 0.0
    %1571 = vmatmul.mubr.f32.gmra.mxu0 %v1504
    %v1572 = vpop.f32.mrf.mxu0
    %v1573 = vadd.f32 %v100, %v1572
    %v1574 = vpop.f32.mrf.mxu0
    %1575 = vdwg.mxu0
    %v1576 = vmul.f32 %v1573, %v62
    %v1577 = vtanh.pop %v1576
    %v1578 = vmul.f32 %v1577, %v62
    %v1579 = vadd.f32 %v1578, %v63
    %1580 = vrot.lane.b32.xlu0 %v1579, 64
    %v1581 = vpop.permute.xlu0 %1580
    %v1582 = vmul.f32 %v1579, %v1390
    %v1583 = vmul.f32 %v1579, %v1581
    %1585 = vrot.lane.b32.xlu0 %v1583, 32
    %v1586 = vpop.permute.xlu0 %1585
    %v1588 = vadd.f32 %v1582, %v1586
    %v1589 = vtanh.pop %v1588
    %v1590 = vmul.f32 %v1581, %v1589
    %1592 = vrot.lane.b32.xlu0 %v1501, 32
    %v1593 = vpop.permute.xlu0 %1592
    %v1595 = vadd.f32 %v1590, %v1593
    %1597 = vrot.lane.b32.xlu0 %v1595, 96
    %v1598 = vpop.permute.xlu0 %1597
    %v1600 = vsel %vm94, %v1598, %v1490
    %v1602 = vsel %vm80, %v1600, 0
    %1604 = vmatprep.subr.mxu0 0.0
    %1605 = vmatpush1.msra.mxu0 0.0
    %1606 = vmatprep.subr.mxu0 0.0
    %1607 = vmatpush1.msra.mxu0 0.0
    %1608 = vmatprep.subr.mxu0 0.0
    %1609 = vmatpush1.msra.mxu0 0.0
    %1610 = vmatprep.subr.mxu0 0.0
    %1611 = vmatpush1.msra.mxu0 0.0
    %1612 = vmatprep.subr.mxu0 0.0
    %1613 = vmatpush1.msra.mxu0 0.0
    %1614 = vmatprep.subr.mxu0 0.0
    %1615 = vmatpush1.msra.mxu0 0.0
    %1616 = vmatprep.subr.mxu0 0.0
    %1617 = vmatpush1.msra.mxu0 0.0
    %1618 = vmatprep.subr.mxu0 0.0
    %1619 = vmatpush1.msra.mxu0 0.0
    %1620 = vmatprep.subr.mxu0 0.0
    %1621 = vmatpush1.msra.mxu0 %v53
    %1622 = vmatprep.subr.mxu0 0.0
    %1623 = vmatpush1.msra.mxu0 %v52
    %1624 = vmatprep.subr.mxu0 0.0
    %1625 = vmatpush1.msra.mxu0 %v51
    %1626 = vmatprep.subr.mxu0 0.0
    %1627 = vmatpush1.msra.mxu0 %v50
    %1628 = vmatprep.subr.mxu0 0.0
    %1629 = vmatpush1.msra.mxu0 %v49
    %1630 = vmatprep.subr.mxu0 0.0
    %1631 = vmatpush1.msra.mxu0 %v48
    %1632 = vmatprep.subr.mxu0 0.0
    %1633 = vmatpush1.msra.mxu0 %v47
    %1634 = vmatprep.subr.mxu0 0.0
    %1635 = vmatpush1.msra.mxu0 %v46
    %1636 = vmatprep.subr.mxu0 0.0
    %1637 = vmatpush2.msra.mxu0 0.0
    %1638 = vmatprep.subr.mxu0 0.0
    %1639 = vmatpush2.msra.mxu0 0.0
    %1640 = vmatprep.subr.mxu0 0.0
    %1641 = vmatpush2.msra.mxu0 0.0
    %1642 = vmatprep.subr.mxu0 0.0
    %1643 = vmatpush2.msra.mxu0 0.0
    %1644 = vmatprep.subr.mxu0 0.0
    %1645 = vmatpush2.msra.mxu0 0.0
    %1646 = vmatprep.subr.mxu0 0.0
    %1647 = vmatpush2.msra.mxu0 0.0
    %1648 = vmatprep.subr.mxu0 0.0
    %1649 = vmatpush2.msra.mxu0 0.0
    %1650 = vmatprep.subr.mxu0 0.0
    %1651 = vmatpush2.msra.mxu0 0.0
    %1652 = vmatprep.subr.mxu0 0.0
    %1653 = vmatpush2.msra.mxu0 0.0
    %1654 = vmatprep.subr.mxu0 0.0
    %1655 = vmatpush2.msra.mxu0 0.0
    %1656 = vmatprep.subr.mxu0 0.0
    %1657 = vmatpush2.msra.mxu0 0.0
    %1658 = vmatprep.subr.mxu0 0.0
    %1659 = vmatpush2.msra.mxu0 0.0
    %1660 = vmatprep.subr.mxu0 0.0
    %1661 = vmatpush2.msra.mxu0 0.0
    %1662 = vmatprep.subr.mxu0 0.0
    %1663 = vmatpush2.msra.mxu0 0.0
    %1664 = vmatprep.subr.mxu0 0.0
    %1665 = vmatpush2.msra.mxu0 0.0
    %1666 = vmatprep.subr.mxu0 0.0
    %1667 = vmatpush2.msra.mxu0 0.0
    %1668 = vmatprep.mubr.f32.mxu0 0.0
    %1669 = vmatmul.mubr.f32.gmra.mxu0 %v1602
    %v1670 = vpop.f32.mrf.mxu0
    %v1671 = vadd.f32 %v204, %v1670
    %v1672 = vpop.f32.mrf.mxu0
    %1673 = vdwg.mxu0
    %v1674 = vmul.f32 %v1671, %v62
    %v1675 = vtanh.pop %v1674
    %v1676 = vmul.f32 %v1675, %v62
    %v1677 = vadd.f32 %v1676, %v63
    %1678 = vrot.lane.b32.xlu0 %v1677, 64
    %v1679 = vpop.permute.xlu0 %1678
    %v1680 = vmul.f32 %v1677, %v1488
    %v1681 = vmul.f32 %v1677, %v1679
    %1683 = vrot.lane.b32.xlu0 %v1681, 32
    %v1684 = vpop.permute.xlu0 %1683
    %v1686 = vadd.f32 %v1680, %v1684
    %v1687 = vtanh.pop %v1686
    %v1688 = vmul.f32 %v1679, %v1687
    %v1689 = vadd.f32 %v1688, %v1595
    %1691 = vrot.lane.b32.xlu0 %v1689, 96
    %v1692 = vpop.permute.xlu0 %1691
    %1694 = vst.msk [vmem:[%s301] sm:$0x3] %vm299, %v1692
    %1695 = vst.msk [vmem:[#allocation2 - $0x2] sm:$0xc] %vm302, %v1689
    %v1696 = vld [vmem:[#allocation2] sm:$0xff]
    %v1697 = vld [vmem:[#allocation2 + $0x8] sm:$0xff]
    %v1698 = vld [vmem:[#allocation2 + $0x10] sm:$0xff]
    %v1699 = vld [vmem:[#allocation2 + $0x18] sm:$0xff]
    %v1700 = vld [vmem:[#allocation2 + $0x20] sm:$0xff]
    %v1701 = vld [vmem:[#allocation2 + $0x28] sm:$0xff]
    %v1702 = vld [vmem:[#allocation2 + $0x30] sm:$0xff]
    %v1703 = vld [vmem:[#allocation2 + $0x38] sm:$0xff]
    %v1704 = vld [vmem:[%s3] sm:$0xff]
    %v1705 = vld [vmem:[%s3 + $0x8] sm:$0xff]
    %v1706 = vld [vmem:[%s3 + $0x10] sm:$0xff]
    %v1707 = vld [vmem:[%s3 + $0x18] sm:$0xff]
    %v1708 = vld [vmem:[%s3 + $0x20] sm:$0xff]
    %v1709 = vld [vmem:[%s3 + $0x28] sm:$0xff]
    %v1710 = vld [vmem:[%s3 + $0x30] sm:$0xff]
    %v1711 = vld [vmem:[%s3 + $0x38] sm:$0xff]
    %v1712 = vld [vmem:[%s4] sm:$0x1]
    %v1714 = vlaneseq
    %v1715 = vshrl.u32 %v1714, 7
    %v1716 = vsub.s32 0, %v1715
    %v1717 = vrot.slane %v1712, %v1716
    %v1720 = vsel %vm80, %v1696, 0
    %v1723 = vsel %vm80, %v1697, 0
    %v1726 = vsel %vm80, %v1698, 0
    %v1729 = vsel %vm80, %v1699, 0
    %v1732 = vsel %vm80, %v1700, 0
    %v1735 = vsel %vm80, %v1701, 0
    %v1738 = vsel %vm80, %v1702, 0
    %v1741 = vsel %vm80, %v1703, 0
    %1743 = vmatprep.subr.mxu0 0.0
    %1744 = vmatpush1.msra.mxu0 0.0
    %1745 = vmatprep.subr.mxu0 0.0
    %1746 = vmatpush1.msra.mxu0 0.0
    %1747 = vmatprep.subr.mxu0 0.0
    %1748 = vmatpush1.msra.mxu0 0.0
    %1749 = vmatprep.subr.mxu0 0.0
    %1750 = vmatpush1.msra.mxu0 0.0
    %1751 = vmatprep.subr.mxu0 0.0
    %1752 = vmatpush1.msra.mxu0 0.0
    %1753 = vmatprep.subr.mxu0 0.0
    %1754 = vmatpush1.msra.mxu0 0.0
    %1755 = vmatprep.subr.mxu0 0.0
    %1756 = vmatpush1.msra.mxu0 0.0
    %1757 = vmatprep.subr.mxu0 0.0
    %1758 = vmatpush1.msra.mxu0 0.0
    %1759 = vmatprep.subr.mxu0 0.0
    %1760 = vmatpush1.msra.mxu0 %v1711
    %1761 = vmatprep.subr.mxu0 0.0
    %1762 = vmatpush1.msra.mxu0 %v1710
    %1763 = vmatprep.subr.mxu0 0.0
    %1764 = vmatpush1.msra.mxu0 %v1709
    %1765 = vmatprep.subr.mxu0 0.0
    %1766 = vmatpush1.msra.mxu0 %v1708
    %1767 = vmatprep.subr.mxu0 0.0
    %1768 = vmatpush1.msra.mxu0 %v1707
    %1769 = vmatprep.subr.mxu0 0.0
    %1770 = vmatpush1.msra.mxu0 %v1706
    %1771 = vmatprep.subr.mxu0 0.0
    %1772 = vmatpush1.msra.mxu0 %v1705
    %1773 = vmatprep.subr.mxu0 0.0
    %1774 = vmatpush1.msra.mxu0 %v1704
    %1775 = vmatprep.subr.mxu0 0.0
    %1776 = vmatpush2.msra.mxu0 0.0
    %1777 = vmatprep.subr.mxu0 0.0
    %1778 = vmatpush2.msra.mxu0 0.0
    %1779 = vmatprep.subr.mxu0 0.0
    %1780 = vmatpush2.msra.mxu0 0.0
    %1781 = vmatprep.subr.mxu0 0.0
    %1782 = vmatpush2.msra.mxu0 0.0
    %1783 = vmatprep.subr.mxu0 0.0
    %1784 = vmatpush2.msra.mxu0 0.0
    %1785 = vmatprep.subr.mxu0 0.0
    %1786 = vmatpush2.msra.mxu0 0.0
    %1787 = vmatprep.subr.mxu0 0.0
    %1788 = vmatpush2.msra.mxu0 0.0
    %1789 = vmatprep.subr.mxu0 0.0
    %1790 = vmatpush2.msra.mxu0 0.0
    %1791 = vmatprep.subr.mxu0 0.0
    %1792 = vmatpush2.msra.mxu0 0.0
    %1793 = vmatprep.subr.mxu0 0.0
    %1794 = vmatpush2.msra.mxu0 0.0
    %1795 = vmatprep.subr.mxu0 0.0
    %1796 = vmatpush2.msra.mxu0 0.0
    %1797 = vmatprep.subr.mxu0 0.0
    %1798 = vmatpush2.msra.mxu0 0.0
    %1799 = vmatprep.subr.mxu0 0.0
    %1800 = vmatpush2.msra.mxu0 0.0
    %1801 = vmatprep.subr.mxu0 0.0
    %1802 = vmatpush2.msra.mxu0 0.0
    %1803 = vmatprep.subr.mxu0 0.0
    %1804 = vmatpush2.msra.mxu0 0.0
    %1805 = vmatprep.subr.mxu0 0.0
    %1806 = vmatpush2.msra.mxu0 0.0
    %1807 = vmatprep.mubr.f32.mxu0 0.0
    %1808 = vmatmul.mubr.f32.gmra.mxu0 %v1720
    %v1809 = vpop.f32.mrf.mxu0
    %v1810 = vadd.f32 %v1717, %v1809
    %v1811 = vpop.f32.mrf.mxu0
    %1812 = vmatprep.mubr.f32.mxu0 0.0
    %1813 = vmatmul.mubr.f32.gmra.mxu0 %v1723
    %v1814 = vpop.f32.mrf.mxu0
    %v1815 = vadd.f32 %v1717, %v1814
    %v1816 = vpop.f32.mrf.mxu0
    %1817 = vmatprep.mubr.f32.mxu0 0.0
    %1818 = vmatmul.mubr.f32.gmra.mxu0 %v1726
    %v1819 = vpop.f32.mrf.mxu0
    %v1820 = vadd.f32 %v1717, %v1819
    %v1821 = vpop.f32.mrf.mxu0
    %1822 = vmatprep.mubr.f32.mxu0 0.0
    %1823 = vmatmul.mubr.f32.gmra.mxu0 %v1729
    %v1824 = vpop.f32.mrf.mxu0
    %v1825 = vadd.f32 %v1717, %v1824
    %v1826 = vpop.f32.mrf.mxu0
    %1827 = vmatprep.mubr.f32.mxu0 0.0
    %1828 = vmatmul.mubr.f32.gmra.mxu0 %v1732
    %v1829 = vpop.f32.mrf.mxu0
    %v1830 = vadd.f32 %v1717, %v1829
    %v1831 = vpop.f32.mrf.mxu0
    %1832 = vmatprep.mubr.f32.mxu0 0.0
    %1833 = vmatmul.mubr.f32.gmra.mxu0 %v1735
    %v1834 = vpop.f32.mrf.mxu0
    %v1835 = vadd.f32 %v1717, %v1834
    %v1836 = vpop.f32.mrf.mxu0
    %1837 = vmatprep.mubr.f32.mxu0 0.0
    %1838 = vmatmul.mubr.f32.gmra.mxu0 %v1738
    %v1839 = vpop.f32.mrf.mxu0
    %v1840 = vadd.f32 %v1717, %v1839
    %v1841 = vpop.f32.mrf.mxu0
    %1842 = vmatprep.mubr.f32.mxu0 0.0
    %1843 = vmatmul.mubr.f32.gmra.mxu0 %v1741
    %v1844 = vpop.f32.mrf.mxu0
    %v1845 = vadd.f32 %v1717, %v1844
    %v1846 = vpop.f32.mrf.mxu0
    %1847 = vdwg.mxu0
    %1848 = vst.msk [vmem:[%s9] sm:$0xff] %vm94, %v1810
    %1849 = vst.msk [vmem:[%s9 + $0x8] sm:$0xff] %vm94, %v1815
    %1850 = vst.msk [vmem:[%s9 + $0x10] sm:$0xff] %vm94, %v1820
    %1851 = vst.msk [vmem:[%s9 + $0x18] sm:$0xff] %vm94, %v1825
    %1852 = vst.msk [vmem:[%s9 + $0x20] sm:$0xff] %vm94, %v1830
    %1853 = vst.msk [vmem:[%s9 + $0x28] sm:$0xff] %vm94, %v1835
    %1854 = vst.msk [vmem:[%s9 + $0x30] sm:$0xff] %vm94, %v1840
    %1855 = vst.msk [vmem:[%s9 + $0x38] sm:$0xff] %vm94, %v1845
    %v1857 = vrot.slane %v1688, 6
    %v1859 = vsel %vm92, %v1590, %v1857
    %v1861 = vrot.slane %v1590, 2
    %v1863 = vsel %vm92, %v1861, %v1688
    %v1865 = vrot.slane %v1686, 6
    %v1867 = vsel %vm92, %v1588, %v1865
    %v1869 = vrot.slane %v1588, 2
    %v1871 = vsel %vm92, %v1869, %v1686
    %v1872 = vld [vmem:[%s5] sm:$0xff]
    %v1873 = vld [vmem:[%s5 + $0x8] sm:$0xff]
    %v1874 = vld [vmem:[%s5 + $0x10] sm:$0xff]
    %v1875 = vld [vmem:[%s5 + $0x18] sm:$0xff]
    %v1876 = vld [vmem:[%s5 + $0x20] sm:$0xff]
    %v1877 = vld [vmem:[%s5 + $0x28] sm:$0xff]
    %v1878 = vld [vmem:[%s5 + $0x30] sm:$0xff]
    %v1879 = vld [vmem:[%s5 + $0x38] sm:$0xff]
    %1881 = vrot.lane.b32.xlu0 %v1863, 96
    %v1882 = vpop.permute.xlu0 %1881
    %v1883 = vsel %vm94, %v1882, 0
    %1885 = vmatprep.subr.mxu0 0.0
    %1886 = vmatpush1.msra.mxu0 0.0
    %1887 = vmatprep.subr.mxu0 0.0
    %1888 = vmatpush1.msra.mxu0 0.0
    %1889 = vmatprep.subr.mxu0 0.0
    %1890 = vmatpush1.msra.mxu0 0.0
    %1891 = vmatprep.subr.mxu0 0.0
    %1892 = vmatpush1.msra.mxu0 0.0
    %1893 = vmatprep.subr.mxu0 0.0
    %1894 = vmatpush1.msra.mxu0 0.0
    %1895 = vmatprep.subr.mxu0 0.0
    %1896 = vmatpush1.msra.mxu0 0.0
    %1897 = vmatprep.subr.mxu0 0.0
    %1898 = vmatpush1.msra.mxu0 0.0
    %1899 = vmatprep.subr.mxu0 0.0
    %1900 = vmatpush1.msra.mxu0 0.0
    %1901 = vmatprep.subr.mxu0 0.0
    %1902 = vmatpush1.msra.mxu0 0.0
    %1903 = vmatprep.subr.mxu0 0.0
    %1904 = vmatpush1.msra.mxu0 0.0
    %1905 = vmatprep.subr.mxu0 0.0
    %1906 = vmatpush1.msra.mxu0 0.0
    %1907 = vmatprep.subr.mxu0 0.0
    %1908 = vmatpush1.msra.mxu0 0.0
    %1909 = vmatprep.subr.mxu0 0.0
    %1910 = vmatpush1.msra.mxu0 %v1879
    %1911 = vmatprep.subr.mxu0 0.0
    %1912 = vmatpush1.msra.mxu0 %v1878
    %1913 = vmatprep.subr.mxu0 0.0
    %1914 = vmatpush1.msra.mxu0 %v1877
    %1915 = vmatprep.subr.mxu0 0.0
    %1916 = vmatpush1.msra.mxu0 %v1876
    %1917 = vmatprep.subr.mxu0 0.0
    %1918 = vmatpush2.msra.mxu0 0.0
    %1919 = vmatprep.subr.mxu0 0.0
    %1920 = vmatpush2.msra.mxu0 0.0
    %1921 = vmatprep.subr.mxu0 0.0
    %1922 = vmatpush2.msra.mxu0 0.0
    %1923 = vmatprep.subr.mxu0 0.0
    %1924 = vmatpush2.msra.mxu0 0.0
    %1925 = vmatprep.subr.mxu0 0.0
    %1926 = vmatpush2.msra.mxu0 0.0
    %1927 = vmatprep.subr.mxu0 0.0
    %1928 = vmatpush2.msra.mxu0 0.0
    %1929 = vmatprep.subr.mxu0 0.0
    %1930 = vmatpush2.msra.mxu0 0.0
    %1931 = vmatprep.subr.mxu0 0.0
    %1932 = vmatpush2.msra.mxu0 0.0
    %1933 = vmatprep.subr.mxu0 0.0
    %1934 = vmatpush2.msra.mxu0 0.0
    %1935 = vmatprep.subr.mxu0 0.0
    %1936 = vmatpush2.msra.mxu0 0.0
    %1937 = vmatprep.subr.mxu0 0.0
    %1938 = vmatpush2.msra.mxu0 0.0
    %1939 = vmatprep.subr.mxu0 0.0
    %1940 = vmatpush2.msra.mxu0 0.0
    %1941 = vmatprep.subr.mxu0 0.0
    %1942 = vmatpush2.msra.mxu0 0.0
    %1943 = vmatprep.subr.mxu0 0.0
    %1944 = vmatpush2.msra.mxu0 0.0
    %1945 = vmatprep.subr.mxu0 0.0
    %1946 = vmatpush2.msra.mxu0 0.0
    %1947 = vmatprep.subr.mxu0 0.0
    %1948 = vmatpush2.msra.mxu0 0.0
    %1949 = vmatprep.mubr.f32.mxu0 0.0
    %1950 = vmatmul.mubr.f32.gmra.mxu0 %v1883
    %v1951 = vpop.f32.mrf.mxu0
    %v1952 = vadd.f32 0.0, %v1951
    %v1953 = vpop.f32.mrf.mxu0
    %1954 = vdwg.mxu0
    %1956 = vrot.lane.b32.xlu0 %v1859, 96
    %v1957 = vpop.permute.xlu0 %1956
    %v1958 = vsel %vm94, %v1957, 0
    %1960 = vmatprep.subr.mxu0 0.0
    %1961 = vmatpush1.msra.mxu0 0.0
    %1962 = vmatprep.subr.mxu0 0.0
    %1963 = vmatpush1.msra.mxu0 0.0
    %1964 = vmatprep.subr.mxu0 0.0
    %1965 = vmatpush1.msra.mxu0 0.0
    %1966 = vmatprep.subr.mxu0 0.0
    %1967 = vmatpush1.msra.mxu0 0.0
    %1968 = vmatprep.subr.mxu0 0.0
    %1969 = vmatpush1.msra.mxu0 0.0
    %1970 = vmatprep.subr.mxu0 0.0
    %1971 = vmatpush1.msra.mxu0 0.0
    %1972 = vmatprep.subr.mxu0 0.0
    %1973 = vmatpush1.msra.mxu0 0.0
    %1974 = vmatprep.subr.mxu0 0.0
    %1975 = vmatpush1.msra.mxu0 0.0
    %1976 = vmatprep.subr.mxu0 0.0
    %1977 = vmatpush1.msra.mxu0 0.0
    %1978 = vmatprep.subr.mxu0 0.0
    %1979 = vmatpush1.msra.mxu0 0.0
    %1980 = vmatprep.subr.mxu0 0.0
    %1981 = vmatpush1.msra.mxu0 0.0
    %1982 = vmatprep.subr.mxu0 0.0
    %1983 = vmatpush1.msra.mxu0 0.0
    %1984 = vmatprep.subr.mxu0 0.0
    %1985 = vmatpush1.msra.mxu0 %v1875
    %1986 = vmatprep.subr.mxu0 0.0
    %1987 = vmatpush1.msra.mxu0 %v1874
    %1988 = vmatprep.subr.mxu0 0.0
    %1989 = vmatpush1.msra.mxu0 %v1873
    %1990 = vmatprep.subr.mxu0 0.0
    %1991 = vmatpush1.msra.mxu0 %v1872
    %1992 = vmatprep.subr.mxu0 0.0
    %1993 = vmatpush2.msra.mxu0 0.0
    %1994 = vmatprep.subr.mxu0 0.0
    %1995 = vmatpush2.msra.mxu0 0.0
    %1996 = vmatprep.subr.mxu0 0.0
    %1997 = vmatpush2.msra.mxu0 0.0
    %1998 = vmatprep.subr.mxu0 0.0
    %1999 = vmatpush2.msra.mxu0 0.0
    %2000 = vmatprep.subr.mxu0 0.0
    %2001 = vmatpush2.msra.mxu0 0.0
    %2002 = vmatprep.subr.mxu0 0.0
    %2003 = vmatpush2.msra.mxu0 0.0
    %2004 = vmatprep.subr.mxu0 0.0
    %2005 = vmatpush2.msra.mxu0 0.0
    %2006 = vmatprep.subr.mxu0 0.0
    %2007 = vmatpush2.msra.mxu0 0.0
    %2008 = vmatprep.subr.mxu0 0.0
    %2009 = vmatpush2.msra.mxu0 0.0
    %2010 = vmatprep.subr.mxu0 0.0
    %2011 = vmatpush2.msra.mxu0 0.0
    %2012 = vmatprep.subr.mxu0 0.0
    %2013 = vmatpush2.msra.mxu0 0.0
    %2014 = vmatprep.subr.mxu0 0.0
    %2015 = vmatpush2.msra.mxu0 0.0
    %2016 = vmatprep.subr.mxu0 0.0
    %2017 = vmatpush2.msra.mxu0 0.0
    %2018 = vmatprep.subr.mxu0 0.0
    %2019 = vmatpush2.msra.mxu0 0.0
    %2020 = vmatprep.subr.mxu0 0.0
    %2021 = vmatpush2.msra.mxu0 0.0
    %2022 = vmatprep.subr.mxu0 0.0
    %2023 = vmatpush2.msra.mxu0 0.0
    %2024 = vmatprep.mubr.f32.mxu0 0.0
    %2025 = vmatmul.mubr.f32.gmra.mxu0 %v1958
    %v2026 = vpop.f32.mrf.mxu0
    %v2027 = vadd.f32 %v1952, %v2026
    %v2028 = vpop.f32.mrf.mxu0
    %2029 = vdwg.mxu0
    %v2030 = vld [vmem:[%s6] sm:$0x1]
    %v2032 = vlaneseq
    %v2033 = vshrl.u32 %v2032, 7
    %v2034 = vsub.s32 0, %v2033
    %v2035 = vrot.slane %v2030, %v2034
    %v2037 = vadd.f32 %v2027, %v2035
    %vm2038 = vcmask 257024
    %2039 = vst.msk [vmem:[#allocation3] sm:$0xf] %vm2038, %v2037
    %v2040 = vld [vmem:[%s7] sm:$0xff]
    %v2041 = vld [vmem:[%s7 + $0x8] sm:$0xff]
    %v2042 = vld [vmem:[%s7 + $0x10] sm:$0xff]
    %v2043 = vld [vmem:[%s7 + $0x18] sm:$0xff]
    %v2044 = vld [vmem:[%s7 + $0x20] sm:$0xff]
    %v2045 = vld [vmem:[%s7 + $0x28] sm:$0xff]
    %v2046 = vld [vmem:[%s7 + $0x30] sm:$0xff]
    %v2047 = vld [vmem:[%s7 + $0x38] sm:$0xff]
    %2049 = vrot.lane.b32.xlu0 %v1871, 96
    %v2050 = vpop.permute.xlu0 %2049
    %v2051 = vsel %vm94, %v2050, 0
    %2053 = vmatprep.subr.mxu0 0.0
    %2054 = vmatpush1.msra.mxu0 0.0
    %2055 = vmatprep.subr.mxu0 0.0
    %2056 = vmatpush1.msra.mxu0 0.0
    %2057 = vmatprep.subr.mxu0 0.0
    %2058 = vmatpush1.msra.mxu0 0.0
    %2059 = vmatprep.subr.mxu0 0.0
    %2060 = vmatpush1.msra.mxu0 0.0
    %2061 = vmatprep.subr.mxu0 0.0
    %2062 = vmatpush1.msra.mxu0 0.0
    %2063 = vmatprep.subr.mxu0 0.0
    %2064 = vmatpush1.msra.mxu0 0.0
    %2065 = vmatprep.subr.mxu0 0.0
    %2066 = vmatpush1.msra.mxu0 0.0
    %2067 = vmatprep.subr.mxu0 0.0
    %2068 = vmatpush1.msra.mxu0 0.0
    %2069 = vmatprep.subr.mxu0 0.0
    %2070 = vmatpush1.msra.mxu0 0.0
    %2071 = vmatprep.subr.mxu0 0.0
    %2072 = vmatpush1.msra.mxu0 0.0
    %2073 = vmatprep.subr.mxu0 0.0
    %2074 = vmatpush1.msra.mxu0 0.0
    %2075 = vmatprep.subr.mxu0 0.0
    %2076 = vmatpush1.msra.mxu0 0.0
    %2077 = vmatprep.subr.mxu0 0.0
    %2078 = vmatpush1.msra.mxu0 %v2047
    %2079 = vmatprep.subr.mxu0 0.0
    %2080 = vmatpush1.msra.mxu0 %v2046
    %2081 = vmatprep.subr.mxu0 0.0
    %2082 = vmatpush1.msra.mxu0 %v2045
    %2083 = vmatprep.subr.mxu0 0.0
    %2084 = vmatpush1.msra.mxu0 %v2044
    %2085 = vmatprep.subr.mxu0 0.0
    %2086 = vmatpush2.msra.mxu0 0.0
    %2087 = vmatprep.subr.mxu0 0.0
    %2088 = vmatpush2.msra.mxu0 0.0
    %2089 = vmatprep.subr.mxu0 0.0
    %2090 = vmatpush2.msra.mxu0 0.0
    %2091 = vmatprep.subr.mxu0 0.0
    %2092 = vmatpush2.msra.mxu0 0.0
    %2093 = vmatprep.subr.mxu0 0.0
    %2094 = vmatpush2.msra.mxu0 0.0
    %2095 = vmatprep.subr.mxu0 0.0
    %2096 = vmatpush2.msra.mxu0 0.0
    %2097 = vmatprep.subr.mxu0 0.0
    %2098 = vmatpush2.msra.mxu0 0.0
    %2099 = vmatprep.subr.mxu0 0.0
    %2100 = vmatpush2.msra.mxu0 0.0
    %2101 = vmatprep.subr.mxu0 0.0
    %2102 = vmatpush2.msra.mxu0 0.0
    %2103 = vmatprep.subr.mxu0 0.0
    %2104 = vmatpush2.msra.mxu0 0.0
    %2105 = vmatprep.subr.mxu0 0.0
    %2106 = vmatpush2.msra.mxu0 0.0
    %2107 = vmatprep.subr.mxu0 0.0
    %2108 = vmatpush2.msra.mxu0 0.0
    %2109 = vmatprep.subr.mxu0 0.0
    %2110 = vmatpush2.msra.mxu0 0.0
    %2111 = vmatprep.subr.mxu0 0.0
    %2112 = vmatpush2.msra.mxu0 0.0
    %2113 = vmatprep.subr.mxu0 0.0
    %2114 = vmatpush2.msra.mxu0 0.0
    %2115 = vmatprep.subr.mxu0 0.0
    %2116 = vmatpush2.msra.mxu0 0.0
    %2117 = vmatprep.mubr.f32.mxu0 0.0
    %2118 = vmatmul.mubr.f32.gmra.mxu0 %v2051
    %v2119 = vpop.f32.mrf.mxu0
    %v2120 = vadd.f32 0.0, %v2119
    %v2121 = vpop.f32.mrf.mxu0
    %2122 = vdwg.mxu0
    %2124 = vrot.lane.b32.xlu0 %v1867, 96
    %v2125 = vpop.permute.xlu0 %2124
    %v2126 = vsel %vm94, %v2125, 0
    %2128 = vmatprep.subr.mxu0 0.0
    %2129 = vmatpush1.msra.mxu0 0.0
    %2130 = vmatprep.subr.mxu0 0.0
    %2131 = vmatpush1.msra.mxu0 0.0
    %2132 = vmatprep.subr.mxu0 0.0
    %2133 = vmatpush1.msra.mxu0 0.0
    %2134 = vmatprep.subr.mxu0 0.0
    %2135 = vmatpush1.msra.mxu0 0.0
    %2136 = vmatprep.subr.mxu0 0.0
    %2137 = vmatpush1.msra.mxu0 0.0
    %2138 = vmatprep.subr.mxu0 0.0
    %2139 = vmatpush1.msra.mxu0 0.0
    %2140 = vmatprep.subr.mxu0 0.0
    %2141 = vmatpush1.msra.mxu0 0.0
    %2142 = vmatprep.subr.mxu0 0.0
    %2143 = vmatpush1.msra.mxu0 0.0
    %2144 = vmatprep.subr.mxu0 0.0
    %2145 = vmatpush1.msra.mxu0 0.0
    %2146 = vmatprep.subr.mxu0 0.0
    %2147 = vmatpush1.msra.mxu0 0.0
    %2148 = vmatprep.subr.mxu0 0.0
    %2149 = vmatpush1.msra.mxu0 0.0
    %2150 = vmatprep.subr.mxu0 0.0
    %2151 = vmatpush1.msra.mxu0 0.0
    %2152 = vmatprep.subr.mxu0 0.0
    %2153 = vmatpush1.msra.mxu0 %v2043
    %2154 = vmatprep.subr.mxu0 0.0
    %2155 = vmatpush1.msra.mxu0 %v2042
    %2156 = vmatprep.subr.mxu0 0.0
    %2157 = vmatpush1.msra.mxu0 %v2041
    %2158 = vmatprep.subr.mxu0 0.0
    %2159 = vmatpush1.msra.mxu0 %v2040
    %2160 = vmatprep.subr.mxu0 0.0
    %2161 = vmatpush2.msra.mxu0 0.0
    %2162 = vmatprep.subr.mxu0 0.0
    %2163 = vmatpush2.msra.mxu0 0.0
    %2164 = vmatprep.subr.mxu0 0.0
    %2165 = vmatpush2.msra.mxu0 0.0
    %2166 = vmatprep.subr.mxu0 0.0
    %2167 = vmatpush2.msra.mxu0 0.0
    %2168 = vmatprep.subr.mxu0 0.0
    %2169 = vmatpush2.msra.mxu0 0.0
    %2170 = vmatprep.subr.mxu0 0.0
    %2171 = vmatpush2.msra.mxu0 0.0
    %2172 = vmatprep.subr.mxu0 0.0
    %2173 = vmatpush2.msra.mxu0 0.0
    %2174 = vmatprep.subr.mxu0 0.0
    %2175 = vmatpush2.msra.mxu0 0.0
    %2176 = vmatprep.subr.mxu0 0.0
    %2177 = vmatpush2.msra.mxu0 0.0
    %2178 = vmatprep.subr.mxu0 0.0
    %2179 = vmatpush2.msra.mxu0 0.0
    %2180 = vmatprep.subr.mxu0 0.0
    %2181 = vmatpush2.msra.mxu0 0.0
    %2182 = vmatprep.subr.mxu0 0.0
    %2183 = vmatpush2.msra.mxu0 0.0
    %2184 = vmatprep.subr.mxu0 0.0
    %2185 = vmatpush2.msra.mxu0 0.0
    %2186 = vmatprep.subr.mxu0 0.0
    %2187 = vmatpush2.msra.mxu0 0.0
    %2188 = vmatprep.subr.mxu0 0.0
    %2189 = vmatpush2.msra.mxu0 0.0
    %2190 = vmatprep.subr.mxu0 0.0
    %2191 = vmatpush2.msra.mxu0 0.0
    %2192 = vmatprep.mubr.f32.mxu0 0.0
    %2193 = vmatmul.mubr.f32.gmra.mxu0 %v2126
    %v2194 = vpop.f32.mrf.mxu0
    %v2195 = vadd.f32 %v2120, %v2194
    %v2196 = vpop.f32.mrf.mxu0
    %2197 = vdwg.mxu0
    %v2198 = vld [vmem:[%s8] sm:$0x1]
    %v2200 = vlaneseq
    %v2201 = vshrl.u32 %v2200, 7
    %v2202 = vsub.s32 0, %v2201
    %v2203 = vrot.slane %v2198, %v2202
    %v2205 = vadd.f32 %v2195, %v2203
    %2206 = vst.msk [vmem:[#allocation5] sm:$0xf] %vm2038, %v2205
    // Predicated region
    $region38: #{encoder_forward.1} parent=1 // pred_check
      _
    $region39: #{encoder_forward.1} parent=1 // pred_check_branch
      %2208 = sbr.rel (0) target = $region41
    $region40: #{encoder_forward.1} parent=1 // pred_region
      _
    $region41: #{encoder_forward.1} parent=1 // pred_fallthru
      _
    // Predicated region
    $region42: #{encoder_forward.1} parent=1 // pred_check
      _
    $region43: #{encoder_forward.1} parent=1 // pred_check_branch
      %2210 = sbr.rel (0) target = $region45
    $region44: #{encoder_forward.1} parent=1 // pred_region
      %s2212 = ssub.s32 64, 64
      %2213 = vsyncadd [#allocation4], %s2212
      %s2215 = sshll.u32 [#allocation3], 4
      %s2216 = int_to_ptr.vmem [resolvable:$true] %s2215
      %2218 = dma.vmem_to_hbm [thread:$0]  %s2216, 64, %s10, [#allocation4]
    $region45: #{encoder_forward.1} parent=1 // pred_fallthru
      _
    // Predicated region
    $region46: #{encoder_forward.1} parent=1 // pred_check
      _
    $region47: #{encoder_forward.1} parent=1 // pred_check_branch
      %2220 = sbr.rel (0) target = $region49
    $region48: #{encoder_forward.1} parent=1 // pred_region
      %s2222 = ssub.s32 64, 64
      %2223 = vsyncadd [#allocation6], %s2222
      %s2225 = sshll.u32 [#allocation5], 4
      %s2226 = int_to_ptr.vmem [resolvable:$true] %s2225
      %2228 = dma.vmem_to_hbm [thread:$0]  %s2226, 64, %s11, [#allocation6]
    $region49: #{encoder_forward.1} parent=1 // pred_fallthru
      _
    // Predicated region
    $region50: #{encoder_forward.1} parent=1 // pred_check
      _
    $region51: #{encoder_forward.1} parent=1 // pred_check_branch
      %2230 = sbr.rel (0) target = $region53
    $region52: #{encoder_forward.1} parent=1 // pred_region
      _
    $region53: #{encoder_forward.1} parent=1 // pred_fallthru
      _
    // Predicated region
    $region54: #{encoder_forward.1} parent=1 // pred_check
      _
    $region55: #{encoder_forward.1} parent=1 // pred_check_branch
      %2232 = sbr.rel (0) target = $region57
    $region56: #{encoder_forward.1} parent=1 // pred_region
      %2233 = dma.done [#allocation4], 64
    $region57: #{encoder_forward.1} parent=1 // pred_fallthru
      _
    // Predicated region
    $region58: #{encoder_forward.1} parent=1 // pred_check
      _
    $region59: #{encoder_forward.1} parent=1 // pred_check_branch
      %2235 = sbr.rel (0) target = $region61
    $region60: #{encoder_forward.1} parent=1 // pred_region
      %2236 = dma.done [#allocation6], 64
    $region61: #{encoder_forward.1} parent=1 // pred_fallthru
      _
    %2237 = vsyncpa [#allocation4], 1
    %2238 = vsyncpa [#allocation6], 1

</llo_original>
